<compile_context>
chip_gen: v7x
topology: tpu7x:2x2x1
jax: 0.10.0
libtpu: 0.0.40
codegen_flags: <defaults>
</compile_context>

<pallas_src>
import functools

import jax
import jax.numpy as jnp
import numpy as np
from jax.experimental import pallas as pl
from jax.experimental.pallas import tpu as pltpu

len_PRIMITIVES = 8


# ------------------------------ fused kernel --------------------------------

def _fused_stage_kernel(H, W, block_cfg, start_res, mxu_dtype, dw_dtype, *refs):
    """Whole MixedStage forward for `fold` images, fully resident in VMEM.

    refs = (mixw_ref[SMEM], x_ref, *param_refs, o_ref)
    Activations are [C, fold*H*W]: channels on sublanes, batch-fold x spatial
    on the 128-lane axis (lane-dense, >=512 lanes per step).
    """
    mixw_ref = refs[0]          # SMEM [num_blocks+1] softmax(betas), 0-padded
    x_ref = refs[1]             # [1, Cin, HWS]
    o_ref = refs[-1]            # [1, Cout, HWS]
    params = refs[2:-1]

    x = x_ref[0]                              # [Cin, HWS] f32
    HWS = x.shape[-1]

    # betas-weighted mix accumulated directly into the output ref
    wrote_out = False
    if start_res == 0:
        o_ref[0] = mixw_ref[0] * x
        wrote_out = True

    h = x
    idx = 0
    for b, (has_ib, has_res, k) in enumerate(block_cfg):
        # ---- inverted bottleneck: 1x1 conv (MXU, bf16 operands) + BN + ReLU ----
        if has_ib:
            ib_w, ib_b = params[idx], params[idx + 1]
            idx += 2
            t = jnp.dot(ib_w[...], h.astype(mxu_dtype),
                        preferred_element_type=jnp.float32)
            t = jnp.maximum(t + ib_b[...], 0.0)
        else:
            t = h
        dw_ref, dw_b, pl_w, pl_b = (params[idx], params[idx + 1],
                                    params[idx + 2], params[idx + 3])
        idx += 4

        # ---- kxk depthwise conv: XLU lane rolls + VPU MAC with mask-folded
        #      per-tap weight planes (1 vmul + 1 vadd per tap) + BN + ReLU ----
        t_dw = t.astype(dw_dtype)
        acc = jnp.zeros(t.shape, jnp.float32)
        r = k // 2
        for tap in range(k * k):
            di = tap // k - r
            dj = tap % k - r
            d = di * W + dj                   # flat source offset on the lane axis
            src = t_dw if d == 0 else pltpu.roll(t_dw, shift=(-d) % HWS, axis=1)
            # dw_ref[tap]: [Cmid, HWS] weights with out-of-image taps already zeroed
            acc = acc + dw_ref[tap] * src
        acc = jnp.maximum(acc + dw_b[...], 0.0)

        # ---- point-linear 1x1 conv (MXU) + folded BN + residual ----
        y = jnp.dot(pl_w[...], acc.astype(mxu_dtype),
                    preferred_element_type=jnp.float32) + pl_b[...]
        if has_res:
            y = y + h
        h = y

        term = mixw_ref[b + 1] * h
        if wrote_out:
            o_ref[0] = o_ref[0] + term
        else:
            o_ref[0] = term
            wrote_out = True


# ------------------------------ host helpers ---------------------------------

def _make_tap_masks(H, W, k, fold):
    """mask[tap, p] == 1 iff the (di,dj) tap source of flat position p lies inside
    the image; tiled `fold` times so a [C, fold*H*W] layout never mixes images."""
    hh, ww = np.meshgrid(np.arange(H), np.arange(W), indexing='ij')
    hh = hh.reshape(-1)
    ww = ww.reshape(-1)
    r = k // 2
    masks = np.zeros((k * k, H * W), np.float32)
    for tap in range(k * k):
        di = tap // k - r
        dj = tap % k - r
        valid = (hh + di >= 0) & (hh + di < H) & (ww + dj >= 0) & (ww + dj < W)
        masks[tap] = valid.astype(np.float32)
    return np.tile(masks, (1, fold))                 # [k*k, fold*H*W]


def _images_per_step(N, HW, target_lanes=512, min_steps=2):
    """Fold images onto the lane axis up to >=target_lanes, while keeping
    >=min_steps 'parallel' grid steps when the batch allows (v7x: 2 TCs)."""
    best = 1
    for f in range(1, N + 1):
        if N % f:
            continue
        if N // f < min_steps and N >= min_steps:
            break
        best = f
        if f * HW >= target_lanes:
            break
    return best


def _select_dtypes():
    kind = jax.devices()[0].device_kind.lower()
    mxu_dtype = jnp.bfloat16   # MXU is bf16-native on v4/v5e/v5p/v6e/v7x
    # bf16 VALU only on v6e/v7x; keep the depthwise/elementwise path f32 on v5e.
    dw_bf16 = any(t in kind for t in ("v6", "v7", "7x", "trillium", "ironwood"))
    dw_dtype = jnp.bfloat16 if dw_bf16 else jnp.float32
    return mxu_dtype, dw_dtype


# ------------------------------ host wrapper ---------------------------------

def mixed_stage_forward(x_nchw, stage, sampling=True, mode='max_alphas',
                        mxu_dtype=None, dw_dtype=None):
    # Only the deterministic sampling path is implemented (see TODOs at top).
    assert sampling and mode == 'max_alphas'
    if mxu_dtype is None or dw_dtype is None:
        auto_mxu, auto_dw = _select_dtypes()
        mxu_dtype = mxu_dtype or auto_mxu
        dw_dtype = dw_dtype or auto_dw

    N, C, H, W = x_nchw.shape
    HW = H * W
    fold = _images_per_step(N, HW)
    steps = N // fold
    HWS = fold * HW

    # NCHW -> [steps, C, fold*H*W]: batch folded onto the 128-lane axis.
    x = (x_nchw.astype(jnp.float32)
         .reshape(steps, fold, C, HW)
         .transpose(0, 2, 1, 3)
         .reshape(steps, C, HWS))

    blocks = stage['blocks']
    num_blocks = len(blocks)
    start_res = stage['start_res']

    # softmax(betas) mixing weights, folded into the fused kernel epilogue.
    weights = jax.nn.softmax(stage['betas'])
    w_full = jnp.zeros((num_blocks + 1,), jnp.float32).at[start_res:].set(weights)

    block_cfg = []
    params_flat = []
    flops = 0
    for blk in blocks:
        p = blk['op0']                         # op selected by argmax(log_alphas)
        k = p['k']
        assert p['stride'] == 1                # TODO(synk): stride>1 dw not needed (ss=[1,1])
        has_ib = p['ib_w'] is not None
        block_cfg.append((has_ib, p['has_res'], k))
        if has_ib:
            params_flat += [p['ib_w'].astype(mxu_dtype), p['ib_b']]
            flops += 2 * p['mid_c'] * p['in_c'] * N * HW
        # Tap-validity mask folded into the depthwise weights (host-side, once):
        # the in-kernel tap update becomes acc += w_plane[tap] * src.
        masks = _make_tap_masks(H, W, k, fold)                       # [k*k, HWS]
        dw_plane = (jnp.asarray(masks)[:, None, :]
                    * jnp.transpose(p['dw_w'])[:, :, None]).astype(dw_dtype)
        params_flat += [dw_plane, p['dw_b'],
                        p['pl_w'].astype(mxu_dtype), p['pl_b']]
        flops += (2 * k * k + 4) * p['mid_c'] * N * HW
        flops += (2 * p['mid_c'] + 3) * p['out_c'] * N * HW

    c_out = blocks[-1]['op0']['out_c']

    def _bcast_spec(q):
        return pl.BlockSpec(q.shape, lambda n, _nd=q.ndim: (0,) * _nd)

    bytes_accessed = int(x.size * 4 + steps * c_out * HWS * 4
                         + sum(int(q.size) * q.dtype.itemsize for q in params_flat))

    kernel = functools.partial(_fused_stage_kernel, H, W, tuple(block_cfg),
                               start_res, mxu_dtype, dw_dtype)
    out = pl.pallas_call(
        kernel,
        out_shape=jax.ShapeDtypeStruct((steps, c_out, HWS), jnp.float32),
        grid=(steps,),
        in_specs=[pl.BlockSpec(memory_space=pltpu.MemorySpace.SMEM),     # mix weights
                  pl.BlockSpec((1, C, HWS), lambda n: (n, 0, 0))]        # x
                 + [_bcast_spec(q) for q in params_flat],                # folded weights
        out_specs=pl.BlockSpec((1, c_out, HWS), lambda n: (n, 0, 0)),
        compiler_params=pltpu.CompilerParams(dimension_semantics=("parallel",)),
        cost_estimate=pl.CostEstimate(flops=int(flops), transcendentals=0,
                                      bytes_accessed=bytes_accessed),
    )(w_full, x, *params_flat)

    # [steps, Cout, fold*HW] -> NCHW
    out = (out.reshape(steps, c_out, fold, HW)
              .transpose(0, 2, 1, 3)
              .reshape(N, c_out, H, W))

    # Latency path of max_alphas sampling: every selected op contributes 0.
    lat_sel = jnp.zeros((num_blocks + 1 - start_res,), jnp.float32)
    out_lat = jnp.sum(weights * lat_sel)
    return out, out_lat


# ------------------------ parameter initialization ---------------------------

def _bn_fold(c):
    # eval-mode BN, default init: gamma=1, beta=0, running_mean=0, running_var=1
    eps = 1e-5
    gamma = jnp.ones((c,), jnp.float32)
    beta = jnp.zeros((c,), jnp.float32)
    mean = jnp.zeros((c,), jnp.float32)
    var = jnp.ones((c,), jnp.float32)
    scale = gamma / jnp.sqrt(var + eps)
    shift = beta - mean * scale
    return scale, shift


def init_mb_block(key, in_c, mid_c, se_c, out_c, k, stride):
    keys = jax.random.split(key, 3)
    p = {'in_c': in_c, 'out_c': out_c, 'k': k, 'stride': stride, 'se_c': se_c,
         'has_res': (in_c == out_c and stride == 1)}
    if mid_c > in_c:
        s, b = _bn_fold(mid_c)
        w = 0.1 * jax.random.normal(keys[0], (mid_c, in_c), jnp.float32)
        p['ib_w'] = w * s[:, None]              # BN scale folded into rows
        p['ib_b'] = b[:, None]                  # [mid, 1] bias
    else:
        p['ib_w'] = None
        p['ib_b'] = None
        mid_c = in_c
    p['mid_c'] = mid_c
    s, b = _bn_fold(mid_c)
    wdw = 0.1 * jax.random.normal(keys[1], (mid_c, k * k), jnp.float32)
    p['dw_w'] = wdw * s[:, None]                # [mid, k*k], BN folded
    p['dw_b'] = b[:, None]
    s, b = _bn_fold(out_c)
    wpl = 0.1 * jax.random.normal(keys[2], (out_c, mid_c), jnp.float32)
    p['pl_w'] = wpl * s[:, None]
    p['pl_b'] = b[:, None]
    return p


def init_mixed_stage(key, ics, ocs, ss, mc_num_ddict, stage_type):
    num_blocks = stage_type + 1
    keys = jax.random.split(key, num_blocks)
    blocks = []
    for b in range(num_blocks):
        # MixedOP._initialize_log_alphas: log_softmax(zeros(8))
        log_alphas = jax.nn.log_softmax(jnp.zeros((len_PRIMITIVES,), jnp.float32))
        # sampling=True, 'max_alphas' -> argmax over uniform alphas -> op 0
        # (MBI_k3_e3: se_channels=0, kernel=3); only its weights are materialized.
        mid = mc_num_ddict['block%d' % (b + 1)][0]
        op0 = init_mb_block(keys[b], ics[b], mid, 0, ocs[b], 3, ss[b])
        blocks.append({'log_alphas': log_alphas, 'op0': op0})
    start_res = 0 if (ics[0] == ocs[0] and ss[0] == 1) else 1
    num_res = len(ics) - start_res + 1
    betas = jnp.zeros((num_res,), jnp.float32)
    return {'blocks': blocks, 'betas': betas, 'start_res': start_res}


# --------------------------- pure-JAX reference ------------------------------
# Mirrors the kernel's bf16 cast points so the self-test stays tight.

def _ref_pw(x, w, b, act, residual=None, mxu_dtype=jnp.float32):
    y = jnp.einsum('oc,nchw->nohw', w.astype(mxu_dtype), x.astype(mxu_dtype),
                   preferred_element_type=jnp.float32)
    y = y + b.reshape(1, -1, 1, 1)
    if act:
        y = jnp.maximum(y, 0.0)
    if residual is not None:
        y = y + residual
    return y


def _ref_dw(x, w_kk, b, k, act, dw_dtype=jnp.float32):
    N, C, H, W = x.shape
    r = k // 2
    xp = jnp.pad(x.astype(dw_dtype), ((0, 0), (0, 0), (r, r), (r, r)))
    acc = jnp.zeros(x.shape, jnp.float32)
    for ki in range(k):
        for kj in range(k):
            w_tap = w_kk[:, ki * k + kj].astype(dw_dtype).reshape(1, -1, 1, 1)
            acc = acc + xp[:, :, ki:ki + H, kj:kj + W] * w_tap
    acc = acc + b.reshape(1, -1, 1, 1)
    if act:
        acc = jnp.maximum(acc, 0.0)
    return acc


def _ref_stage(x_nchw, stage, mxu_dtype=jnp.float32, dw_dtype=jnp.float32):
    x = x_nchw.astype(jnp.float32)
    res_list = [x]
    h = x
    for blk in stage['blocks']:
        p = blk['op0']
        g = h
        if p['ib_w'] is not None:
            g = _ref_pw(g, p['ib_w'], p['ib_b'], act=True, mxu_dtype=mxu_dtype)
        g = _ref_dw(g, p['dw_w'], p['dw_b'], p['k'], act=True, dw_dtype=dw_dtype)
        res = h if p['has_res'] else None
        g = _ref_pw(g, p['pl_w'], p['pl_b'], act=False, residual=res,
                    mxu_dtype=mxu_dtype)
        h = g
        res_list.append(h)
    weights = jax.nn.softmax(stage['betas'])
    sel = res_list[stage['start_res']:]
    out = sum(w * r_ for w, r_ in zip(weights, sel))
    return out, jnp.float32(0.0)


# ---------------------------------- main --------------------------------------

if __name__ == "__main__":
    key = jax.random.PRNGKey(0)
    kx, kp = jax.random.split(key)

    N, C, H, W = 4, 16, 16, 16
    x = jax.random.normal(kx, (N, C, H, W), jnp.float32)   # PyTorch-style NCHW input

    ics, ocs, ss = [16, 16], [16, 16], [1, 1]
    mc_num_ddict = {
        'block1': {i: 32 for i in range(len_PRIMITIVES)},
        'block2': {i: 32 for i in range(len_PRIMITIVES)},
    }
    stage = init_mixed_stage(kp, ics, ocs, ss, mc_num_ddict, stage_type=1)

    mxu_dtype, dw_dtype = _select_dtypes()
    fwd = jax.jit(functools.partial(mixed_stage_forward, stage=stage,
                                    sampling=True, mode='max_alphas',
                                    mxu_dtype=mxu_dtype, dw_dtype=dw_dtype))
    out, out_lat = fwd(x)
    out = jax.block_until_ready(out)
    out_lat = jax.block_until_ready(out_lat)

    ref_out, ref_lat = _ref_stage(x, stage, mxu_dtype=mxu_dtype, dw_dtype=dw_dtype)
    assert out.shape == (N, 16, H, W), out.shape
    np.testing.assert_allclose(np.asarray(out), np.asarray(ref_out),
                               rtol=5e-3, atol=5e-3)
    np.testing.assert_allclose(float(out_lat), float(ref_lat), atol=1e-6)

    print("KERNEL_OK")
</pallas_src>

<mosaic_0001>
module attributes {stable_mosaic.version = 11 : i64} {
  func.func @_fused_stage_kernel(%arg0: i32, %arg1: memref<3xf32, #tpu.memory_space<smem>>, %arg2: memref<1x16x512xf32, #tpu.memory_space<vmem>>, %arg3: memref<32x16xbf16, #tpu.memory_space<vmem>>, %arg4: memref<32x1xf32, #tpu.memory_space<vmem>>, %arg5: memref<9x32x512xf32, #tpu.memory_space<vmem>>, %arg6: memref<32x1xf32, #tpu.memory_space<vmem>>, %arg7: memref<16x32xbf16, #tpu.memory_space<vmem>>, %arg8: memref<16x1xf32, #tpu.memory_space<vmem>>, %arg9: memref<32x16xbf16, #tpu.memory_space<vmem>>, %arg10: memref<32x1xf32, #tpu.memory_space<vmem>>, %arg11: memref<9x32x512xf32, #tpu.memory_space<vmem>>, %arg12: memref<32x1xf32, #tpu.memory_space<vmem>>, %arg13: memref<16x32xbf16, #tpu.memory_space<vmem>>, %arg14: memref<16x1xf32, #tpu.memory_space<vmem>>, %arg15: memref<1x16x512xf32, #tpu.memory_space<vmem>>) attributes {dimension_semantics = [#tpu.dimension_semantics<parallel>], iteration_bounds = array<i64: 2>, scalar_prefetch = 0 : i64, scratch_operands = 0 : i64, tpu.core_type = #tpu.core_type<tc>, window_params = [{transform_indices = @transform_0, window_bounds = array<i64: 3>}, {transform_indices = @transform_1, window_bounds = array<i64: 1, 16, 512>}, {pipeline_mode = #tpu.pipeline_mode<synchronous>, transform_indices = @transform_2, window_bounds = array<i64: 32, 16>}, {pipeline_mode = #tpu.pipeline_mode<synchronous>, transform_indices = @transform_3, window_bounds = array<i64: 32, 1>}, {pipeline_mode = #tpu.pipeline_mode<synchronous>, transform_indices = @transform_4, window_bounds = array<i64: 9, 32, 512>}, {pipeline_mode = #tpu.pipeline_mode<synchronous>, transform_indices = @transform_5, window_bounds = array<i64: 32, 1>}, {pipeline_mode = #tpu.pipeline_mode<synchronous>, transform_indices = @transform_6, window_bounds = array<i64: 16, 32>}, {pipeline_mode = #tpu.pipeline_mode<synchronous>, transform_indices = @transform_7, window_bounds = array<i64: 16, 1>}, {pipeline_mode = #tpu.pipeline_mode<synchronous>, transform_indices = @transform_8, window_bounds = array<i64: 32, 16>}, {pipeline_mode = #tpu.pipeline_mode<synchronous>, transform_indices = @transform_9, window_bounds = array<i64: 32, 1>}, {pipeline_mode = #tpu.pipeline_mode<synchronous>, transform_indices = @transform_10, window_bounds = array<i64: 9, 32, 512>}, {pipeline_mode = #tpu.pipeline_mode<synchronous>, transform_indices = @transform_11, window_bounds = array<i64: 32, 1>}, {pipeline_mode = #tpu.pipeline_mode<synchronous>, transform_indices = @transform_12, window_bounds = array<i64: 16, 32>}, {pipeline_mode = #tpu.pipeline_mode<synchronous>, transform_indices = @transform_13, window_bounds = array<i64: 16, 1>}, {transform_indices = @transform_14, window_bounds = array<i64: 1, 16, 512>}]} {
    %c0 = arith.constant 0 : index
    %c0_0 = arith.constant 0 : index
    %c0_1 = arith.constant 0 : index
    %0 = vector.load %arg2[%c0, %c0_0, %c0_1] : memref<1x16x512xf32, #tpu.memory_space<vmem>>, vector<1x16x512xf32>
    %1 = vector.shape_cast %0 : vector<1x16x512xf32> to vector<16x512xf32>
    %c0_2 = arith.constant 0 : index
    %2 = memref.load %arg1[%c0_2] : memref<3xf32, #tpu.memory_space<smem>>
    %3 = vector.broadcast %2 : f32 to vector<16x512xf32>
    %4 = arith.mulf %3, %1 : vector<16x512xf32>
    %c0_3 = arith.constant 0 : index
    %c0_4 = arith.constant 0 : index
    %c0_5 = arith.constant 0 : index
    %5 = vector.load %arg15[%c0_3, %c0_4, %c0_5] : memref<1x16x512xf32, #tpu.memory_space<vmem>>, vector<1x16x512xf32>
    %6 = vector.shape_cast %5 : vector<1x16x512xf32> to vector<16x512xf32>
    %7 = vector.shape_cast %4 : vector<16x512xf32> to vector<1x16x512xf32>
    tpu.vector_store %arg15[%c0_3, %c0_4, %c0_5], %7 {strides = array<i32>} : memref<1x16x512xf32, #tpu.memory_space<vmem>>, vector<1x16x512xf32>,
    %c0_6 = arith.constant 0 : index
    %c0_7 = arith.constant 0 : index
    %8 = vector.load %arg3[%c0_6, %c0_7] : memref<32x16xbf16, #tpu.memory_space<vmem>>, vector<32x16xbf16>
    %9 = arith.truncf %1 : vector<16x512xf32> to vector<16x512xbf16>
    %cst = arith.constant dense<0.000000e+00> : vector<32x512xf32>
    %10 = tpu.matmul %8, %9, %cst {dimension_numbers = #tpu.dot_dimension_numbers<[1], [0], [0], [1], [0, 0, 1, 1], [], []>} : vector<32x16xbf16>, vector<16x512xbf16>, vector<32x512xf32> -> vector<32x512xf32>
    %c0_8 = arith.constant 0 : index
    %c0_9 = arith.constant 0 : index
    %11 = vector.load %arg4[%c0_8, %c0_9] : memref<32x1xf32, #tpu.memory_space<vmem>>, vector<32x1xf32>
    %12 = vector.broadcast %11 : vector<32x1xf32> to vector<32x512xf32>
    %13 = arith.addf %10, %12 : vector<32x512xf32>
    %cst_10 = arith.constant 0.000000e+00 : f32
    %14 = vector.broadcast %cst_10 : f32 to vector<32x512xf32>
    %15 = arith.maximumf %13, %14 : vector<32x512xf32>
    %cst_11 = arith.constant 0.000000e+00 : f32
    %16 = vector.broadcast %cst_11 : f32 to vector<32x512xf32>
    %c17_i32 = arith.constant 17 : i32
    %17 = tpu.dynamic_rotate %15 by %c17_i32 dim 1 : vector<32x512xf32>, i32 -> vector<32x512xf32>
    %c0_12 = arith.constant 0 : index
    %c0_13 = arith.constant 0 : index
    %c0_14 = arith.constant 0 : index
    %18 = vector.load %arg5[%c0_12, %c0_13, %c0_14] : memref<9x32x512xf32, #tpu.memory_space<vmem>>, vector<1x32x512xf32>
    %19 = vector.shape_cast %18 : vector<1x32x512xf32> to vector<32x512xf32>
    %20 = arith.mulf %19, %17 : vector<32x512xf32>
    %21 = arith.addf %16, %20 : vector<32x512xf32>
    %c16_i32 = arith.constant 16 : i32
    %22 = tpu.dynamic_rotate %15 by %c16_i32 dim 1 : vector<32x512xf32>, i32 -> vector<32x512xf32>
    %c1 = arith.constant 1 : index
    %c0_15 = arith.constant 0 : index
    %c0_16 = arith.constant 0 : index
    %23 = vector.load %arg5[%c1, %c0_15, %c0_16] : memref<9x32x512xf32, #tpu.memory_space<vmem>>, vector<1x32x512xf32>
    %24 = vector.shape_cast %23 : vector<1x32x512xf32> to vector<32x512xf32>
    %25 = arith.mulf %24, %22 : vector<32x512xf32>
    %26 = arith.addf %21, %25 : vector<32x512xf32>
    %c15_i32 = arith.constant 15 : i32
    %27 = tpu.dynamic_rotate %15 by %c15_i32 dim 1 : vector<32x512xf32>, i32 -> vector<32x512xf32>
    %c2 = arith.constant 2 : index
    %c0_17 = arith.constant 0 : index
    %c0_18 = arith.constant 0 : index
    %28 = vector.load %arg5[%c2, %c0_17, %c0_18] : memref<9x32x512xf32, #tpu.memory_space<vmem>>, vector<1x32x512xf32>
    %29 = vector.shape_cast %28 : vector<1x32x512xf32> to vector<32x512xf32>
    %30 = arith.mulf %29, %27 : vector<32x512xf32>
    %31 = arith.addf %26, %30 : vector<32x512xf32>
    %c1_i32 = arith.constant 1 : i32
    %32 = tpu.dynamic_rotate %15 by %c1_i32 dim 1 : vector<32x512xf32>, i32 -> vector<32x512xf32>
    %c3 = arith.constant 3 : index
    %c0_19 = arith.constant 0 : index
    %c0_20 = arith.constant 0 : index
    %33 = vector.load %arg5[%c3, %c0_19, %c0_20] : memref<9x32x512xf32, #tpu.memory_space<vmem>>, vector<1x32x512xf32>
    %34 = vector.shape_cast %33 : vector<1x32x512xf32> to vector<32x512xf32>
    %35 = arith.mulf %34, %32 : vector<32x512xf32>
    %36 = arith.addf %31, %35 : vector<32x512xf32>
    %c4 = arith.constant 4 : index
    %c0_21 = arith.constant 0 : index
    %c0_22 = arith.constant 0 : index
    %37 = vector.load %arg5[%c4, %c0_21, %c0_22] : memref<9x32x512xf32, #tpu.memory_space<vmem>>, vector<1x32x512xf32>
    %38 = vector.shape_cast %37 : vector<1x32x512xf32> to vector<32x512xf32>
    %39 = arith.mulf %38, %15 : vector<32x512xf32>
    %40 = arith.addf %36, %39 : vector<32x512xf32>
    %c511_i32 = arith.constant 511 : i32
    %41 = tpu.dynamic_rotate %15 by %c511_i32 dim 1 : vector<32x512xf32>, i32 -> vector<32x512xf32>
    %c5 = arith.constant 5 : index
    %c0_23 = arith.constant 0 : index
    %c0_24 = arith.constant 0 : index
    %42 = vector.load %arg5[%c5, %c0_23, %c0_24] : memref<9x32x512xf32, #tpu.memory_space<vmem>>, vector<1x32x512xf32>
    %43 = vector.shape_cast %42 : vector<1x32x512xf32> to vector<32x512xf32>
    %44 = arith.mulf %43, %41 : vector<32x512xf32>
    %45 = arith.addf %40, %44 : vector<32x512xf32>
    %c497_i32 = arith.constant 497 : i32
    %46 = tpu.dynamic_rotate %15 by %c497_i32 dim 1 : vector<32x512xf32>, i32 -> vector<32x512xf32>
    %c6 = arith.constant 6 : index
    %c0_25 = arith.constant 0 : index
    %c0_26 = arith.constant 0 : index
    %47 = vector.load %arg5[%c6, %c0_25, %c0_26] : memref<9x32x512xf32, #tpu.memory_space<vmem>>, vector<1x32x512xf32>
    %48 = vector.shape_cast %47 : vector<1x32x512xf32> to vector<32x512xf32>
    %49 = arith.mulf %48, %46 : vector<32x512xf32>
    %50 = arith.addf %45, %49 : vector<32x512xf32>
    %c496_i32 = arith.constant 496 : i32
    %51 = tpu.dynamic_rotate %15 by %c496_i32 dim 1 : vector<32x512xf32>, i32 -> vector<32x512xf32>
    %c7 = arith.constant 7 : index
    %c0_27 = arith.constant 0 : index
    %c0_28 = arith.constant 0 : index
    %52 = vector.load %arg5[%c7, %c0_27, %c0_28] : memref<9x32x512xf32, #tpu.memory_space<vmem>>, vector<1x32x512xf32>
    %53 = vector.shape_cast %52 : vector<1x32x512xf32> to vector<32x512xf32>
    %54 = arith.mulf %53, %51 : vector<32x512xf32>
    %55 = arith.addf %50, %54 : vector<32x512xf32>
    %c495_i32 = arith.constant 495 : i32
    %56 = tpu.dynamic_rotate %15 by %c495_i32 dim 1 : vector<32x512xf32>, i32 -> vector<32x512xf32>
    %c8 = arith.constant 8 : index
    %c0_29 = arith.constant 0 : index
    %c0_30 = arith.constant 0 : index
    %57 = vector.load %arg5[%c8, %c0_29, %c0_30] : memref<9x32x512xf32, #tpu.memory_space<vmem>>, vector<1x32x512xf32>
    %58 = vector.shape_cast %57 : vector<1x32x512xf32> to vector<32x512xf32>
    %59 = arith.mulf %58, %56 : vector<32x512xf32>
    %60 = arith.addf %55, %59 : vector<32x512xf32>
    %c0_31 = arith.constant 0 : index
    %c0_32 = arith.constant 0 : index
    %61 = vector.load %arg6[%c0_31, %c0_32] : memref<32x1xf32, #tpu.memory_space<vmem>>, vector<32x1xf32>
    %62 = vector.broadcast %61 : vector<32x1xf32> to vector<32x512xf32>
    %63 = arith.addf %60, %62 : vector<32x512xf32>
    %cst_33 = arith.constant 0.000000e+00 : f32
    %64 = vector.broadcast %cst_33 : f32 to vector<32x512xf32>
    %65 = arith.maximumf %63, %64 : vector<32x512xf32>
    %c0_34 = arith.constant 0 : index
    %c0_35 = arith.constant 0 : index
    %66 = vector.load %arg7[%c0_34, %c0_35] : memref<16x32xbf16, #tpu.memory_space<vmem>>, vector<16x32xbf16>
    %67 = arith.truncf %65 : vector<32x512xf32> to vector<32x512xbf16>
    %cst_36 = arith.constant dense<0.000000e+00> : vector<16x512xf32>
    %68 = tpu.matmul %66, %67, %cst_36 {dimension_numbers = #tpu.dot_dimension_numbers<[1], [0], [0], [1], [0, 0, 1, 1], [], []>} : vector<16x32xbf16>, vector<32x512xbf16>, vector<16x512xf32> -> vector<16x512xf32>
    %c0_37 = arith.constant 0 : index
    %c0_38 = arith.constant 0 : index
    %69 = vector.load %arg8[%c0_37, %c0_38] : memref<16x1xf32, #tpu.memory_space<vmem>>, vector<16x1xf32>
    %70 = vector.broadcast %69 : vector<16x1xf32> to vector<16x512xf32>
    %71 = arith.addf %68, %70 : vector<16x512xf32>
    %72 = arith.addf %71, %1 : vector<16x512xf32>
    %c1_39 = arith.constant 1 : index
    %73 = memref.load %arg1[%c1_39] : memref<3xf32, #tpu.memory_space<smem>>
    %74 = vector.broadcast %73 : f32 to vector<16x512xf32>
    %75 = arith.mulf %74, %72 : vector<16x512xf32>
    %c0_40 = arith.constant 0 : index
    %c0_41 = arith.constant 0 : index
    %c0_42 = arith.constant 0 : index
    %76 = vector.load %arg15[%c0_40, %c0_41, %c0_42] : memref<1x16x512xf32, #tpu.memory_space<vmem>>, vector<1x16x512xf32>
    %77 = vector.shape_cast %76 : vector<1x16x512xf32> to vector<16x512xf32>
    %78 = arith.addf %77, %75 : vector<16x512xf32>
    %c0_43 = arith.constant 0 : index
    %c0_44 = arith.constant 0 : index
    %c0_45 = arith.constant 0 : index
    %79 = vector.load %arg15[%c0_43, %c0_44, %c0_45] : memref<1x16x512xf32, #tpu.memory_space<vmem>>, vector<1x16x512xf32>
    %80 = vector.shape_cast %79 : vector<1x16x512xf32> to vector<16x512xf32>
    %81 = vector.shape_cast %78 : vector<16x512xf32> to vector<1x16x512xf32>
    tpu.vector_store %arg15[%c0_43, %c0_44, %c0_45], %81 {strides = array<i32>} : memref<1x16x512xf32, #tpu.memory_space<vmem>>, vector<1x16x512xf32>,
    %c0_46 = arith.constant 0 : index
    %c0_47 = arith.constant 0 : index
    %82 = vector.load %arg9[%c0_46, %c0_47] : memref<32x16xbf16, #tpu.memory_space<vmem>>, vector<32x16xbf16>
    %83 = arith.truncf %72 : vector<16x512xf32> to vector<16x512xbf16>
    %cst_48 = arith.constant dense<0.000000e+00> : vector<32x512xf32>
    %84 = tpu.matmul %82, %83, %cst_48 {dimension_numbers = #tpu.dot_dimension_numbers<[1], [0], [0], [1], [0, 0, 1, 1], [], []>} : vector<32x16xbf16>, vector<16x512xbf16>, vector<32x512xf32> -> vector<32x512xf32>
    %c0_49 = arith.constant 0 : index
    %c0_50 = arith.constant 0 : index
    %85 = vector.load %arg10[%c0_49, %c0_50] : memref<32x1xf32, #tpu.memory_space<vmem>>, vector<32x1xf32>
    %86 = vector.broadcast %85 : vector<32x1xf32> to vector<32x512xf32>
    %87 = arith.addf %84, %86 : vector<32x512xf32>
    %cst_51 = arith.constant 0.000000e+00 : f32
    %88 = vector.broadcast %cst_51 : f32 to vector<32x512xf32>
    %89 = arith.maximumf %87, %88 : vector<32x512xf32>
    %cst_52 = arith.constant 0.000000e+00 : f32
    %90 = vector.broadcast %cst_52 : f32 to vector<32x512xf32>
    %c17_i32_53 = arith.constant 17 : i32
    %91 = tpu.dynamic_rotate %89 by %c17_i32_53 dim 1 : vector<32x512xf32>, i32 -> vector<32x512xf32>
    %c0_54 = arith.constant 0 : index
    %c0_55 = arith.constant 0 : index
    %c0_56 = arith.constant 0 : index
    %92 = vector.load %arg11[%c0_54, %c0_55, %c0_56] : memref<9x32x512xf32, #tpu.memory_space<vmem>>, vector<1x32x512xf32>
    %93 = vector.shape_cast %92 : vector<1x32x512xf32> to vector<32x512xf32>
    %94 = arith.mulf %93, %91 : vector<32x512xf32>
    %95 = arith.addf %90, %94 : vector<32x512xf32>
    %c16_i32_57 = arith.constant 16 : i32
    %96 = tpu.dynamic_rotate %89 by %c16_i32_57 dim 1 : vector<32x512xf32>, i32 -> vector<32x512xf32>
    %c1_58 = arith.constant 1 : index
    %c0_59 = arith.constant 0 : index
    %c0_60 = arith.constant 0 : index
    %97 = vector.load %arg11[%c1_58, %c0_59, %c0_60] : memref<9x32x512xf32, #tpu.memory_space<vmem>>, vector<1x32x512xf32>
    %98 = vector.shape_cast %97 : vector<1x32x512xf32> to vector<32x512xf32>
    %99 = arith.mulf %98, %96 : vector<32x512xf32>
    %100 = arith.addf %95, %99 : vector<32x512xf32>
    %c15_i32_61 = arith.constant 15 : i32
    %101 = tpu.dynamic_rotate %89 by %c15_i32_61 dim 1 : vector<32x512xf32>, i32 -> vector<32x512xf32>
    %c2_62 = arith.constant 2 : index
    %c0_63 = arith.constant 0 : index
    %c0_64 = arith.constant 0 : index
    %102 = vector.load %arg11[%c2_62, %c0_63, %c0_64] : memref<9x32x512xf32, #tpu.memory_space<vmem>>, vector<1x32x512xf32>
    %103 = vector.shape_cast %102 : vector<1x32x512xf32> to vector<32x512xf32>
    %104 = arith.mulf %103, %101 : vector<32x512xf32>
    %105 = arith.addf %100, %104 : vector<32x512xf32>
    %c1_i32_65 = arith.constant 1 : i32
    %106 = tpu.dynamic_rotate %89 by %c1_i32_65 dim 1 : vector<32x512xf32>, i32 -> vector<32x512xf32>
    %c3_66 = arith.constant 3 : index
    %c0_67 = arith.constant 0 : index
    %c0_68 = arith.constant 0 : index
    %107 = vector.load %arg11[%c3_66, %c0_67, %c0_68] : memref<9x32x512xf32, #tpu.memory_space<vmem>>, vector<1x32x512xf32>
    %108 = vector.shape_cast %107 : vector<1x32x512xf32> to vector<32x512xf32>
    %109 = arith.mulf %108, %106 : vector<32x512xf32>
    %110 = arith.addf %105, %109 : vector<32x512xf32>
    %c4_69 = arith.constant 4 : index
    %c0_70 = arith.constant 0 : index
    %c0_71 = arith.constant 0 : index
    %111 = vector.load %arg11[%c4_69, %c0_70, %c0_71] : memref<9x32x512xf32, #tpu.memory_space<vmem>>, vector<1x32x512xf32>
    %112 = vector.shape_cast %111 : vector<1x32x512xf32> to vector<32x512xf32>
    %113 = arith.mulf %112, %89 : vector<32x512xf32>
    %114 = arith.addf %110, %113 : vector<32x512xf32>
    %c511_i32_72 = arith.constant 511 : i32
    %115 = tpu.dynamic_rotate %89 by %c511_i32_72 dim 1 : vector<32x512xf32>, i32 -> vector<32x512xf32>
    %c5_73 = arith.constant 5 : index
    %c0_74 = arith.constant 0 : index
    %c0_75 = arith.constant 0 : index
    %116 = vector.load %arg11[%c5_73, %c0_74, %c0_75] : memref<9x32x512xf32, #tpu.memory_space<vmem>>, vector<1x32x512xf32>
    %117 = vector.shape_cast %116 : vector<1x32x512xf32> to vector<32x512xf32>
    %118 = arith.mulf %117, %115 : vector<32x512xf32>
    %119 = arith.addf %114, %118 : vector<32x512xf32>
    %c497_i32_76 = arith.constant 497 : i32
    %120 = tpu.dynamic_rotate %89 by %c497_i32_76 dim 1 : vector<32x512xf32>, i32 -> vector<32x512xf32>
    %c6_77 = arith.constant 6 : index
    %c0_78 = arith.constant 0 : index
    %c0_79 = arith.constant 0 : index
    %121 = vector.load %arg11[%c6_77, %c0_78, %c0_79] : memref<9x32x512xf32, #tpu.memory_space<vmem>>, vector<1x32x512xf32>
    %122 = vector.shape_cast %121 : vector<1x32x512xf32> to vector<32x512xf32>
    %123 = arith.mulf %122, %120 : vector<32x512xf32>
    %124 = arith.addf %119, %123 : vector<32x512xf32>
    %c496_i32_80 = arith.constant 496 : i32
    %125 = tpu.dynamic_rotate %89 by %c496_i32_80 dim 1 : vector<32x512xf32>, i32 -> vector<32x512xf32>
    %c7_81 = arith.constant 7 : index
    %c0_82 = arith.constant 0 : index
    %c0_83 = arith.constant 0 : index
    %126 = vector.load %arg11[%c7_81, %c0_82, %c0_83] : memref<9x32x512xf32, #tpu.memory_space<vmem>>, vector<1x32x512xf32>
    %127 = vector.shape_cast %126 : vector<1x32x512xf32> to vector<32x512xf32>
    %128 = arith.mulf %127, %125 : vector<32x512xf32>
    %129 = arith.addf %124, %128 : vector<32x512xf32>
    %c495_i32_84 = arith.constant 495 : i32
    %130 = tpu.dynamic_rotate %89 by %c495_i32_84 dim 1 : vector<32x512xf32>, i32 -> vector<32x512xf32>
    %c8_85 = arith.constant 8 : index
    %c0_86 = arith.constant 0 : index
    %c0_87 = arith.constant 0 : index
    %131 = vector.load %arg11[%c8_85, %c0_86, %c0_87] : memref<9x32x512xf32, #tpu.memory_space<vmem>>, vector<1x32x512xf32>
    %132 = vector.shape_cast %131 : vector<1x32x512xf32> to vector<32x512xf32>
    %133 = arith.mulf %132, %130 : vector<32x512xf32>
    %134 = arith.addf %129, %133 : vector<32x512xf32>
    %c0_88 = arith.constant 0 : index
    %c0_89 = arith.constant 0 : index
    %135 = vector.load %arg12[%c0_88, %c0_89] : memref<32x1xf32, #tpu.memory_space<vmem>>, vector<32x1xf32>
    %136 = vector.broadcast %135 : vector<32x1xf32> to vector<32x512xf32>
    %137 = arith.addf %134, %136 : vector<32x512xf32>
    %cst_90 = arith.constant 0.000000e+00 : f32
    %138 = vector.broadcast %cst_90 : f32 to vector<32x512xf32>
    %139 = arith.maximumf %137, %138 : vector<32x512xf32>
    %c0_91 = arith.constant 0 : index
    %c0_92 = arith.constant 0 : index
    %140 = vector.load %arg13[%c0_91, %c0_92] : memref<16x32xbf16, #tpu.memory_space<vmem>>, vector<16x32xbf16>
    %141 = arith.truncf %139 : vector<32x512xf32> to vector<32x512xbf16>
    %cst_93 = arith.constant dense<0.000000e+00> : vector<16x512xf32>
    %142 = tpu.matmul %140, %141, %cst_93 {dimension_numbers = #tpu.dot_dimension_numbers<[1], [0], [0], [1], [0, 0, 1, 1], [], []>} : vector<16x32xbf16>, vector<32x512xbf16>, vector<16x512xf32> -> vector<16x512xf32>
    %c0_94 = arith.constant 0 : index
    %c0_95 = arith.constant 0 : index
    %143 = vector.load %arg14[%c0_94, %c0_95] : memref<16x1xf32, #tpu.memory_space<vmem>>, vector<16x1xf32>
    %144 = vector.broadcast %143 : vector<16x1xf32> to vector<16x512xf32>
    %145 = arith.addf %142, %144 : vector<16x512xf32>
    %146 = arith.addf %145, %72 : vector<16x512xf32>
    %c2_96 = arith.constant 2 : index
    %147 = memref.load %arg1[%c2_96] : memref<3xf32, #tpu.memory_space<smem>>
    %148 = vector.broadcast %147 : f32 to vector<16x512xf32>
    %149 = arith.mulf %148, %146 : vector<16x512xf32>
    %c0_97 = arith.constant 0 : index
    %c0_98 = arith.constant 0 : index
    %c0_99 = arith.constant 0 : index
    %150 = vector.load %arg15[%c0_97, %c0_98, %c0_99] : memref<1x16x512xf32, #tpu.memory_space<vmem>>, vector<1x16x512xf32>
    %151 = vector.shape_cast %150 : vector<1x16x512xf32> to vector<16x512xf32>
    %152 = arith.addf %151, %149 : vector<16x512xf32>
    %c0_100 = arith.constant 0 : index
    %c0_101 = arith.constant 0 : index
    %c0_102 = arith.constant 0 : index
    %153 = vector.load %arg15[%c0_100, %c0_101, %c0_102] : memref<1x16x512xf32, #tpu.memory_space<vmem>>, vector<1x16x512xf32>
    %154 = vector.shape_cast %153 : vector<1x16x512xf32> to vector<16x512xf32>
    %155 = vector.shape_cast %152 : vector<16x512xf32> to vector<1x16x512xf32>
    tpu.vector_store %arg15[%c0_100, %c0_101, %c0_102], %155 {strides = array<i32>} : memref<1x16x512xf32, #tpu.memory_space<vmem>>, vector<1x16x512xf32>,
    return
  }
  func.func @transform_0(%arg0: i32) -> i32 {
    %c0_i32 = arith.constant 0 : i32
    %c0_i32_0 = arith.constant 0 : i32
    return %c0_i32 : i32
  }
  func.func @transform_1(%arg0: i32) -> (i32, i32, i32) {
    %c0_i32 = arith.constant 0 : i32
    %c0_i32_0 = arith.constant 0 : i32
    %c0_i32_1 = arith.constant 0 : i32
    return %arg0, %c0_i32, %c0_i32_0 : i32, i32, i32
  }
  func.func @transform_2(%arg0: i32) -> (i32, i32) {
    %c0_i32 = arith.constant 0 : i32
    %c0_i32_0 = arith.constant 0 : i32
    %c0_i32_1 = arith.constant 0 : i32
    return %c0_i32, %c0_i32_0 : i32, i32
  }
  func.func @transform_3(%arg0: i32) -> (i32, i32) {
    %c0_i32 = arith.constant 0 : i32
    %c0_i32_0 = arith.constant 0 : i32
    %c0_i32_1 = arith.constant 0 : i32
    return %c0_i32, %c0_i32_0 : i32, i32
  }
  func.func @transform_4(%arg0: i32) -> (i32, i32, i32) {
    %c0_i32 = arith.constant 0 : i32
    %c0_i32_0 = arith.constant 0 : i32
    %c0_i32_1 = arith.constant 0 : i32
    %c0_i32_2 = arith.constant 0 : i32
    return %c0_i32, %c0_i32_0, %c0_i32_1 : i32, i32, i32
  }
  func.func @transform_5(%arg0: i32) -> (i32, i32) {
    %c0_i32 = arith.constant 0 : i32
    %c0_i32_0 = arith.constant 0 : i32
    %c0_i32_1 = arith.constant 0 : i32
    return %c0_i32, %c0_i32_0 : i32, i32
  }
  func.func @transform_6(%arg0: i32) -> (i32, i32) {
    %c0_i32 = arith.constant 0 : i32
    %c0_i32_0 = arith.constant 0 : i32
    %c0_i32_1 = arith.constant 0 : i32
    return %c0_i32, %c0_i32_0 : i32, i32
  }
  func.func @transform_7(%arg0: i32) -> (i32, i32) {
    %c0_i32 = arith.constant 0 : i32
    %c0_i32_0 = arith.constant 0 : i32
    %c0_i32_1 = arith.constant 0 : i32
    return %c0_i32, %c0_i32_0 : i32, i32
  }
  func.func @transform_8(%arg0: i32) -> (i32, i32) {
    %c0_i32 = arith.constant 0 : i32
    %c0_i32_0 = arith.constant 0 : i32
    %c0_i32_1 = arith.constant 0 : i32
    return %c0_i32, %c0_i32_0 : i32, i32
  }
  func.func @transform_9(%arg0: i32) -> (i32, i32) {
    %c0_i32 = arith.constant 0 : i32
    %c0_i32_0 = arith.constant 0 : i32
    %c0_i32_1 = arith.constant 0 : i32
    return %c0_i32, %c0_i32_0 : i32, i32
  }
  func.func @transform_10(%arg0: i32) -> (i32, i32, i32) {
    %c0_i32 = arith.constant 0 : i32
    %c0_i32_0 = arith.constant 0 : i32
    %c0_i32_1 = arith.constant 0 : i32
    %c0_i32_2 = arith.constant 0 : i32
    return %c0_i32, %c0_i32_0, %c0_i32_1 : i32, i32, i32
  }
  func.func @transform_11(%arg0: i32) -> (i32, i32) {
    %c0_i32 = arith.constant 0 : i32
    %c0_i32_0 = arith.constant 0 : i32
    %c0_i32_1 = arith.constant 0 : i32
    return %c0_i32, %c0_i32_0 : i32, i32
  }
  func.func @transform_12(%arg0: i32) -> (i32, i32) {
    %c0_i32 = arith.constant 0 : i32
    %c0_i32_0 = arith.constant 0 : i32
    %c0_i32_1 = arith.constant 0 : i32
    return %c0_i32, %c0_i32_0 : i32, i32
  }
  func.func @transform_13(%arg0: i32) -> (i32, i32) {
    %c0_i32 = arith.constant 0 : i32
    %c0_i32_0 = arith.constant 0 : i32
    %c0_i32_1 = arith.constant 0 : i32
    return %c0_i32, %c0_i32_0 : i32, i32
  }
  func.func @transform_14(%arg0: i32) -> (i32, i32, i32) {
    %c0_i32 = arith.constant 0 : i32
    %c0_i32_0 = arith.constant 0 : i32
    %c0_i32_1 = arith.constant 0 : i32
    return %arg0, %c0_i32, %c0_i32_0 : i32, i32, i32
  }
}

</mosaic_0001>

<llo_original>
// kernel: mixed_stage_forward.1
$region0: #{mixed_stage_forward.1}
  #allocation0 [shape = 'u32[]', space=smem, size = 0x4, offset = 0x4, fixed_abs, tag = 'smem constant byte address 0x4 - core index']
  #allocation1 [shape = 'u32[144,128]{1,0:T(1,128)}', space=vmem, size = 0x12000, scoped, tag = 'internal scratch']
  %s0 = inlined_call_operand.vmem [shape: f32[3], index: 0, kind: input, shape index: {}]
  %s1 = inlined_call_operand.vmem [shape: f32[2,16,512], index: 1, kind: input, shape index: {}]
  %s2 = inlined_call_operand.vmem [shape: bf16[32,16], index: 2, kind: input, shape index: {}]
  %s3 = inlined_call_operand.vmem [shape: f32[32,1], index: 3, kind: input, shape index: {}, may-alias: {3,5,9,11}]
  %s4 = inlined_call_operand.vmem [shape: f32[9,32,512], index: 4, kind: input, shape index: {}]
  %s5 = inlined_call_operand.vmem [shape: f32[32,1], index: 5, kind: input, shape index: {}, may-alias: {3,5,9,11}]
  %s6 = inlined_call_operand.vmem [shape: bf16[16,32], index: 6, kind: input, shape index: {}]
  %s7 = inlined_call_operand.vmem [shape: f32[16,1], index: 7, kind: input, shape index: {}, may-alias: {7,13}]
  %s8 = inlined_call_operand.vmem [shape: bf16[32,16], index: 8, kind: input, shape index: {}]
  %s9 = inlined_call_operand.vmem [shape: f32[32,1], index: 9, kind: input, shape index: {}, may-alias: {3,5,9,11}]
  %s10 = inlined_call_operand.vmem [shape: f32[9,32,512], index: 10, kind: input, shape index: {}]
  %s11 = inlined_call_operand.vmem [shape: f32[32,1], index: 11, kind: input, shape index: {}, may-alias: {3,5,9,11}]
  %s12 = inlined_call_operand.vmem [shape: bf16[16,32], index: 12, kind: input, shape index: {}]
  %s13 = inlined_call_operand.vmem [shape: f32[16,1], index: 13, kind: input, shape index: {}, may-alias: {7,13}]
  %s14 = inlined_call_operand.vmem [shape: f32[2,16,512], index: 14, kind: output, shape index: {}]
  %s15 = sld [smem:[#allocation0]]
  $region93: #{mixed_stage_forward.1} parent=0
    _
  %s17 = ssub.s32 1, %s15
  %s18 = scalar_select 0, %s17, %s15
  $region1: #{mixed_stage_forward.1} parent=0
    #allocation2 [shape = 'u8[512]{0}', space=smem, size = 0x200, scoped, tag = 'input window, operand 0, single buffered']
    #allocation3 [shape = 's32[2]{0}', space=sflag, size = 0x8, scoped, tag = 'scoped memory for mixed_stage_forward.1']
    %19 = vsyncpa [#allocation3], 0
    loop: start=0, step=1, limit=4
    $region2: #{mixed_stage_forward.1} parent=1 // loop_pre_header
      _
    $region3: #{mixed_stage_forward.1} parent=1 // loop_header
      %s21 = sphi 0, %s25
      %p22 = scmp.ge.s32.totalorder %s21, 4
      %s29 = sphi 0, %s29
      %s31 = sphi 0, %s29
      %s32 = sphi 0, %s31
      %s46 = sphi 0, %s32
      %s52 = sphi 0, %s54
      %s55 = sphi 0, %s52
      %s56 = sphi 0, %s55
      %s72 = sphi 0, %s56
      %s76 = sphi 0, %s76
      %s78 = sphi 0, %s76
      %s79 = sphi 0, %s78
      %s93 = sphi 0, %s79
      %s97 = sphi 0, %s97
      %s99 = sphi 0, %s97
      %s100 = sphi 0, %s99
      %s114 = sphi 0, %s100
      %s118 = sphi 0, %s118
      %s120 = sphi 0, %s118
      %s121 = sphi 0, %s120
      %s135 = sphi 0, %s121
      %s139 = sphi 0, %s139
      %s141 = sphi 0, %s139
      %s142 = sphi 0, %s141
      %s156 = sphi 0, %s142
      %s160 = sphi 0, %s160
      %s162 = sphi 0, %s160
      %s163 = sphi 0, %s162
      %s177 = sphi 0, %s163
      %s181 = sphi 0, %s181
      %s183 = sphi 0, %s181
      %s184 = sphi 0, %s183
      %s198 = sphi 0, %s184
      %s202 = sphi 0, %s202
      %s204 = sphi 0, %s202
      %s205 = sphi 0, %s204
      %s219 = sphi 0, %s205
      %s223 = sphi 0, %s223
      %s225 = sphi 0, %s223
      %s226 = sphi 0, %s225
      %s240 = sphi 0, %s226
      %s244 = sphi 0, %s244
      %s246 = sphi 0, %s244
      %s247 = sphi 0, %s246
      %s261 = sphi 0, %s247
      %s265 = sphi 0, %s265
      %s267 = sphi 0, %s265
      %s268 = sphi 0, %s267
      %s282 = sphi 0, %s268
      %s286 = sphi 0, %s286
      %s288 = sphi 0, %s286
      %s289 = sphi 0, %s288
      %s303 = sphi 0, %s289
      %s307 = sphi 0, %s307
      %s309 = sphi 0, %s307
      %s310 = sphi 0, %s309
      %s324 = sphi 0, %s310
      %s330 = sphi 0, %s332
      %s333 = sphi 0, %s330
      %s334 = sphi 0, %s333
      %s350 = sphi 0, %s334
    $region4: #{mixed_stage_forward.1} parent=1 // loop_header_branch
      %24 = sbr.rel (%p22) target = $region8
    $region5: #{mixed_stage_forward.1} parent=1 // loop_body
      %s26 = ssub.s32 %s21, 1
      %s27 = ssub.s32 %s21, 2
      %s28 = sadd.s32 %s21, 1
      %s30 = sadd.s32 %s29, 1
      %p33 = scmp.eq.s32.totalorder %s21, 1
      %p34 = scmp.ne.s32.totalorder %s29, %s31
      %p35 = scmp.eq.s32.totalorder %s21, 0
      %p36 = por %p34, %p35
      %p37 = scmp.ne.s32.totalorder %s29, %s31
      %p38 = scmp.eq.s32.totalorder %s26, 1
      %p39 = por %p37, %p38
      %p40 = scmp.ne.s32.totalorder %s31, %s32
      %p41 = scmp.eq.s32.totalorder %s26, 0
      %p42 = por %p40, %p41
      %p43 = scmp.ne.s32.totalorder %s31, %s32
      %p44 = scmp.eq.s32.totalorder %s27, 1
      %p45 = por %p43, %p44
      %p47 = scmp.ne.s32.totalorder %s32, %s46
      %p48 = scmp.eq.s32.totalorder %s27, 0
      %p49 = por %p47, %p48
      %s50 = ssub.s32 %s21, %s28
      %p51 = scmp.eq.s32.totalorder %s50, 0
      %s53 = sadd.s32 %s52, 1
      %s54 = scalar_select %p51, %s52, %s53
      %p57 = pneg %p51
      %p58 = scmp.eq.s32.totalorder %s21, 1
      %p59 = por %p57, %p58
      %p60 = scmp.ne.s32.totalorder %s52, %s55
      %p61 = scmp.eq.s32.totalorder %s21, 0
      %p62 = por %p60, %p61
      %p63 = scmp.ne.s32.totalorder %s52, %s55
      %p64 = scmp.eq.s32.totalorder %s26, 1
      %p65 = por %p63, %p64
      %p66 = scmp.ne.s32.totalorder %s55, %s56
      %p67 = scmp.eq.s32.totalorder %s26, 0
      %p68 = por %p66, %p67
      %p69 = scmp.ne.s32.totalorder %s55, %s56
      %p70 = scmp.eq.s32.totalorder %s27, 1
      %p71 = por %p69, %p70
      %p73 = scmp.ne.s32.totalorder %s56, %s72
      %p74 = scmp.eq.s32.totalorder %s27, 0
      %p75 = por %p73, %p74
      %s77 = sadd.s32 %s76, 1
      %p80 = scmp.eq.s32.totalorder %s21, 1
      %p81 = scmp.ne.s32.totalorder %s76, %s78
      %p82 = scmp.eq.s32.totalorder %s21, 0
      %p83 = por %p81, %p82
      %p84 = scmp.ne.s32.totalorder %s76, %s78
      %p85 = scmp.eq.s32.totalorder %s26, 1
      %p86 = por %p84, %p85
      %p87 = scmp.ne.s32.totalorder %s78, %s79
      %p88 = scmp.eq.s32.totalorder %s26, 0
      %p89 = por %p87, %p88
      %p90 = scmp.ne.s32.totalorder %s78, %s79
      %p91 = scmp.eq.s32.totalorder %s27, 1
      %p92 = por %p90, %p91
      %p94 = scmp.ne.s32.totalorder %s79, %s93
      %p95 = scmp.eq.s32.totalorder %s27, 0
      %p96 = por %p94, %p95
      %s98 = sadd.s32 %s97, 1
      %p101 = scmp.eq.s32.totalorder %s21, 1
      %p102 = scmp.ne.s32.totalorder %s97, %s99
      %p103 = scmp.eq.s32.totalorder %s21, 0
      %p104 = por %p102, %p103
      %p105 = scmp.ne.s32.totalorder %s97, %s99
      %p106 = scmp.eq.s32.totalorder %s26, 1
      %p107 = por %p105, %p106
      %p108 = scmp.ne.s32.totalorder %s99, %s100
      %p109 = scmp.eq.s32.totalorder %s26, 0
      %p110 = por %p108, %p109
      %p111 = scmp.ne.s32.totalorder %s99, %s100
      %p112 = scmp.eq.s32.totalorder %s27, 1
      %p113 = por %p111, %p112
      %p115 = scmp.ne.s32.totalorder %s100, %s114
      %p116 = scmp.eq.s32.totalorder %s27, 0
      %p117 = por %p115, %p116
      %s119 = sadd.s32 %s118, 1
      %p122 = scmp.eq.s32.totalorder %s21, 1
      %p123 = scmp.ne.s32.totalorder %s118, %s120
      %p124 = scmp.eq.s32.totalorder %s21, 0
      %p125 = por %p123, %p124
      %p126 = scmp.ne.s32.totalorder %s118, %s120
      %p127 = scmp.eq.s32.totalorder %s26, 1
      %p128 = por %p126, %p127
      %p129 = scmp.ne.s32.totalorder %s120, %s121
      %p130 = scmp.eq.s32.totalorder %s26, 0
      %p131 = por %p129, %p130
      %p132 = scmp.ne.s32.totalorder %s120, %s121
      %p133 = scmp.eq.s32.totalorder %s27, 1
      %p134 = por %p132, %p133
      %p136 = scmp.ne.s32.totalorder %s121, %s135
      %p137 = scmp.eq.s32.totalorder %s27, 0
      %p138 = por %p136, %p137
      %s140 = sadd.s32 %s139, 1
      %p143 = scmp.eq.s32.totalorder %s21, 1
      %p144 = scmp.ne.s32.totalorder %s139, %s141
      %p145 = scmp.eq.s32.totalorder %s21, 0
      %p146 = por %p144, %p145
      %p147 = scmp.ne.s32.totalorder %s139, %s141
      %p148 = scmp.eq.s32.totalorder %s26, 1
      %p149 = por %p147, %p148
      %p150 = scmp.ne.s32.totalorder %s141, %s142
      %p151 = scmp.eq.s32.totalorder %s26, 0
      %p152 = por %p150, %p151
      %p153 = scmp.ne.s32.totalorder %s141, %s142
      %p154 = scmp.eq.s32.totalorder %s27, 1
      %p155 = por %p153, %p154
      %p157 = scmp.ne.s32.totalorder %s142, %s156
      %p158 = scmp.eq.s32.totalorder %s27, 0
      %p159 = por %p157, %p158
      %s161 = sadd.s32 %s160, 1
      %p164 = scmp.eq.s32.totalorder %s21, 1
      %p165 = scmp.ne.s32.totalorder %s160, %s162
      %p166 = scmp.eq.s32.totalorder %s21, 0
      %p167 = por %p165, %p166
      %p168 = scmp.ne.s32.totalorder %s160, %s162
      %p169 = scmp.eq.s32.totalorder %s26, 1
      %p170 = por %p168, %p169
      %p171 = scmp.ne.s32.totalorder %s162, %s163
      %p172 = scmp.eq.s32.totalorder %s26, 0
      %p173 = por %p171, %p172
      %p174 = scmp.ne.s32.totalorder %s162, %s163
      %p175 = scmp.eq.s32.totalorder %s27, 1
      %p176 = por %p174, %p175
      %p178 = scmp.ne.s32.totalorder %s163, %s177
      %p179 = scmp.eq.s32.totalorder %s27, 0
      %p180 = por %p178, %p179
      %s182 = sadd.s32 %s181, 1
      %p185 = scmp.eq.s32.totalorder %s21, 1
      %p186 = scmp.ne.s32.totalorder %s181, %s183
      %p187 = scmp.eq.s32.totalorder %s21, 0
      %p188 = por %p186, %p187
      %p189 = scmp.ne.s32.totalorder %s181, %s183
      %p190 = scmp.eq.s32.totalorder %s26, 1
      %p191 = por %p189, %p190
      %p192 = scmp.ne.s32.totalorder %s183, %s184
      %p193 = scmp.eq.s32.totalorder %s26, 0
      %p194 = por %p192, %p193
      %p195 = scmp.ne.s32.totalorder %s183, %s184
      %p196 = scmp.eq.s32.totalorder %s27, 1
      %p197 = por %p195, %p196
      %p199 = scmp.ne.s32.totalorder %s184, %s198
      %p200 = scmp.eq.s32.totalorder %s27, 0
      %p201 = por %p199, %p200
      %s203 = sadd.s32 %s202, 1
      %p206 = scmp.eq.s32.totalorder %s21, 1
      %p207 = scmp.ne.s32.totalorder %s202, %s204
      %p208 = scmp.eq.s32.totalorder %s21, 0
      %p209 = por %p207, %p208
      %p210 = scmp.ne.s32.totalorder %s202, %s204
      %p211 = scmp.eq.s32.totalorder %s26, 1
      %p212 = por %p210, %p211
      %p213 = scmp.ne.s32.totalorder %s204, %s205
      %p214 = scmp.eq.s32.totalorder %s26, 0
      %p215 = por %p213, %p214
      %p216 = scmp.ne.s32.totalorder %s204, %s205
      %p217 = scmp.eq.s32.totalorder %s27, 1
      %p218 = por %p216, %p217
      %p220 = scmp.ne.s32.totalorder %s205, %s219
      %p221 = scmp.eq.s32.totalorder %s27, 0
      %p222 = por %p220, %p221
      %s224 = sadd.s32 %s223, 1
      %p227 = scmp.eq.s32.totalorder %s21, 1
      %p228 = scmp.ne.s32.totalorder %s223, %s225
      %p229 = scmp.eq.s32.totalorder %s21, 0
      %p230 = por %p228, %p229
      %p231 = scmp.ne.s32.totalorder %s223, %s225
      %p232 = scmp.eq.s32.totalorder %s26, 1
      %p233 = por %p231, %p232
      %p234 = scmp.ne.s32.totalorder %s225, %s226
      %p235 = scmp.eq.s32.totalorder %s26, 0
      %p236 = por %p234, %p235
      %p237 = scmp.ne.s32.totalorder %s225, %s226
      %p238 = scmp.eq.s32.totalorder %s27, 1
      %p239 = por %p237, %p238
      %p241 = scmp.ne.s32.totalorder %s226, %s240
      %p242 = scmp.eq.s32.totalorder %s27, 0
      %p243 = por %p241, %p242
      %s245 = sadd.s32 %s244, 1
      %p248 = scmp.eq.s32.totalorder %s21, 1
      %p249 = scmp.ne.s32.totalorder %s244, %s246
      %p250 = scmp.eq.s32.totalorder %s21, 0
      %p251 = por %p249, %p250
      %p252 = scmp.ne.s32.totalorder %s244, %s246
      %p253 = scmp.eq.s32.totalorder %s26, 1
      %p254 = por %p252, %p253
      %p255 = scmp.ne.s32.totalorder %s246, %s247
      %p256 = scmp.eq.s32.totalorder %s26, 0
      %p257 = por %p255, %p256
      %p258 = scmp.ne.s32.totalorder %s246, %s247
      %p259 = scmp.eq.s32.totalorder %s27, 1
      %p260 = por %p258, %p259
      %p262 = scmp.ne.s32.totalorder %s247, %s261
      %p263 = scmp.eq.s32.totalorder %s27, 0
      %p264 = por %p262, %p263
      %s266 = sadd.s32 %s265, 1
      %p269 = scmp.eq.s32.totalorder %s21, 1
      %p270 = scmp.ne.s32.totalorder %s265, %s267
      %p271 = scmp.eq.s32.totalorder %s21, 0
      %p272 = por %p270, %p271
      %p273 = scmp.ne.s32.totalorder %s265, %s267
      %p274 = scmp.eq.s32.totalorder %s26, 1
      %p275 = por %p273, %p274
      %p276 = scmp.ne.s32.totalorder %s267, %s268
      %p277 = scmp.eq.s32.totalorder %s26, 0
      %p278 = por %p276, %p277
      %p279 = scmp.ne.s32.totalorder %s267, %s268
      %p280 = scmp.eq.s32.totalorder %s27, 1
      %p281 = por %p279, %p280
      %p283 = scmp.ne.s32.totalorder %s268, %s282
      %p284 = scmp.eq.s32.totalorder %s27, 0
      %p285 = por %p283, %p284
      %s287 = sadd.s32 %s286, 1
      %p290 = scmp.eq.s32.totalorder %s21, 1
      %p291 = scmp.ne.s32.totalorder %s286, %s288
      %p292 = scmp.eq.s32.totalorder %s21, 0
      %p293 = por %p291, %p292
      %p294 = scmp.ne.s32.totalorder %s286, %s288
      %p295 = scmp.eq.s32.totalorder %s26, 1
      %p296 = por %p294, %p295
      %p297 = scmp.ne.s32.totalorder %s288, %s289
      %p298 = scmp.eq.s32.totalorder %s26, 0
      %p299 = por %p297, %p298
      %p300 = scmp.ne.s32.totalorder %s288, %s289
      %p301 = scmp.eq.s32.totalorder %s27, 1
      %p302 = por %p300, %p301
      %p304 = scmp.ne.s32.totalorder %s289, %s303
      %p305 = scmp.eq.s32.totalorder %s27, 0
      %p306 = por %p304, %p305
      %s308 = sadd.s32 %s307, 1
      %p311 = scmp.eq.s32.totalorder %s21, 1
      %p312 = scmp.ne.s32.totalorder %s307, %s309
      %p313 = scmp.eq.s32.totalorder %s21, 0
      %p314 = por %p312, %p313
      %p315 = scmp.ne.s32.totalorder %s307, %s309
      %p316 = scmp.eq.s32.totalorder %s26, 1
      %p317 = por %p315, %p316
      %p318 = scmp.ne.s32.totalorder %s309, %s310
      %p319 = scmp.eq.s32.totalorder %s26, 0
      %p320 = por %p318, %p319
      %p321 = scmp.ne.s32.totalorder %s309, %s310
      %p322 = scmp.eq.s32.totalorder %s27, 1
      %p323 = por %p321, %p322
      %p325 = scmp.ne.s32.totalorder %s310, %s324
      %p326 = scmp.eq.s32.totalorder %s27, 0
      %p327 = por %p325, %p326
      %s328 = ssub.s32 %s21, %s28
      %p329 = scmp.eq.s32.totalorder %s328, 0
      %s331 = sadd.s32 %s330, 1
      %s332 = scalar_select %p329, %s330, %s331
      %p335 = pneg %p329
      %p336 = scmp.eq.s32.totalorder %s21, 1
      %p337 = por %p335, %p336
      %p338 = scmp.ne.s32.totalorder %s330, %s333
      %p339 = scmp.eq.s32.totalorder %s21, 0
      %p340 = por %p338, %p339
      %p341 = scmp.ne.s32.totalorder %s330, %s333
      %p342 = scmp.eq.s32.totalorder %s26, 1
      %p343 = por %p341, %p342
      %p344 = scmp.ne.s32.totalorder %s333, %s334
      %p345 = scmp.eq.s32.totalorder %s26, 0
      %p346 = por %p344, %p345
      %p347 = scmp.ne.s32.totalorder %s333, %s334
      %p348 = scmp.eq.s32.totalorder %s27, 1
      %p349 = por %p347, %p348
      %p351 = scmp.ne.s32.totalorder %s334, %s350
      %p352 = scmp.eq.s32.totalorder %s27, 0
      %p353 = por %p351, %p352
      %p354 = scmp.le.s32.totalorder 1, %s21
      %p355 = scmp.lt.s32.totalorder %s21, 3
      %p356 = pnand %p354, %p355
      %p357 = pneg %p356
      // Predicated region
      $region9: #{mixed_stage_forward.1} parent=5 // pred_check
        _
      $region10: #{mixed_stage_forward.1} parent=5 // pred_check_branch
        %359 = sbr.rel (%p356) target = $region12
      $region11: #{mixed_stage_forward.1} parent=5 // pred_region
        %s360 = ssub.s32 %s21, 1
        // Predicated region
        $region13: #{mixed_stage_forward.1} parent=11 // pred_check
          %p361 = pneg %p42
        $region14: #{mixed_stage_forward.1} parent=11 // pred_check_branch
          %363 = sbr.rel (%p361) target = $region16
        $region15: #{mixed_stage_forward.1} parent=11 // pred_region
          %s365 = ssub.s32 16, 16
          %366 = vsyncadd [#allocation3], %s365
          %s368 = sshll.u32 %s0, 4
          %s369 = int_to_ptr.vmem [resolvable:$true] %s368
          %371 = dma.vmem_to_smem %s369, 16, [#allocation2], [#allocation3]
        $region16: #{mixed_stage_forward.1} parent=11 // pred_fallthru
          _
        // Predicated region
        $region17: #{mixed_stage_forward.1} parent=11 // pred_check
          %p372 = pneg %p89
        $region18: #{mixed_stage_forward.1} parent=11 // pred_check_branch
          %374 = sbr.rel (%p372) target = $region20
        $region19: #{mixed_stage_forward.1} parent=11 // pred_region
          _
        $region20: #{mixed_stage_forward.1} parent=11 // pred_fallthru
          _
        // Predicated region
        $region21: #{mixed_stage_forward.1} parent=11 // pred_check
          %p375 = pneg %p110
        $region22: #{mixed_stage_forward.1} parent=11 // pred_check_branch
          %377 = sbr.rel (%p375) target = $region24
        $region23: #{mixed_stage_forward.1} parent=11 // pred_region
          _
        $region24: #{mixed_stage_forward.1} parent=11 // pred_fallthru
          _
        // Predicated region
        $region25: #{mixed_stage_forward.1} parent=11 // pred_check
          %p378 = pneg %p131
        $region26: #{mixed_stage_forward.1} parent=11 // pred_check_branch
          %380 = sbr.rel (%p378) target = $region28
        $region27: #{mixed_stage_forward.1} parent=11 // pred_region
          _
        $region28: #{mixed_stage_forward.1} parent=11 // pred_fallthru
          _
        // Predicated region
        $region29: #{mixed_stage_forward.1} parent=11 // pred_check
          %p381 = pneg %p152
        $region30: #{mixed_stage_forward.1} parent=11 // pred_check_branch
          %383 = sbr.rel (%p381) target = $region32
        $region31: #{mixed_stage_forward.1} parent=11 // pred_region
          _
        $region32: #{mixed_stage_forward.1} parent=11 // pred_fallthru
          _
        // Predicated region
        $region33: #{mixed_stage_forward.1} parent=11 // pred_check
          %p384 = pneg %p173
        $region34: #{mixed_stage_forward.1} parent=11 // pred_check_branch
          %386 = sbr.rel (%p384) target = $region36
        $region35: #{mixed_stage_forward.1} parent=11 // pred_region
          _
        $region36: #{mixed_stage_forward.1} parent=11 // pred_fallthru
          _
        // Predicated region
        $region37: #{mixed_stage_forward.1} parent=11 // pred_check
          %p387 = pneg %p194
        $region38: #{mixed_stage_forward.1} parent=11 // pred_check_branch
          %389 = sbr.rel (%p387) target = $region40
        $region39: #{mixed_stage_forward.1} parent=11 // pred_region
          _
        $region40: #{mixed_stage_forward.1} parent=11 // pred_fallthru
          _
        // Predicated region
        $region41: #{mixed_stage_forward.1} parent=11 // pred_check
          %p390 = pneg %p215
        $region42: #{mixed_stage_forward.1} parent=11 // pred_check_branch
          %392 = sbr.rel (%p390) target = $region44
        $region43: #{mixed_stage_forward.1} parent=11 // pred_region
          _
        $region44: #{mixed_stage_forward.1} parent=11 // pred_fallthru
          _
        // Predicated region
        $region45: #{mixed_stage_forward.1} parent=11 // pred_check
          %p393 = pneg %p236
        $region46: #{mixed_stage_forward.1} parent=11 // pred_check_branch
          %395 = sbr.rel (%p393) target = $region48
        $region47: #{mixed_stage_forward.1} parent=11 // pred_region
          _
        $region48: #{mixed_stage_forward.1} parent=11 // pred_fallthru
          _
        // Predicated region
        $region49: #{mixed_stage_forward.1} parent=11 // pred_check
          %p396 = pneg %p257
        $region50: #{mixed_stage_forward.1} parent=11 // pred_check_branch
          %398 = sbr.rel (%p396) target = $region52
        $region51: #{mixed_stage_forward.1} parent=11 // pred_region
          _
        $region52: #{mixed_stage_forward.1} parent=11 // pred_fallthru
          _
        // Predicated region
        $region53: #{mixed_stage_forward.1} parent=11 // pred_check
          %p399 = pneg %p278
        $region54: #{mixed_stage_forward.1} parent=11 // pred_check_branch
          %401 = sbr.rel (%p399) target = $region56
        $region55: #{mixed_stage_forward.1} parent=11 // pred_region
          _
        $region56: #{mixed_stage_forward.1} parent=11 // pred_fallthru
          _
        // Predicated region
        $region57: #{mixed_stage_forward.1} parent=11 // pred_check
          %p402 = pneg %p299
        $region58: #{mixed_stage_forward.1} parent=11 // pred_check_branch
          %404 = sbr.rel (%p402) target = $region60
        $region59: #{mixed_stage_forward.1} parent=11 // pred_region
          _
        $region60: #{mixed_stage_forward.1} parent=11 // pred_fallthru
          _
        // Predicated region
        $region61: #{mixed_stage_forward.1} parent=11 // pred_check
          %p405 = pneg %p320
        $region62: #{mixed_stage_forward.1} parent=11 // pred_check_branch
          %407 = sbr.rel (%p405) target = $region64
        $region63: #{mixed_stage_forward.1} parent=11 // pred_region
          _
        $region64: #{mixed_stage_forward.1} parent=11 // pred_fallthru
          _
      $region12: #{mixed_stage_forward.1} parent=5 // pred_fallthru
        _
      %p408 = scmp.lt.s32.totalorder %s21, 2
      // Predicated region
      $region65: #{mixed_stage_forward.1} parent=5 // pred_check
        %p409 = pneg %p408
      $region66: #{mixed_stage_forward.1} parent=5 // pred_check_branch
        %411 = sbr.rel (%p409) target = $region68
      $region67: #{mixed_stage_forward.1} parent=5 // pred_region
        // Predicated region
        $region69: #{mixed_stage_forward.1} parent=67 // pred_check
          %p412 = pneg %p62
        $region70: #{mixed_stage_forward.1} parent=67 // pred_check_branch
          %414 = sbr.rel (%p412) target = $region72
        $region71: #{mixed_stage_forward.1} parent=67 // pred_region
          %p415 = scmp.lt.s32.totalorder %s21, 1
          %s416 = scalar_select %p415, %s21, 1
          %s417 = smul.addr %s416, 8
          %s418 = smul.addr %s417, 8
          %s419 = scalar_lea.vmem %s1, %s418
        $region72: #{mixed_stage_forward.1} parent=67 // pred_fallthru
          _
      $region68: #{mixed_stage_forward.1} parent=5 // pred_fallthru
        _
      %p420 = scmp.le.s32.totalorder 1, %s21
      %p421 = scmp.lt.s32.totalorder %s21, 3
      %p422 = pnand %p420, %p421
      %p423 = pneg %p422
      // Predicated region
      $region73: #{mixed_stage_forward.1} parent=5 // pred_check
        _
      $region74: #{mixed_stage_forward.1} parent=5 // pred_check_branch
        %425 = sbr.rel (%p422) target = $region76
      $region75: #{mixed_stage_forward.1} parent=5 // pred_region
        %s426 = ssub.s32 %s21, 1
        // Predicated region
        $region77: #{mixed_stage_forward.1} parent=75 // pred_check
          %p427 = pneg %p42
        $region78: #{mixed_stage_forward.1} parent=75 // pred_check_branch
          %429 = sbr.rel (%p427) target = $region80
        $region79: #{mixed_stage_forward.1} parent=75 // pred_region
          %430 = dma.done [#allocation3], 16
        $region80: #{mixed_stage_forward.1} parent=75 // pred_fallthru
          _
        %431 = sfence
        %p432 = pneg %p42
        %p433 = pneg %p39
        %p434 = scmp.lt.s32.totalorder %s26, 1
        %s435 = scalar_select %p434, %s26, 1
        %s436 = smul.addr %s435, 8
        %s437 = smul.addr %s436, 8
        %s438 = scalar_lea.vmem %s1, %s437
        %p439 = pneg %p68
        %p440 = pneg %p65
        %p441 = pneg %p89
        %p442 = pneg %p86
        %p443 = pneg %p110
        %p444 = pneg %p107
        %p445 = pneg %p131
        %p446 = pneg %p128
        %p447 = pneg %p152
        %p448 = pneg %p149
        %p449 = pneg %p173
        %p450 = pneg %p170
        %p451 = pneg %p194
        %p452 = pneg %p191
        %p453 = pneg %p215
        %p454 = pneg %p212
        %p455 = pneg %p236
        %p456 = pneg %p233
        %p457 = pneg %p257
        %p458 = pneg %p254
        %p459 = pneg %p278
        %p460 = pneg %p275
        %p461 = pneg %p299
        %p462 = pneg %p296
        %p463 = pneg %p320
        %p464 = pneg %p317
        %p465 = pneg %p346
        %p466 = pneg %p343
        %p467 = scmp.lt.s32.totalorder %s26, 1
        %s468 = scalar_select %p467, %s26, 1
        %s469 = smul.addr %s468, 8
        %s470 = smul.addr %s469, 8
        %s471 = scalar_lea.vmem %s14, %s470
        %p472 = scmp.lt.s32.totalorder %s26, 1
        %s473 = scalar_select %p472, %s26, 1
        %s474 = smul.addr %s473, 8
        %s475 = smul.addr %s474, 8
        %s476 = scalar_lea.vmem %s1, %s475
        %p477 = scmp.lt.s32.totalorder %s26, 1
        %s478 = scalar_select %p477, %s26, 1
        %s479 = smul.addr %s478, 8
        %s480 = smul.addr %s479, 8
        %s481 = scalar_lea.vmem %s14, %s480
        %v483 = vld [vmem:[%s476] sm:$0xff]
        %v484 = vld [vmem:[%s476 + $0x8] sm:$0xff]
        %v485 = vld [vmem:[%s476 + $0x10] sm:$0xff]
        %v486 = vld [vmem:[%s476 + $0x18] sm:$0xff]
        %v487 = vld [vmem:[%s476 + $0x20] sm:$0xff]
        %v488 = vld [vmem:[%s476 + $0x28] sm:$0xff]
        %v489 = vld [vmem:[%s476 + $0x30] sm:$0xff]
        %v490 = vld [vmem:[%s476 + $0x38] sm:$0xff]
        %s491 = sld [smem:[#allocation2]]
        %v492 = vstv %s491
        %v493 = vmul.f32 %v492, %v483
        %v494 = vmul.f32 %v492, %v484
        %v495 = vmul.f32 %v492, %v485
        %v496 = vmul.f32 %v492, %v486
        %v497 = vmul.f32 %v492, %v487
        %v498 = vmul.f32 %v492, %v488
        %v499 = vmul.f32 %v492, %v489
        %v500 = vmul.f32 %v492, %v490
        %501 = vst [vmem:[%s481] sm:$0xff] %v493
        %502 = vst [vmem:[%s481 + $0x8] sm:$0xff] %v494
        %503 = vst [vmem:[%s481 + $0x10] sm:$0xff] %v495
        %504 = vst [vmem:[%s481 + $0x18] sm:$0xff] %v496
        %505 = vst [vmem:[%s481 + $0x20] sm:$0xff] %v497
        %506 = vst [vmem:[%s481 + $0x28] sm:$0xff] %v498
        %507 = vst [vmem:[%s481 + $0x30] sm:$0xff] %v499
        %508 = vst [vmem:[%s481 + $0x38] sm:$0xff] %v500
        %v509 = vld [vmem:[%s2] sm:$0xf]
        %v510 = vld [vmem:[%s2 + $0x4] sm:$0xf]
        %v511 = vld [vmem:[%s2 + $0x8] sm:$0xf]
        %v512 = vld [vmem:[%s2 + $0xc] sm:$0xf]
        %v513 = vpack.c.bf16 %v487, %v483
        %v514 = vpack.c.bf16 %v488, %v484
        %v515 = vpack.c.bf16 %v489, %v485
        %v516 = vpack.c.bf16 %v490, %v486
        %v517 = vld [vmem:[%s3] sm:$0xff]
        %v518 = vld [vmem:[%s3 + $0x8] sm:$0xff]
        %v519 = vld [vmem:[%s3 + $0x10] sm:$0xff]
        %v520 = vld [vmem:[%s3 + $0x18] sm:$0xff]
        %522 = vset.pattern.permute.xlu0 0
        %523 = vperm.xlu0 %522, %v517
        %v524 = vpop.permute.xlu0 %523
        %527 = vset.pattern.permute.xlu0 0
        %528 = vperm.xlu0 %527, %v518
        %v529 = vpop.permute.xlu0 %528
        %532 = vset.pattern.permute.xlu0 0
        %533 = vperm.xlu0 %532, %v519
        %v534 = vpop.permute.xlu0 %533
        %537 = vset.pattern.permute.xlu0 0
        %538 = vperm.xlu0 %537, %v520
        %v539 = vpop.permute.xlu0 %538
        %v545 = vunpack.c.l.b16 %v509
        %v546 = vunpack.c.l.b16 %v510
        %v547 = vunpack.c.l.b16 %v511
        %v548 = vunpack.c.l.b16 %v512
        %v549 = vpack.c.b16 %v546, %v545
        %v550 = vpack.c.b16 %v548, %v547
        %vm551 = vcmask 130048
        %v553 = vsel %vm551, %v549, 0
        %v556 = vsel %vm551, %v550, 0
        %558 = vmatprep.subr.bf16.mxu0 %v514
        %559 = vmatpush1.bf16.msra.mxu0 %v513
        %560 = vmatprep.subr.bf16.mxu0 0
        %561 = vmatpush1.bf16.msra.mxu0 0
        %562 = vmatprep.subr.bf16.mxu0 0
        %563 = vmatpush1.bf16.msra.mxu0 0
        %564 = vmatprep.subr.bf16.mxu0 0
        %565 = vmatpush1.bf16.msra.mxu0 0
        %566 = vmatprep.subr.bf16.mxu0 0
        %567 = vmatpush1.bf16.msra.mxu0 0
        %568 = vmatprep.subr.bf16.mxu0 0
        %569 = vmatpush1.bf16.msra.mxu0 0
        %570 = vmatprep.subr.bf16.mxu0 0
        %571 = vmatpush1.bf16.msra.mxu0 0
        %572 = vmatprep.subr.bf16.mxu0 0
        %573 = vmatpush1.bf16.msra.mxu0 0
        %574 = vmatprep.subr.bf16.mxu0 0
        %575 = vmatpush1.bf16.msra.mxu0 0
        %576 = vmatprep.subr.bf16.mxu0 0
        %577 = vmatpush1.bf16.msra.mxu0 0
        %578 = vmatprep.subr.bf16.mxu0 0
        %579 = vmatpush1.bf16.msra.mxu0 0
        %580 = vmatprep.subr.bf16.mxu0 0
        %581 = vmatpush1.bf16.msra.mxu0 0
        %582 = vmatprep.subr.bf16.mxu0 0
        %583 = vmatpush1.bf16.msra.mxu0 0
        %584 = vmatprep.subr.bf16.mxu0 0
        %585 = vmatpush1.bf16.msra.mxu0 0
        %586 = vmatprep.subr.bf16.mxu0 0
        %587 = vmatpush1.bf16.msra.mxu0 0
        %588 = vmatprep.subr.bf16.mxu0 0
        %589 = vmatpush1.bf16.msra.mxu0 0
        %590 = vmatprep.mubr.bf16.mxu0 0
        %591 = vmatmul.mubr.bf16.gmra.mrb[0].mxu0 %v553
        %v592 = vpop.f32.mrb[0].mxu0
        %v593 = vadd.f32 %v524, %v592
        %v594 = vpop.f32.mrb[0].mxu0
        %v595 = vadd.f32 %v524, %v594
        %v596 = vpop.f32.mrb[0].mxu0
        %v597 = vadd.f32 %v529, %v596
        %v598 = vpop.f32.mrb[0].mxu0
        %v599 = vadd.f32 %v529, %v598
        %600 = vmatprep.mubr.bf16.mxu0 0
        %601 = vmatmul.mubr.bf16.gmra.mrb[0].mxu0 %v556
        %v602 = vpop.f32.mrb[0].mxu0
        %v603 = vadd.f32 %v534, %v602
        %v604 = vpop.f32.mrb[0].mxu0
        %v605 = vadd.f32 %v534, %v604
        %v606 = vpop.f32.mrb[0].mxu0
        %v607 = vadd.f32 %v539, %v606
        %v608 = vpop.f32.mrb[0].mxu0
        %v609 = vadd.f32 %v539, %v608
        %610 = vdwg.mxu0
        %611 = vmatprep.subr.bf16.mxu0 %v516
        %612 = vmatpush1.bf16.msra.mxu0 %v515
        %613 = vmatprep.subr.bf16.mxu0 0
        %614 = vmatpush1.bf16.msra.mxu0 0
        %615 = vmatprep.subr.bf16.mxu0 0
        %616 = vmatpush1.bf16.msra.mxu0 0
        %617 = vmatprep.subr.bf16.mxu0 0
        %618 = vmatpush1.bf16.msra.mxu0 0
        %619 = vmatprep.subr.bf16.mxu0 0
        %620 = vmatpush1.bf16.msra.mxu0 0
        %621 = vmatprep.subr.bf16.mxu0 0
        %622 = vmatpush1.bf16.msra.mxu0 0
        %623 = vmatprep.subr.bf16.mxu0 0
        %624 = vmatpush1.bf16.msra.mxu0 0
        %625 = vmatprep.subr.bf16.mxu0 0
        %626 = vmatpush1.bf16.msra.mxu0 0
        %627 = vmatprep.subr.bf16.mxu0 0
        %628 = vmatpush1.bf16.msra.mxu0 0
        %629 = vmatprep.subr.bf16.mxu0 0
        %630 = vmatpush1.bf16.msra.mxu0 0
        %631 = vmatprep.subr.bf16.mxu0 0
        %632 = vmatpush1.bf16.msra.mxu0 0
        %633 = vmatprep.subr.bf16.mxu0 0
        %634 = vmatpush1.bf16.msra.mxu0 0
        %635 = vmatprep.subr.bf16.mxu0 0
        %636 = vmatpush1.bf16.msra.mxu0 0
        %637 = vmatprep.subr.bf16.mxu0 0
        %638 = vmatpush1.bf16.msra.mxu0 0
        %639 = vmatprep.subr.bf16.mxu0 0
        %640 = vmatpush1.bf16.msra.mxu0 0
        %641 = vmatprep.subr.bf16.mxu0 0
        %642 = vmatpush1.bf16.msra.mxu0 0
        %643 = vmatprep.mubr.bf16.mxu0 0
        %644 = vmatmul.mubr.bf16.gmra.mrb[0].mxu0 %v553
        %v645 = vpop.f32.mrb[0].mxu0
        %v646 = vadd.f32 %v524, %v645
        %v647 = vpop.f32.mrb[0].mxu0
        %v648 = vadd.f32 %v524, %v647
        %v649 = vpop.f32.mrb[0].mxu0
        %v650 = vadd.f32 %v529, %v649
        %v651 = vpop.f32.mrb[0].mxu0
        %v652 = vadd.f32 %v529, %v651
        %653 = vmatprep.mubr.bf16.mxu0 0
        %654 = vmatmul.mubr.bf16.gmra.mrb[0].mxu0 %v556
        %v655 = vpop.f32.mrb[0].mxu0
        %v656 = vadd.f32 %v534, %v655
        %v657 = vpop.f32.mrb[0].mxu0
        %v658 = vadd.f32 %v534, %v657
        %v659 = vpop.f32.mrb[0].mxu0
        %v660 = vadd.f32 %v539, %v659
        %v661 = vpop.f32.mrb[0].mxu0
        %v662 = vadd.f32 %v539, %v661
        %663 = vdwg.mxu0
        %v664 = vmax.f32 %v593, 0.0
        %v665 = vmax.f32 %v595, 0.0
        %v666 = vmax.f32 %v646, 0.0
        %v667 = vmax.f32 %v648, 0.0
        %v668 = vmax.f32 %v597, 0.0
        %v669 = vmax.f32 %v599, 0.0
        %v670 = vmax.f32 %v650, 0.0
        %v671 = vmax.f32 %v652, 0.0
        %v672 = vmax.f32 %v603, 0.0
        %v673 = vmax.f32 %v605, 0.0
        %v674 = vmax.f32 %v656, 0.0
        %v675 = vmax.f32 %v658, 0.0
        %v676 = vmax.f32 %v607, 0.0
        %v677 = vmax.f32 %v609, 0.0
        %v678 = vmax.f32 %v660, 0.0
        %v679 = vmax.f32 %v662, 0.0
        %680 = vrot.lane.b32.xlu0 %v664, 17
        %v681 = vpop.permute.xlu0 %680
        %682 = vrot.lane.b32.xlu0 %v668, 17
        %v683 = vpop.permute.xlu0 %682
        %684 = vrot.lane.b32.xlu0 %v672, 17
        %v685 = vpop.permute.xlu0 %684
        %686 = vrot.lane.b32.xlu0 %v676, 17
        %v687 = vpop.permute.xlu0 %686
        %688 = vrot.lane.b32.xlu0 %v665, 17
        %v689 = vpop.permute.xlu0 %688
        %690 = vrot.lane.b32.xlu0 %v669, 17
        %v691 = vpop.permute.xlu0 %690
        %692 = vrot.lane.b32.xlu0 %v673, 17
        %v693 = vpop.permute.xlu0 %692
        %694 = vrot.lane.b32.xlu0 %v677, 17
        %v695 = vpop.permute.xlu0 %694
        %696 = vrot.lane.b32.xlu0 %v666, 17
        %v697 = vpop.permute.xlu0 %696
        %698 = vrot.lane.b32.xlu0 %v670, 17
        %v699 = vpop.permute.xlu0 %698
        %700 = vrot.lane.b32.xlu0 %v674, 17
        %v701 = vpop.permute.xlu0 %700
        %702 = vrot.lane.b32.xlu0 %v678, 17
        %v703 = vpop.permute.xlu0 %702
        %704 = vrot.lane.b32.xlu0 %v667, 17
        %v705 = vpop.permute.xlu0 %704
        %706 = vrot.lane.b32.xlu0 %v671, 17
        %v707 = vpop.permute.xlu0 %706
        %708 = vrot.lane.b32.xlu0 %v675, 17
        %v709 = vpop.permute.xlu0 %708
        %710 = vrot.lane.b32.xlu0 %v679, 17
        %v711 = vpop.permute.xlu0 %710
        %v712 = vlaneseq
        %v713 = vand.u32 %v712, 127
        %vm714 = vcmp.lt.s32.totalorder %v713, 17
        %v715 = vsel %vm714, %v697, %v705
        %v716 = vsel %vm714, %v699, %v707
        %v717 = vsel %vm714, %v701, %v709
        %v718 = vsel %vm714, %v703, %v711
        %v719 = vsel %vm714, %v689, %v697
        %v720 = vsel %vm714, %v691, %v699
        %v721 = vsel %vm714, %v693, %v701
        %v722 = vsel %vm714, %v695, %v703
        %v723 = vsel %vm714, %v681, %v689
        %v724 = vsel %vm714, %v683, %v691
        %v725 = vsel %vm714, %v685, %v693
        %v726 = vsel %vm714, %v687, %v695
        %v727 = vsel %vm714, %v705, %v681
        %v728 = vsel %vm714, %v707, %v683
        %v729 = vsel %vm714, %v709, %v685
        %v730 = vsel %vm714, %v711, %v687
        %v731 = vld [vmem:[%s4] sm:$0xff]
        %v732 = vld [vmem:[%s4 + $0x8] sm:$0xff]
        %v733 = vld [vmem:[%s4 + $0x10] sm:$0xff]
        %v734 = vld [vmem:[%s4 + $0x18] sm:$0xff]
        %v735 = vld [vmem:[%s4 + $0x20] sm:$0xff]
        %v736 = vld [vmem:[%s4 + $0x28] sm:$0xff]
        %v737 = vld [vmem:[%s4 + $0x30] sm:$0xff]
        %v738 = vld [vmem:[%s4 + $0x38] sm:$0xff]
        %v739 = vld [vmem:[%s4 + $0x40] sm:$0xff]
        %v740 = vld [vmem:[%s4 + $0x48] sm:$0xff]
        %v741 = vld [vmem:[%s4 + $0x50] sm:$0xff]
        %v742 = vld [vmem:[%s4 + $0x58] sm:$0xff]
        %v743 = vld [vmem:[%s4 + $0x60] sm:$0xff]
        %v744 = vld [vmem:[%s4 + $0x68] sm:$0xff]
        %v745 = vld [vmem:[%s4 + $0x70] sm:$0xff]
        %v746 = vld [vmem:[%s4 + $0x78] sm:$0xff]
        %v747 = vmul.f32 %v731, %v727
        %v748 = vmul.f32 %v732, %v723
        %v749 = vmul.f32 %v733, %v719
        %v750 = vmul.f32 %v734, %v715
        %v751 = vmul.f32 %v735, %v728
        %v752 = vmul.f32 %v736, %v724
        %v753 = vmul.f32 %v737, %v720
        %v754 = vmul.f32 %v738, %v716
        %v755 = vmul.f32 %v739, %v729
        %v756 = vmul.f32 %v740, %v725
        %v757 = vmul.f32 %v741, %v721
        %v758 = vmul.f32 %v742, %v717
        %v759 = vmul.f32 %v743, %v730
        %v760 = vmul.f32 %v744, %v726
        %v761 = vmul.f32 %v745, %v722
        %v762 = vmul.f32 %v746, %v718
        %v763 = vadd.f32 %v747, 0.0
        %v764 = vadd.f32 %v748, 0.0
        %v765 = vadd.f32 %v749, 0.0
        %v766 = vadd.f32 %v750, 0.0
        %v767 = vadd.f32 %v751, 0.0
        %v768 = vadd.f32 %v752, 0.0
        %v769 = vadd.f32 %v753, 0.0
        %v770 = vadd.f32 %v754, 0.0
        %v771 = vadd.f32 %v755, 0.0
        %v772 = vadd.f32 %v756, 0.0
        %v773 = vadd.f32 %v757, 0.0
        %v774 = vadd.f32 %v758, 0.0
        %v775 = vadd.f32 %v759, 0.0
        %v776 = vadd.f32 %v760, 0.0
        %v777 = vadd.f32 %v761, 0.0
        %v778 = vadd.f32 %v762, 0.0
        %779 = vrot.lane.b32.xlu0 %v664, 16
        %v780 = vpop.permute.xlu0 %779
        %781 = vrot.lane.b32.xlu0 %v668, 16
        %v782 = vpop.permute.xlu0 %781
        %783 = vrot.lane.b32.xlu0 %v672, 16
        %v784 = vpop.permute.xlu0 %783
        %785 = vrot.lane.b32.xlu0 %v676, 16
        %v786 = vpop.permute.xlu0 %785
        %787 = vrot.lane.b32.xlu0 %v665, 16
        %v788 = vpop.permute.xlu0 %787
        %789 = vrot.lane.b32.xlu0 %v669, 16
        %v790 = vpop.permute.xlu0 %789
        %791 = vrot.lane.b32.xlu0 %v673, 16
        %v792 = vpop.permute.xlu0 %791
        %793 = vrot.lane.b32.xlu0 %v677, 16
        %v794 = vpop.permute.xlu0 %793
        %795 = vrot.lane.b32.xlu0 %v666, 16
        %v796 = vpop.permute.xlu0 %795
        %797 = vrot.lane.b32.xlu0 %v670, 16
        %v798 = vpop.permute.xlu0 %797
        %799 = vrot.lane.b32.xlu0 %v674, 16
        %v800 = vpop.permute.xlu0 %799
        %801 = vrot.lane.b32.xlu0 %v678, 16
        %v802 = vpop.permute.xlu0 %801
        %803 = vrot.lane.b32.xlu0 %v667, 16
        %v804 = vpop.permute.xlu0 %803
        %805 = vrot.lane.b32.xlu0 %v671, 16
        %v806 = vpop.permute.xlu0 %805
        %807 = vrot.lane.b32.xlu0 %v675, 16
        %v808 = vpop.permute.xlu0 %807
        %809 = vrot.lane.b32.xlu0 %v679, 16
        %v810 = vpop.permute.xlu0 %809
        %vm811 = vcmp.lt.s32.totalorder %v713, 16
        %v812 = vsel %vm811, %v796, %v804
        %v813 = vsel %vm811, %v798, %v806
        %v814 = vsel %vm811, %v800, %v808
        %v815 = vsel %vm811, %v802, %v810
        %v816 = vsel %vm811, %v788, %v796
        %v817 = vsel %vm811, %v790, %v798
        %v818 = vsel %vm811, %v792, %v800
        %v819 = vsel %vm811, %v794, %v802
        %v820 = vsel %vm811, %v780, %v788
        %v821 = vsel %vm811, %v782, %v790
        %v822 = vsel %vm811, %v784, %v792
        %v823 = vsel %vm811, %v786, %v794
        %v824 = vsel %vm811, %v804, %v780
        %v825 = vsel %vm811, %v806, %v782
        %v826 = vsel %vm811, %v808, %v784
        %v827 = vsel %vm811, %v810, %v786
        %s828 = scalar_lea.vmem %s4, 128
        %v829 = vld [vmem:[%s828] sm:$0xff]
        %v830 = vld [vmem:[%s828 + $0x8] sm:$0xff]
        %v831 = vld [vmem:[%s828 + $0x10] sm:$0xff]
        %v832 = vld [vmem:[%s828 + $0x18] sm:$0xff]
        %v833 = vld [vmem:[%s828 + $0x20] sm:$0xff]
        %v834 = vld [vmem:[%s828 + $0x28] sm:$0xff]
        %v835 = vld [vmem:[%s828 + $0x30] sm:$0xff]
        %v836 = vld [vmem:[%s828 + $0x38] sm:$0xff]
        %v837 = vld [vmem:[%s828 + $0x40] sm:$0xff]
        %v838 = vld [vmem:[%s828 + $0x48] sm:$0xff]
        %v839 = vld [vmem:[%s828 + $0x50] sm:$0xff]
        %v840 = vld [vmem:[%s828 + $0x58] sm:$0xff]
        %v841 = vld [vmem:[%s828 + $0x60] sm:$0xff]
        %v842 = vld [vmem:[%s828 + $0x68] sm:$0xff]
        %v843 = vld [vmem:[%s828 + $0x70] sm:$0xff]
        %v844 = vld [vmem:[%s828 + $0x78] sm:$0xff]
        %v845 = vmul.f32 %v829, %v824
        %v846 = vmul.f32 %v830, %v820
        %v847 = vmul.f32 %v831, %v816
        %v848 = vmul.f32 %v832, %v812
        %v849 = vmul.f32 %v833, %v825
        %v850 = vmul.f32 %v834, %v821
        %v851 = vmul.f32 %v835, %v817
        %v852 = vmul.f32 %v836, %v813
        %v853 = vmul.f32 %v837, %v826
        %v854 = vmul.f32 %v838, %v822
        %v855 = vmul.f32 %v839, %v818
        %v856 = vmul.f32 %v840, %v814
        %v857 = vmul.f32 %v841, %v827
        %v858 = vmul.f32 %v842, %v823
        %v859 = vmul.f32 %v843, %v819
        %v860 = vmul.f32 %v844, %v815
        %v861 = vadd.f32 %v763, %v845
        %v862 = vadd.f32 %v764, %v846
        %v863 = vadd.f32 %v765, %v847
        %v864 = vadd.f32 %v766, %v848
        %v865 = vadd.f32 %v767, %v849
        %v866 = vadd.f32 %v768, %v850
        %v867 = vadd.f32 %v769, %v851
        %v868 = vadd.f32 %v770, %v852
        %v869 = vadd.f32 %v771, %v853
        %v870 = vadd.f32 %v772, %v854
        %v871 = vadd.f32 %v773, %v855
        %v872 = vadd.f32 %v774, %v856
        %v873 = vadd.f32 %v775, %v857
        %v874 = vadd.f32 %v776, %v858
        %v875 = vadd.f32 %v777, %v859
        %v876 = vadd.f32 %v778, %v860
        %877 = vrot.lane.b32.xlu0 %v664, 15
        %v878 = vpop.permute.xlu0 %877
        %879 = vrot.lane.b32.xlu0 %v668, 15
        %v880 = vpop.permute.xlu0 %879
        %881 = vrot.lane.b32.xlu0 %v672, 15
        %v882 = vpop.permute.xlu0 %881
        %883 = vrot.lane.b32.xlu0 %v676, 15
        %v884 = vpop.permute.xlu0 %883
        %885 = vrot.lane.b32.xlu0 %v665, 15
        %v886 = vpop.permute.xlu0 %885
        %887 = vrot.lane.b32.xlu0 %v669, 15
        %v888 = vpop.permute.xlu0 %887
        %889 = vrot.lane.b32.xlu0 %v673, 15
        %v890 = vpop.permute.xlu0 %889
        %891 = vrot.lane.b32.xlu0 %v677, 15
        %v892 = vpop.permute.xlu0 %891
        %893 = vrot.lane.b32.xlu0 %v666, 15
        %v894 = vpop.permute.xlu0 %893
        %895 = vrot.lane.b32.xlu0 %v670, 15
        %v896 = vpop.permute.xlu0 %895
        %897 = vrot.lane.b32.xlu0 %v674, 15
        %v898 = vpop.permute.xlu0 %897
        %899 = vrot.lane.b32.xlu0 %v678, 15
        %v900 = vpop.permute.xlu0 %899
        %901 = vrot.lane.b32.xlu0 %v667, 15
        %v902 = vpop.permute.xlu0 %901
        %903 = vrot.lane.b32.xlu0 %v671, 15
        %v904 = vpop.permute.xlu0 %903
        %905 = vrot.lane.b32.xlu0 %v675, 15
        %v906 = vpop.permute.xlu0 %905
        %907 = vrot.lane.b32.xlu0 %v679, 15
        %v908 = vpop.permute.xlu0 %907
        %vm909 = vcmp.lt.s32.totalorder %v713, 15
        %v910 = vsel %vm909, %v894, %v902
        %v911 = vsel %vm909, %v896, %v904
        %v912 = vsel %vm909, %v898, %v906
        %v913 = vsel %vm909, %v900, %v908
        %v914 = vsel %vm909, %v886, %v894
        %v915 = vsel %vm909, %v888, %v896
        %v916 = vsel %vm909, %v890, %v898
        %v917 = vsel %vm909, %v892, %v900
        %v918 = vsel %vm909, %v878, %v886
        %v919 = vsel %vm909, %v880, %v888
        %v920 = vsel %vm909, %v882, %v890
        %v921 = vsel %vm909, %v884, %v892
        %v922 = vsel %vm909, %v902, %v878
        %v923 = vsel %vm909, %v904, %v880
        %v924 = vsel %vm909, %v906, %v882
        %v925 = vsel %vm909, %v908, %v884
        %s926 = scalar_lea.vmem %s4, 256
        %v927 = vld [vmem:[%s926] sm:$0xff]
        %v928 = vld [vmem:[%s926 + $0x8] sm:$0xff]
        %v929 = vld [vmem:[%s926 + $0x10] sm:$0xff]
        %v930 = vld [vmem:[%s926 + $0x18] sm:$0xff]
        %v931 = vld [vmem:[%s926 + $0x20] sm:$0xff]
        %v932 = vld [vmem:[%s926 + $0x28] sm:$0xff]
        %v933 = vld [vmem:[%s926 + $0x30] sm:$0xff]
        %v934 = vld [vmem:[%s926 + $0x38] sm:$0xff]
        %v935 = vld [vmem:[%s926 + $0x40] sm:$0xff]
        %v936 = vld [vmem:[%s926 + $0x48] sm:$0xff]
        %v937 = vld [vmem:[%s926 + $0x50] sm:$0xff]
        %v938 = vld [vmem:[%s926 + $0x58] sm:$0xff]
        %v939 = vld [vmem:[%s926 + $0x60] sm:$0xff]
        %v940 = vld [vmem:[%s926 + $0x68] sm:$0xff]
        %v941 = vld [vmem:[%s926 + $0x70] sm:$0xff]
        %v942 = vld [vmem:[%s926 + $0x78] sm:$0xff]
        %v943 = vmul.f32 %v927, %v922
        %v944 = vmul.f32 %v928, %v918
        %v945 = vmul.f32 %v929, %v914
        %v946 = vmul.f32 %v930, %v910
        %v947 = vmul.f32 %v931, %v923
        %v948 = vmul.f32 %v932, %v919
        %v949 = vmul.f32 %v933, %v915
        %v950 = vmul.f32 %v934, %v911
        %v951 = vmul.f32 %v935, %v924
        %v952 = vmul.f32 %v936, %v920
        %v953 = vmul.f32 %v937, %v916
        %v954 = vmul.f32 %v938, %v912
        %v955 = vmul.f32 %v939, %v925
        %v956 = vmul.f32 %v940, %v921
        %v957 = vmul.f32 %v941, %v917
        %v958 = vmul.f32 %v942, %v913
        %v959 = vadd.f32 %v861, %v943
        %v960 = vadd.f32 %v862, %v944
        %v961 = vadd.f32 %v863, %v945
        %v962 = vadd.f32 %v864, %v946
        %v963 = vadd.f32 %v865, %v947
        %v964 = vadd.f32 %v866, %v948
        %v965 = vadd.f32 %v867, %v949
        %v966 = vadd.f32 %v868, %v950
        %v967 = vadd.f32 %v869, %v951
        %v968 = vadd.f32 %v870, %v952
        %v969 = vadd.f32 %v871, %v953
        %v970 = vadd.f32 %v872, %v954
        %v971 = vadd.f32 %v873, %v955
        %v972 = vadd.f32 %v874, %v956
        %v973 = vadd.f32 %v875, %v957
        %v974 = vadd.f32 %v876, %v958
        %975 = vrot.lane.b32.xlu0 %v664, 1
        %v976 = vpop.permute.xlu0 %975
        %977 = vrot.lane.b32.xlu0 %v668, 1
        %v978 = vpop.permute.xlu0 %977
        %979 = vrot.lane.b32.xlu0 %v672, 1
        %v980 = vpop.permute.xlu0 %979
        %981 = vrot.lane.b32.xlu0 %v676, 1
        %v982 = vpop.permute.xlu0 %981
        %983 = vrot.lane.b32.xlu0 %v665, 1
        %v984 = vpop.permute.xlu0 %983
        %985 = vrot.lane.b32.xlu0 %v669, 1
        %v986 = vpop.permute.xlu0 %985
        %987 = vrot.lane.b32.xlu0 %v673, 1
        %v988 = vpop.permute.xlu0 %987
        %989 = vrot.lane.b32.xlu0 %v677, 1
        %v990 = vpop.permute.xlu0 %989
        %991 = vrot.lane.b32.xlu0 %v666, 1
        %v992 = vpop.permute.xlu0 %991
        %993 = vrot.lane.b32.xlu0 %v670, 1
        %v994 = vpop.permute.xlu0 %993
        %995 = vrot.lane.b32.xlu0 %v674, 1
        %v996 = vpop.permute.xlu0 %995
        %997 = vrot.lane.b32.xlu0 %v678, 1
        %v998 = vpop.permute.xlu0 %997
        %999 = vrot.lane.b32.xlu0 %v667, 1
        %v1000 = vpop.permute.xlu0 %999
        %1001 = vrot.lane.b32.xlu0 %v671, 1
        %v1002 = vpop.permute.xlu0 %1001
        %1003 = vrot.lane.b32.xlu0 %v675, 1
        %v1004 = vpop.permute.xlu0 %1003
        %1005 = vrot.lane.b32.xlu0 %v679, 1
        %v1006 = vpop.permute.xlu0 %1005
        %vm1007 = vcmp.lt.s32.totalorder %v713, 1
        %v1008 = vsel %vm1007, %v992, %v1000
        %v1009 = vsel %vm1007, %v994, %v1002
        %v1010 = vsel %vm1007, %v996, %v1004
        %v1011 = vsel %vm1007, %v998, %v1006
        %v1012 = vsel %vm1007, %v984, %v992
        %v1013 = vsel %vm1007, %v986, %v994
        %v1014 = vsel %vm1007, %v988, %v996
        %v1015 = vsel %vm1007, %v990, %v998
        %v1016 = vsel %vm1007, %v976, %v984
        %v1017 = vsel %vm1007, %v978, %v986
        %v1018 = vsel %vm1007, %v980, %v988
        %v1019 = vsel %vm1007, %v982, %v990
        %v1020 = vsel %vm1007, %v1000, %v976
        %v1021 = vsel %vm1007, %v1002, %v978
        %v1022 = vsel %vm1007, %v1004, %v980
        %v1023 = vsel %vm1007, %v1006, %v982
        %s1024 = scalar_lea.vmem %s4, 384
        %v1025 = vld [vmem:[%s1024] sm:$0xff]
        %v1026 = vld [vmem:[%s1024 + $0x8] sm:$0xff]
        %v1027 = vld [vmem:[%s1024 + $0x10] sm:$0xff]
        %v1028 = vld [vmem:[%s1024 + $0x18] sm:$0xff]
        %v1029 = vld [vmem:[%s1024 + $0x20] sm:$0xff]
        %v1030 = vld [vmem:[%s1024 + $0x28] sm:$0xff]
        %v1031 = vld [vmem:[%s1024 + $0x30] sm:$0xff]
        %v1032 = vld [vmem:[%s1024 + $0x38] sm:$0xff]
        %v1033 = vld [vmem:[%s1024 + $0x40] sm:$0xff]
        %v1034 = vld [vmem:[%s1024 + $0x48] sm:$0xff]
        %v1035 = vld [vmem:[%s1024 + $0x50] sm:$0xff]
        %v1036 = vld [vmem:[%s1024 + $0x58] sm:$0xff]
        %v1037 = vld [vmem:[%s1024 + $0x60] sm:$0xff]
        %v1038 = vld [vmem:[%s1024 + $0x68] sm:$0xff]
        %v1039 = vld [vmem:[%s1024 + $0x70] sm:$0xff]
        %v1040 = vld [vmem:[%s1024 + $0x78] sm:$0xff]
        %v1041 = vmul.f32 %v1025, %v1020
        %v1042 = vmul.f32 %v1026, %v1016
        %v1043 = vmul.f32 %v1027, %v1012
        %v1044 = vmul.f32 %v1028, %v1008
        %v1045 = vmul.f32 %v1029, %v1021
        %v1046 = vmul.f32 %v1030, %v1017
        %v1047 = vmul.f32 %v1031, %v1013
        %v1048 = vmul.f32 %v1032, %v1009
        %v1049 = vmul.f32 %v1033, %v1022
        %v1050 = vmul.f32 %v1034, %v1018
        %v1051 = vmul.f32 %v1035, %v1014
        %v1052 = vmul.f32 %v1036, %v1010
        %v1053 = vmul.f32 %v1037, %v1023
        %v1054 = vmul.f32 %v1038, %v1019
        %v1055 = vmul.f32 %v1039, %v1015
        %v1056 = vmul.f32 %v1040, %v1011
        %v1057 = vadd.f32 %v959, %v1041
        %v1058 = vadd.f32 %v960, %v1042
        %v1059 = vadd.f32 %v961, %v1043
        %v1060 = vadd.f32 %v962, %v1044
        %v1061 = vadd.f32 %v963, %v1045
        %v1062 = vadd.f32 %v964, %v1046
        %v1063 = vadd.f32 %v965, %v1047
        %v1064 = vadd.f32 %v966, %v1048
        %v1065 = vadd.f32 %v967, %v1049
        %v1066 = vadd.f32 %v968, %v1050
        %v1067 = vadd.f32 %v969, %v1051
        %v1068 = vadd.f32 %v970, %v1052
        %v1069 = vadd.f32 %v971, %v1053
        %v1070 = vadd.f32 %v972, %v1054
        %v1071 = vadd.f32 %v973, %v1055
        %v1072 = vadd.f32 %v974, %v1056
        %s1073 = scalar_lea.vmem %s4, 512
        %v1074 = vld [vmem:[%s1073] sm:$0xff]
        %v1075 = vld [vmem:[%s1073 + $0x8] sm:$0xff]
        %v1076 = vld [vmem:[%s1073 + $0x10] sm:$0xff]
        %v1077 = vld [vmem:[%s1073 + $0x18] sm:$0xff]
        %v1078 = vld [vmem:[%s1073 + $0x20] sm:$0xff]
        %v1079 = vld [vmem:[%s1073 + $0x28] sm:$0xff]
        %v1080 = vld [vmem:[%s1073 + $0x30] sm:$0xff]
        %v1081 = vld [vmem:[%s1073 + $0x38] sm:$0xff]
        %v1082 = vld [vmem:[%s1073 + $0x40] sm:$0xff]
        %v1083 = vld [vmem:[%s1073 + $0x48] sm:$0xff]
        %v1084 = vld [vmem:[%s1073 + $0x50] sm:$0xff]
        %v1085 = vld [vmem:[%s1073 + $0x58] sm:$0xff]
        %v1086 = vld [vmem:[%s1073 + $0x60] sm:$0xff]
        %v1087 = vld [vmem:[%s1073 + $0x68] sm:$0xff]
        %v1088 = vld [vmem:[%s1073 + $0x70] sm:$0xff]
        %v1089 = vld [vmem:[%s1073 + $0x78] sm:$0xff]
        %v1090 = vmul.f32 %v1074, %v664
        %v1091 = vmul.f32 %v1075, %v665
        %v1092 = vmul.f32 %v1076, %v666
        %v1093 = vmul.f32 %v1077, %v667
        %v1094 = vmul.f32 %v1078, %v668
        %v1095 = vmul.f32 %v1079, %v669
        %v1096 = vmul.f32 %v1080, %v670
        %v1097 = vmul.f32 %v1081, %v671
        %v1098 = vmul.f32 %v1082, %v672
        %v1099 = vmul.f32 %v1083, %v673
        %v1100 = vmul.f32 %v1084, %v674
        %v1101 = vmul.f32 %v1085, %v675
        %v1102 = vmul.f32 %v1086, %v676
        %v1103 = vmul.f32 %v1087, %v677
        %v1104 = vmul.f32 %v1088, %v678
        %v1105 = vmul.f32 %v1089, %v679
        %v1106 = vadd.f32 %v1057, %v1090
        %v1107 = vadd.f32 %v1058, %v1091
        %v1108 = vadd.f32 %v1059, %v1092
        %v1109 = vadd.f32 %v1060, %v1093
        %v1110 = vadd.f32 %v1061, %v1094
        %v1111 = vadd.f32 %v1062, %v1095
        %v1112 = vadd.f32 %v1063, %v1096
        %v1113 = vadd.f32 %v1064, %v1097
        %v1114 = vadd.f32 %v1065, %v1098
        %v1115 = vadd.f32 %v1066, %v1099
        %v1116 = vadd.f32 %v1067, %v1100
        %v1117 = vadd.f32 %v1068, %v1101
        %v1118 = vadd.f32 %v1069, %v1102
        %v1119 = vadd.f32 %v1070, %v1103
        %v1120 = vadd.f32 %v1071, %v1104
        %v1121 = vadd.f32 %v1072, %v1105
        %1122 = vrot.lane.b32.xlu0 %v664, 127
        %v1123 = vpop.permute.xlu0 %1122
        %1124 = vrot.lane.b32.xlu0 %v668, 127
        %v1125 = vpop.permute.xlu0 %1124
        %1126 = vrot.lane.b32.xlu0 %v672, 127
        %v1127 = vpop.permute.xlu0 %1126
        %1128 = vrot.lane.b32.xlu0 %v676, 127
        %v1129 = vpop.permute.xlu0 %1128
        %1130 = vrot.lane.b32.xlu0 %v665, 127
        %v1131 = vpop.permute.xlu0 %1130
        %1132 = vrot.lane.b32.xlu0 %v669, 127
        %v1133 = vpop.permute.xlu0 %1132
        %1134 = vrot.lane.b32.xlu0 %v673, 127
        %v1135 = vpop.permute.xlu0 %1134
        %1136 = vrot.lane.b32.xlu0 %v677, 127
        %v1137 = vpop.permute.xlu0 %1136
        %1138 = vrot.lane.b32.xlu0 %v666, 127
        %v1139 = vpop.permute.xlu0 %1138
        %1140 = vrot.lane.b32.xlu0 %v670, 127
        %v1141 = vpop.permute.xlu0 %1140
        %1142 = vrot.lane.b32.xlu0 %v674, 127
        %v1143 = vpop.permute.xlu0 %1142
        %1144 = vrot.lane.b32.xlu0 %v678, 127
        %v1145 = vpop.permute.xlu0 %1144
        %1146 = vrot.lane.b32.xlu0 %v667, 127
        %v1147 = vpop.permute.xlu0 %1146
        %1148 = vrot.lane.b32.xlu0 %v671, 127
        %v1149 = vpop.permute.xlu0 %1148
        %1150 = vrot.lane.b32.xlu0 %v675, 127
        %v1151 = vpop.permute.xlu0 %1150
        %1152 = vrot.lane.b32.xlu0 %v679, 127
        %v1153 = vpop.permute.xlu0 %1152
        %vm1154 = vcmp.lt.s32.totalorder %v713, 127
        %v1155 = vsel %vm1154, %v1139, %v1147
        %v1156 = vsel %vm1154, %v1141, %v1149
        %v1157 = vsel %vm1154, %v1143, %v1151
        %v1158 = vsel %vm1154, %v1145, %v1153
        %v1159 = vsel %vm1154, %v1131, %v1139
        %v1160 = vsel %vm1154, %v1133, %v1141
        %v1161 = vsel %vm1154, %v1135, %v1143
        %v1162 = vsel %vm1154, %v1137, %v1145
        %v1163 = vsel %vm1154, %v1123, %v1131
        %v1164 = vsel %vm1154, %v1125, %v1133
        %v1165 = vsel %vm1154, %v1127, %v1135
        %v1166 = vsel %vm1154, %v1129, %v1137
        %v1167 = vsel %vm1154, %v1147, %v1123
        %v1168 = vsel %vm1154, %v1149, %v1125
        %v1169 = vsel %vm1154, %v1151, %v1127
        %v1170 = vsel %vm1154, %v1153, %v1129
        %s1171 = scalar_lea.vmem %s4, 640
        %v1172 = vld [vmem:[%s1171] sm:$0xff]
        %v1173 = vld [vmem:[%s1171 + $0x8] sm:$0xff]
        %v1174 = vld [vmem:[%s1171 + $0x10] sm:$0xff]
        %v1175 = vld [vmem:[%s1171 + $0x18] sm:$0xff]
        %v1176 = vld [vmem:[%s1171 + $0x20] sm:$0xff]
        %v1177 = vld [vmem:[%s1171 + $0x28] sm:$0xff]
        %v1178 = vld [vmem:[%s1171 + $0x30] sm:$0xff]
        %v1179 = vld [vmem:[%s1171 + $0x38] sm:$0xff]
        %v1180 = vld [vmem:[%s1171 + $0x40] sm:$0xff]
        %v1181 = vld [vmem:[%s1171 + $0x48] sm:$0xff]
        %v1182 = vld [vmem:[%s1171 + $0x50] sm:$0xff]
        %v1183 = vld [vmem:[%s1171 + $0x58] sm:$0xff]
        %v1184 = vld [vmem:[%s1171 + $0x60] sm:$0xff]
        %v1185 = vld [vmem:[%s1171 + $0x68] sm:$0xff]
        %v1186 = vld [vmem:[%s1171 + $0x70] sm:$0xff]
        %v1187 = vld [vmem:[%s1171 + $0x78] sm:$0xff]
        %v1188 = vmul.f32 %v1172, %v1163
        %v1189 = vmul.f32 %v1173, %v1159
        %v1190 = vmul.f32 %v1174, %v1155
        %v1191 = vmul.f32 %v1175, %v1167
        %v1192 = vmul.f32 %v1176, %v1164
        %v1193 = vmul.f32 %v1177, %v1160
        %v1194 = vmul.f32 %v1178, %v1156
        %v1195 = vmul.f32 %v1179, %v1168
        %v1196 = vmul.f32 %v1180, %v1165
        %v1197 = vmul.f32 %v1181, %v1161
        %v1198 = vmul.f32 %v1182, %v1157
        %v1199 = vmul.f32 %v1183, %v1169
        %v1200 = vmul.f32 %v1184, %v1166
        %v1201 = vmul.f32 %v1185, %v1162
        %v1202 = vmul.f32 %v1186, %v1158
        %v1203 = vmul.f32 %v1187, %v1170
        %v1204 = vadd.f32 %v1106, %v1188
        %v1205 = vadd.f32 %v1107, %v1189
        %v1206 = vadd.f32 %v1108, %v1190
        %v1207 = vadd.f32 %v1109, %v1191
        %v1208 = vadd.f32 %v1110, %v1192
        %v1209 = vadd.f32 %v1111, %v1193
        %v1210 = vadd.f32 %v1112, %v1194
        %v1211 = vadd.f32 %v1113, %v1195
        %v1212 = vadd.f32 %v1114, %v1196
        %v1213 = vadd.f32 %v1115, %v1197
        %v1214 = vadd.f32 %v1116, %v1198
        %v1215 = vadd.f32 %v1117, %v1199
        %v1216 = vadd.f32 %v1118, %v1200
        %v1217 = vadd.f32 %v1119, %v1201
        %v1218 = vadd.f32 %v1120, %v1202
        %v1219 = vadd.f32 %v1121, %v1203
        %1220 = vrot.lane.b32.xlu0 %v664, 113
        %v1221 = vpop.permute.xlu0 %1220
        %1222 = vrot.lane.b32.xlu0 %v668, 113
        %v1223 = vpop.permute.xlu0 %1222
        %1224 = vrot.lane.b32.xlu0 %v672, 113
        %v1225 = vpop.permute.xlu0 %1224
        %1226 = vrot.lane.b32.xlu0 %v676, 113
        %v1227 = vpop.permute.xlu0 %1226
        %1228 = vrot.lane.b32.xlu0 %v665, 113
        %v1229 = vpop.permute.xlu0 %1228
        %1230 = vrot.lane.b32.xlu0 %v669, 113
        %v1231 = vpop.permute.xlu0 %1230
        %1232 = vrot.lane.b32.xlu0 %v673, 113
        %v1233 = vpop.permute.xlu0 %1232
        %1234 = vrot.lane.b32.xlu0 %v677, 113
        %v1235 = vpop.permute.xlu0 %1234
        %1236 = vrot.lane.b32.xlu0 %v666, 113
        %v1237 = vpop.permute.xlu0 %1236
        %1238 = vrot.lane.b32.xlu0 %v670, 113
        %v1239 = vpop.permute.xlu0 %1238
        %1240 = vrot.lane.b32.xlu0 %v674, 113
        %v1241 = vpop.permute.xlu0 %1240
        %1242 = vrot.lane.b32.xlu0 %v678, 113
        %v1243 = vpop.permute.xlu0 %1242
        %1244 = vrot.lane.b32.xlu0 %v667, 113
        %v1245 = vpop.permute.xlu0 %1244
        %1246 = vrot.lane.b32.xlu0 %v671, 113
        %v1247 = vpop.permute.xlu0 %1246
        %1248 = vrot.lane.b32.xlu0 %v675, 113
        %v1249 = vpop.permute.xlu0 %1248
        %1250 = vrot.lane.b32.xlu0 %v679, 113
        %v1251 = vpop.permute.xlu0 %1250
        %vm1252 = vcmp.lt.s32.totalorder %v713, 113
        %v1253 = vsel %vm1252, %v1237, %v1245
        %v1254 = vsel %vm1252, %v1239, %v1247
        %v1255 = vsel %vm1252, %v1241, %v1249
        %v1256 = vsel %vm1252, %v1243, %v1251
        %v1257 = vsel %vm1252, %v1229, %v1237
        %v1258 = vsel %vm1252, %v1231, %v1239
        %v1259 = vsel %vm1252, %v1233, %v1241
        %v1260 = vsel %vm1252, %v1235, %v1243
        %v1261 = vsel %vm1252, %v1221, %v1229
        %v1262 = vsel %vm1252, %v1223, %v1231
        %v1263 = vsel %vm1252, %v1225, %v1233
        %v1264 = vsel %vm1252, %v1227, %v1235
        %v1265 = vsel %vm1252, %v1245, %v1221
        %v1266 = vsel %vm1252, %v1247, %v1223
        %v1267 = vsel %vm1252, %v1249, %v1225
        %v1268 = vsel %vm1252, %v1251, %v1227
        %s1269 = scalar_lea.vmem %s4, 768
        %v1270 = vld [vmem:[%s1269] sm:$0xff]
        %v1271 = vld [vmem:[%s1269 + $0x8] sm:$0xff]
        %v1272 = vld [vmem:[%s1269 + $0x10] sm:$0xff]
        %v1273 = vld [vmem:[%s1269 + $0x18] sm:$0xff]
        %v1274 = vld [vmem:[%s1269 + $0x20] sm:$0xff]
        %v1275 = vld [vmem:[%s1269 + $0x28] sm:$0xff]
        %v1276 = vld [vmem:[%s1269 + $0x30] sm:$0xff]
        %v1277 = vld [vmem:[%s1269 + $0x38] sm:$0xff]
        %v1278 = vld [vmem:[%s1269 + $0x40] sm:$0xff]
        %v1279 = vld [vmem:[%s1269 + $0x48] sm:$0xff]
        %v1280 = vld [vmem:[%s1269 + $0x50] sm:$0xff]
        %v1281 = vld [vmem:[%s1269 + $0x58] sm:$0xff]
        %v1282 = vld [vmem:[%s1269 + $0x60] sm:$0xff]
        %v1283 = vld [vmem:[%s1269 + $0x68] sm:$0xff]
        %v1284 = vld [vmem:[%s1269 + $0x70] sm:$0xff]
        %v1285 = vld [vmem:[%s1269 + $0x78] sm:$0xff]
        %v1286 = vmul.f32 %v1270, %v1261
        %v1287 = vmul.f32 %v1271, %v1257
        %v1288 = vmul.f32 %v1272, %v1253
        %v1289 = vmul.f32 %v1273, %v1265
        %v1290 = vmul.f32 %v1274, %v1262
        %v1291 = vmul.f32 %v1275, %v1258
        %v1292 = vmul.f32 %v1276, %v1254
        %v1293 = vmul.f32 %v1277, %v1266
        %v1294 = vmul.f32 %v1278, %v1263
        %v1295 = vmul.f32 %v1279, %v1259
        %v1296 = vmul.f32 %v1280, %v1255
        %v1297 = vmul.f32 %v1281, %v1267
        %v1298 = vmul.f32 %v1282, %v1264
        %v1299 = vmul.f32 %v1283, %v1260
        %v1300 = vmul.f32 %v1284, %v1256
        %v1301 = vmul.f32 %v1285, %v1268
        %v1302 = vadd.f32 %v1204, %v1286
        %v1303 = vadd.f32 %v1205, %v1287
        %v1304 = vadd.f32 %v1206, %v1288
        %v1305 = vadd.f32 %v1207, %v1289
        %v1306 = vadd.f32 %v1208, %v1290
        %v1307 = vadd.f32 %v1209, %v1291
        %v1308 = vadd.f32 %v1210, %v1292
        %v1309 = vadd.f32 %v1211, %v1293
        %v1310 = vadd.f32 %v1212, %v1294
        %v1311 = vadd.f32 %v1213, %v1295
        %v1312 = vadd.f32 %v1214, %v1296
        %v1313 = vadd.f32 %v1215, %v1297
        %v1314 = vadd.f32 %v1216, %v1298
        %v1315 = vadd.f32 %v1217, %v1299
        %v1316 = vadd.f32 %v1218, %v1300
        %v1317 = vadd.f32 %v1219, %v1301
        %1318 = vrot.lane.b32.xlu0 %v664, 112
        %v1319 = vpop.permute.xlu0 %1318
        %1320 = vrot.lane.b32.xlu0 %v668, 112
        %v1321 = vpop.permute.xlu0 %1320
        %1322 = vrot.lane.b32.xlu0 %v672, 112
        %v1323 = vpop.permute.xlu0 %1322
        %1324 = vrot.lane.b32.xlu0 %v676, 112
        %v1325 = vpop.permute.xlu0 %1324
        %1326 = vrot.lane.b32.xlu0 %v665, 112
        %v1327 = vpop.permute.xlu0 %1326
        %1328 = vrot.lane.b32.xlu0 %v669, 112
        %v1329 = vpop.permute.xlu0 %1328
        %1330 = vrot.lane.b32.xlu0 %v673, 112
        %v1331 = vpop.permute.xlu0 %1330
        %1332 = vrot.lane.b32.xlu0 %v677, 112
        %v1333 = vpop.permute.xlu0 %1332
        %1334 = vrot.lane.b32.xlu0 %v666, 112
        %v1335 = vpop.permute.xlu0 %1334
        %1336 = vrot.lane.b32.xlu0 %v670, 112
        %v1337 = vpop.permute.xlu0 %1336
        %1338 = vrot.lane.b32.xlu0 %v674, 112
        %v1339 = vpop.permute.xlu0 %1338
        %1340 = vrot.lane.b32.xlu0 %v678, 112
        %v1341 = vpop.permute.xlu0 %1340
        %1342 = vrot.lane.b32.xlu0 %v667, 112
        %v1343 = vpop.permute.xlu0 %1342
        %1344 = vrot.lane.b32.xlu0 %v671, 112
        %v1345 = vpop.permute.xlu0 %1344
        %1346 = vrot.lane.b32.xlu0 %v675, 112
        %v1347 = vpop.permute.xlu0 %1346
        %1348 = vrot.lane.b32.xlu0 %v679, 112
        %v1349 = vpop.permute.xlu0 %1348
        %vm1350 = vcmp.lt.s32.totalorder %v713, 112
        %v1351 = vsel %vm1350, %v1335, %v1343
        %v1352 = vsel %vm1350, %v1337, %v1345
        %v1353 = vsel %vm1350, %v1339, %v1347
        %v1354 = vsel %vm1350, %v1341, %v1349
        %v1355 = vsel %vm1350, %v1327, %v1335
        %v1356 = vsel %vm1350, %v1329, %v1337
        %v1357 = vsel %vm1350, %v1331, %v1339
        %v1358 = vsel %vm1350, %v1333, %v1341
        %v1359 = vsel %vm1350, %v1319, %v1327
        %v1360 = vsel %vm1350, %v1321, %v1329
        %v1361 = vsel %vm1350, %v1323, %v1331
        %v1362 = vsel %vm1350, %v1325, %v1333
        %v1363 = vsel %vm1350, %v1343, %v1319
        %v1364 = vsel %vm1350, %v1345, %v1321
        %v1365 = vsel %vm1350, %v1347, %v1323
        %v1366 = vsel %vm1350, %v1349, %v1325
        %s1367 = scalar_lea.vmem %s4, 896
        %v1368 = vld [vmem:[%s1367] sm:$0xff]
        %v1369 = vld [vmem:[%s1367 + $0x8] sm:$0xff]
        %v1370 = vld [vmem:[%s1367 + $0x10] sm:$0xff]
        %v1371 = vld [vmem:[%s1367 + $0x18] sm:$0xff]
        %v1372 = vld [vmem:[%s1367 + $0x20] sm:$0xff]
        %v1373 = vld [vmem:[%s1367 + $0x28] sm:$0xff]
        %v1374 = vld [vmem:[%s1367 + $0x30] sm:$0xff]
        %v1375 = vld [vmem:[%s1367 + $0x38] sm:$0xff]
        %v1376 = vld [vmem:[%s1367 + $0x40] sm:$0xff]
        %v1377 = vld [vmem:[%s1367 + $0x48] sm:$0xff]
        %v1378 = vld [vmem:[%s1367 + $0x50] sm:$0xff]
        %v1379 = vld [vmem:[%s1367 + $0x58] sm:$0xff]
        %v1380 = vld [vmem:[%s1367 + $0x60] sm:$0xff]
        %v1381 = vld [vmem:[%s1367 + $0x68] sm:$0xff]
        %v1382 = vld [vmem:[%s1367 + $0x70] sm:$0xff]
        %v1383 = vld [vmem:[%s1367 + $0x78] sm:$0xff]
        %v1384 = vmul.f32 %v1368, %v1359
        %v1385 = vmul.f32 %v1369, %v1355
        %v1386 = vmul.f32 %v1370, %v1351
        %v1387 = vmul.f32 %v1371, %v1363
        %v1388 = vmul.f32 %v1372, %v1360
        %v1389 = vmul.f32 %v1373, %v1356
        %v1390 = vmul.f32 %v1374, %v1352
        %v1391 = vmul.f32 %v1375, %v1364
        %v1392 = vmul.f32 %v1376, %v1361
        %v1393 = vmul.f32 %v1377, %v1357
        %v1394 = vmul.f32 %v1378, %v1353
        %v1395 = vmul.f32 %v1379, %v1365
        %v1396 = vmul.f32 %v1380, %v1362
        %v1397 = vmul.f32 %v1381, %v1358
        %v1398 = vmul.f32 %v1382, %v1354
        %v1399 = vmul.f32 %v1383, %v1366
        %v1400 = vadd.f32 %v1302, %v1384
        %v1401 = vadd.f32 %v1303, %v1385
        %v1402 = vadd.f32 %v1304, %v1386
        %v1403 = vadd.f32 %v1305, %v1387
        %v1404 = vadd.f32 %v1306, %v1388
        %v1405 = vadd.f32 %v1307, %v1389
        %v1406 = vadd.f32 %v1308, %v1390
        %v1407 = vadd.f32 %v1309, %v1391
        %v1408 = vadd.f32 %v1310, %v1392
        %v1409 = vadd.f32 %v1311, %v1393
        %v1410 = vadd.f32 %v1312, %v1394
        %v1411 = vadd.f32 %v1313, %v1395
        %v1412 = vadd.f32 %v1314, %v1396
        %v1413 = vadd.f32 %v1315, %v1397
        %v1414 = vadd.f32 %v1316, %v1398
        %v1415 = vadd.f32 %v1317, %v1399
        %1416 = vrot.lane.b32.xlu0 %v664, 111
        %v1417 = vpop.permute.xlu0 %1416
        %1418 = vrot.lane.b32.xlu0 %v668, 111
        %v1419 = vpop.permute.xlu0 %1418
        %1420 = vrot.lane.b32.xlu0 %v672, 111
        %v1421 = vpop.permute.xlu0 %1420
        %1422 = vrot.lane.b32.xlu0 %v676, 111
        %v1423 = vpop.permute.xlu0 %1422
        %1424 = vrot.lane.b32.xlu0 %v665, 111
        %v1425 = vpop.permute.xlu0 %1424
        %1426 = vrot.lane.b32.xlu0 %v669, 111
        %v1427 = vpop.permute.xlu0 %1426
        %1428 = vrot.lane.b32.xlu0 %v673, 111
        %v1429 = vpop.permute.xlu0 %1428
        %1430 = vrot.lane.b32.xlu0 %v677, 111
        %v1431 = vpop.permute.xlu0 %1430
        %1432 = vrot.lane.b32.xlu0 %v666, 111
        %v1433 = vpop.permute.xlu0 %1432
        %1434 = vrot.lane.b32.xlu0 %v670, 111
        %v1435 = vpop.permute.xlu0 %1434
        %1436 = vrot.lane.b32.xlu0 %v674, 111
        %v1437 = vpop.permute.xlu0 %1436
        %1438 = vrot.lane.b32.xlu0 %v678, 111
        %v1439 = vpop.permute.xlu0 %1438
        %1440 = vrot.lane.b32.xlu0 %v667, 111
        %v1441 = vpop.permute.xlu0 %1440
        %1442 = vrot.lane.b32.xlu0 %v671, 111
        %v1443 = vpop.permute.xlu0 %1442
        %1444 = vrot.lane.b32.xlu0 %v675, 111
        %v1445 = vpop.permute.xlu0 %1444
        %1446 = vrot.lane.b32.xlu0 %v679, 111
        %v1447 = vpop.permute.xlu0 %1446
        %vm1448 = vcmp.lt.s32.totalorder %v713, 111
        %v1449 = vsel %vm1448, %v1433, %v1441
        %v1450 = vsel %vm1448, %v1435, %v1443
        %v1451 = vsel %vm1448, %v1437, %v1445
        %v1452 = vsel %vm1448, %v1439, %v1447
        %v1453 = vsel %vm1448, %v1425, %v1433
        %v1454 = vsel %vm1448, %v1427, %v1435
        %v1455 = vsel %vm1448, %v1429, %v1437
        %v1456 = vsel %vm1448, %v1431, %v1439
        %v1457 = vsel %vm1448, %v1417, %v1425
        %v1458 = vsel %vm1448, %v1419, %v1427
        %v1459 = vsel %vm1448, %v1421, %v1429
        %v1460 = vsel %vm1448, %v1423, %v1431
        %v1461 = vsel %vm1448, %v1441, %v1417
        %v1462 = vsel %vm1448, %v1443, %v1419
        %v1463 = vsel %vm1448, %v1445, %v1421
        %v1464 = vsel %vm1448, %v1447, %v1423
        %s1465 = scalar_lea.vmem %s4, 1024
        %v1466 = vld [vmem:[%s1465] sm:$0xff]
        %v1467 = vld [vmem:[%s1465 + $0x8] sm:$0xff]
        %v1468 = vld [vmem:[%s1465 + $0x10] sm:$0xff]
        %v1469 = vld [vmem:[%s1465 + $0x18] sm:$0xff]
        %v1470 = vld [vmem:[%s1465 + $0x20] sm:$0xff]
        %v1471 = vld [vmem:[%s1465 + $0x28] sm:$0xff]
        %v1472 = vld [vmem:[%s1465 + $0x30] sm:$0xff]
        %v1473 = vld [vmem:[%s1465 + $0x38] sm:$0xff]
        %v1474 = vld [vmem:[%s1465 + $0x40] sm:$0xff]
        %v1475 = vld [vmem:[%s1465 + $0x48] sm:$0xff]
        %v1476 = vld [vmem:[%s1465 + $0x50] sm:$0xff]
        %v1477 = vld [vmem:[%s1465 + $0x58] sm:$0xff]
        %v1478 = vld [vmem:[%s1465 + $0x60] sm:$0xff]
        %v1479 = vld [vmem:[%s1465 + $0x68] sm:$0xff]
        %v1480 = vld [vmem:[%s1465 + $0x70] sm:$0xff]
        %v1481 = vld [vmem:[%s1465 + $0x78] sm:$0xff]
        %v1482 = vmul.f32 %v1466, %v1457
        %v1483 = vmul.f32 %v1467, %v1453
        %v1484 = vmul.f32 %v1468, %v1449
        %v1485 = vmul.f32 %v1469, %v1461
        %v1486 = vmul.f32 %v1470, %v1458
        %v1487 = vmul.f32 %v1471, %v1454
        %v1488 = vmul.f32 %v1472, %v1450
        %v1489 = vmul.f32 %v1473, %v1462
        %v1490 = vmul.f32 %v1474, %v1459
        %v1491 = vmul.f32 %v1475, %v1455
        %v1492 = vmul.f32 %v1476, %v1451
        %v1493 = vmul.f32 %v1477, %v1463
        %v1494 = vmul.f32 %v1478, %v1460
        %v1495 = vmul.f32 %v1479, %v1456
        %v1496 = vmul.f32 %v1480, %v1452
        %v1497 = vmul.f32 %v1481, %v1464
        %v1498 = vadd.f32 %v1400, %v1482
        %v1499 = vadd.f32 %v1401, %v1483
        %v1500 = vadd.f32 %v1402, %v1484
        %v1501 = vadd.f32 %v1403, %v1485
        %v1502 = vadd.f32 %v1404, %v1486
        %v1503 = vadd.f32 %v1405, %v1487
        %v1504 = vadd.f32 %v1406, %v1488
        %v1505 = vadd.f32 %v1407, %v1489
        %v1506 = vadd.f32 %v1408, %v1490
        %v1507 = vadd.f32 %v1409, %v1491
        %v1508 = vadd.f32 %v1410, %v1492
        %v1509 = vadd.f32 %v1411, %v1493
        %v1510 = vadd.f32 %v1412, %v1494
        %v1511 = vadd.f32 %v1413, %v1495
        %v1512 = vadd.f32 %v1414, %v1496
        %v1513 = vadd.f32 %v1415, %v1497
        %v1514 = vld [vmem:[%s5] sm:$0xff]
        %v1515 = vld [vmem:[%s5 + $0x8] sm:$0xff]
        %v1516 = vld [vmem:[%s5 + $0x10] sm:$0xff]
        %v1517 = vld [vmem:[%s5 + $0x18] sm:$0xff]
        %1519 = vset.pattern.permute.xlu0 0
        %1520 = vperm.xlu0 %1519, %v1514
        %v1521 = vpop.permute.xlu0 %1520
        %1524 = vset.pattern.permute.xlu0 0
        %1525 = vperm.xlu0 %1524, %v1515
        %v1526 = vpop.permute.xlu0 %1525
        %1529 = vset.pattern.permute.xlu0 0
        %1530 = vperm.xlu0 %1529, %v1516
        %v1531 = vpop.permute.xlu0 %1530
        %1534 = vset.pattern.permute.xlu0 0
        %1535 = vperm.xlu0 %1534, %v1517
        %v1536 = vpop.permute.xlu0 %1535
        %v1538 = vadd.f32 %v1498, %v1521
        %v1539 = vadd.f32 %v1499, %v1521
        %v1540 = vadd.f32 %v1500, %v1521
        %v1541 = vadd.f32 %v1501, %v1521
        %v1542 = vadd.f32 %v1502, %v1526
        %v1543 = vadd.f32 %v1503, %v1526
        %v1544 = vadd.f32 %v1504, %v1526
        %v1545 = vadd.f32 %v1505, %v1526
        %v1546 = vadd.f32 %v1506, %v1531
        %v1547 = vadd.f32 %v1507, %v1531
        %v1548 = vadd.f32 %v1508, %v1531
        %v1549 = vadd.f32 %v1509, %v1531
        %v1550 = vadd.f32 %v1510, %v1536
        %v1551 = vadd.f32 %v1511, %v1536
        %v1552 = vadd.f32 %v1512, %v1536
        %v1553 = vadd.f32 %v1513, %v1536
        %v1554 = vmax.f32 %v1538, 0.0
        %v1555 = vmax.f32 %v1539, 0.0
        %v1556 = vmax.f32 %v1540, 0.0
        %v1557 = vmax.f32 %v1541, 0.0
        %v1558 = vmax.f32 %v1542, 0.0
        %v1559 = vmax.f32 %v1543, 0.0
        %v1560 = vmax.f32 %v1544, 0.0
        %v1561 = vmax.f32 %v1545, 0.0
        %v1562 = vmax.f32 %v1546, 0.0
        %v1563 = vmax.f32 %v1547, 0.0
        %v1564 = vmax.f32 %v1548, 0.0
        %v1565 = vmax.f32 %v1549, 0.0
        %v1566 = vmax.f32 %v1550, 0.0
        %v1567 = vmax.f32 %v1551, 0.0
        %v1568 = vmax.f32 %v1552, 0.0
        %v1569 = vmax.f32 %v1553, 0.0
        %v1570 = vld [vmem:[%s6] sm:$0xf]
        %v1571 = vld [vmem:[%s6 + $0x4] sm:$0xf]
        %v1572 = vpack.c.bf16 %v1558, %v1554
        %v1573 = vpack.c.bf16 %v1559, %v1555
        %v1574 = vpack.c.bf16 %v1560, %v1556
        %v1575 = vpack.c.bf16 %v1561, %v1557
        %v1576 = vpack.c.bf16 %v1566, %v1562
        %v1577 = vpack.c.bf16 %v1567, %v1563
        %v1578 = vpack.c.bf16 %v1568, %v1564
        %v1579 = vpack.c.bf16 %v1569, %v1565
        %v1580 = vld [vmem:[%s7] sm:$0xff]
        %v1581 = vld [vmem:[%s7 + $0x8] sm:$0xff]
        %1583 = vset.pattern.permute.xlu0 0
        %1584 = vperm.xlu0 %1583, %v1580
        %v1585 = vpop.permute.xlu0 %1584
        %1588 = vset.pattern.permute.xlu0 0
        %1589 = vperm.xlu0 %1588, %v1581
        %v1590 = vpop.permute.xlu0 %1589
        %v1594 = vunpack.c.l.b16 %v1570
        %v1595 = vunpack.c.l.b16 %v1571
        %v1596 = vpack.c.b16 %v1595, %v1594
        %vm1597 = vcmask 261120
        %v1599 = vsel %vm1597, %v1596, 0
        %1601 = vmatprep.subr.bf16.mxu0 %v1573
        %1602 = vmatpush1.bf16.msra.mxu0 %v1572
        %1603 = vmatprep.subr.bf16.mxu0 %v1577
        %1604 = vmatpush1.bf16.msra.mxu0 %v1576
        %1605 = vmatprep.subr.bf16.mxu0 0
        %1606 = vmatpush1.bf16.msra.mxu0 0
        %1607 = vmatprep.subr.bf16.mxu0 0
        %1608 = vmatpush1.bf16.msra.mxu0 0
        %1609 = vmatprep.subr.bf16.mxu0 0
        %1610 = vmatpush1.bf16.msra.mxu0 0
        %1611 = vmatprep.subr.bf16.mxu0 0
        %1612 = vmatpush1.bf16.msra.mxu0 0
        %1613 = vmatprep.subr.bf16.mxu0 0
        %1614 = vmatpush1.bf16.msra.mxu0 0
        %1615 = vmatprep.subr.bf16.mxu0 0
        %1616 = vmatpush1.bf16.msra.mxu0 0
        %1617 = vmatprep.subr.bf16.mxu0 0
        %1618 = vmatpush1.bf16.msra.mxu0 0
        %1619 = vmatprep.subr.bf16.mxu0 0
        %1620 = vmatpush1.bf16.msra.mxu0 0
        %1621 = vmatprep.subr.bf16.mxu0 0
        %1622 = vmatpush1.bf16.msra.mxu0 0
        %1623 = vmatprep.subr.bf16.mxu0 0
        %1624 = vmatpush1.bf16.msra.mxu0 0
        %1625 = vmatprep.subr.bf16.mxu0 0
        %1626 = vmatpush1.bf16.msra.mxu0 0
        %1627 = vmatprep.subr.bf16.mxu0 0
        %1628 = vmatpush1.bf16.msra.mxu0 0
        %1629 = vmatprep.subr.bf16.mxu0 0
        %1630 = vmatpush1.bf16.msra.mxu0 0
        %1631 = vmatprep.subr.bf16.mxu0 0
        %1632 = vmatpush1.bf16.msra.mxu0 0
        %1633 = vmatprep.mubr.bf16.mxu0 0
        %1634 = vmatmul.mubr.bf16.gmra.mrb[0].mxu0 %v1599
        %v1635 = vpop.f32.mrb[0].mxu0
        %v1636 = vadd.f32 %v1585, %v1635
        %v1637 = vpop.f32.mrb[0].mxu0
        %v1638 = vadd.f32 %v1585, %v1637
        %v1639 = vpop.f32.mrb[0].mxu0
        %v1640 = vadd.f32 %v1590, %v1639
        %v1641 = vpop.f32.mrb[0].mxu0
        %v1642 = vadd.f32 %v1590, %v1641
        %1643 = vdwg.mxu0
        %1644 = vmatprep.subr.bf16.mxu0 %v1575
        %1645 = vmatpush1.bf16.msra.mxu0 %v1574
        %1646 = vmatprep.subr.bf16.mxu0 %v1579
        %1647 = vmatpush1.bf16.msra.mxu0 %v1578
        %1648 = vmatprep.subr.bf16.mxu0 0
        %1649 = vmatpush1.bf16.msra.mxu0 0
        %1650 = vmatprep.subr.bf16.mxu0 0
        %1651 = vmatpush1.bf16.msra.mxu0 0
        %1652 = vmatprep.subr.bf16.mxu0 0
        %1653 = vmatpush1.bf16.msra.mxu0 0
        %1654 = vmatprep.subr.bf16.mxu0 0
        %1655 = vmatpush1.bf16.msra.mxu0 0
        %1656 = vmatprep.subr.bf16.mxu0 0
        %1657 = vmatpush1.bf16.msra.mxu0 0
        %1658 = vmatprep.subr.bf16.mxu0 0
        %1659 = vmatpush1.bf16.msra.mxu0 0
        %1660 = vmatprep.subr.bf16.mxu0 0
        %1661 = vmatpush1.bf16.msra.mxu0 0
        %1662 = vmatprep.subr.bf16.mxu0 0
        %1663 = vmatpush1.bf16.msra.mxu0 0
        %1664 = vmatprep.subr.bf16.mxu0 0
        %1665 = vmatpush1.bf16.msra.mxu0 0
        %1666 = vmatprep.subr.bf16.mxu0 0
        %1667 = vmatpush1.bf16.msra.mxu0 0
        %1668 = vmatprep.subr.bf16.mxu0 0
        %1669 = vmatpush1.bf16.msra.mxu0 0
        %1670 = vmatprep.subr.bf16.mxu0 0
        %1671 = vmatpush1.bf16.msra.mxu0 0
        %1672 = vmatprep.subr.bf16.mxu0 0
        %1673 = vmatpush1.bf16.msra.mxu0 0
        %1674 = vmatprep.subr.bf16.mxu0 0
        %1675 = vmatpush1.bf16.msra.mxu0 0
        %1676 = vmatprep.mubr.bf16.mxu0 0
        %1677 = vmatmul.mubr.bf16.gmra.mrb[0].mxu0 %v1599
        %v1678 = vpop.f32.mrb[0].mxu0
        %v1679 = vadd.f32 %v1585, %v1678
        %v1680 = vpop.f32.mrb[0].mxu0
        %v1681 = vadd.f32 %v1585, %v1680
        %v1682 = vpop.f32.mrb[0].mxu0
        %v1683 = vadd.f32 %v1590, %v1682
        %v1684 = vpop.f32.mrb[0].mxu0
        %v1685 = vadd.f32 %v1590, %v1684
        %1686 = vdwg.mxu0
        %v1687 = vadd.f32 %v1636, %v483
        %v1688 = vadd.f32 %v1638, %v484
        %v1689 = vadd.f32 %v1679, %v485
        %v1690 = vadd.f32 %v1681, %v486
        %v1691 = vadd.f32 %v1640, %v487
        %v1692 = vadd.f32 %v1642, %v488
        %v1693 = vadd.f32 %v1683, %v489
        %v1694 = vadd.f32 %v1685, %v490
        %s1695 = sld [smem:[#allocation2 + $0x1]]
        %v1696 = vstv %s1695
        %v1697 = vmul.f32 %v1696, %v1687
        %v1698 = vmul.f32 %v1696, %v1688
        %v1699 = vmul.f32 %v1696, %v1689
        %v1700 = vmul.f32 %v1696, %v1690
        %v1701 = vmul.f32 %v1696, %v1691
        %v1702 = vmul.f32 %v1696, %v1692
        %v1703 = vmul.f32 %v1696, %v1693
        %v1704 = vmul.f32 %v1696, %v1694
        %v1705 = vld [vmem:[%s481] sm:$0xff]
        %v1706 = vld [vmem:[%s481 + $0x8] sm:$0xff]
        %v1707 = vld [vmem:[%s481 + $0x10] sm:$0xff]
        %v1708 = vld [vmem:[%s481 + $0x18] sm:$0xff]
        %v1709 = vld [vmem:[%s481 + $0x20] sm:$0xff]
        %v1710 = vld [vmem:[%s481 + $0x28] sm:$0xff]
        %v1711 = vld [vmem:[%s481 + $0x30] sm:$0xff]
        %v1712 = vld [vmem:[%s481 + $0x38] sm:$0xff]
        %v1713 = vadd.f32 %v1705, %v1697
        %v1714 = vadd.f32 %v1706, %v1698
        %v1715 = vadd.f32 %v1707, %v1699
        %v1716 = vadd.f32 %v1708, %v1700
        %v1717 = vadd.f32 %v1709, %v1701
        %v1718 = vadd.f32 %v1710, %v1702
        %v1719 = vadd.f32 %v1711, %v1703
        %v1720 = vadd.f32 %v1712, %v1704
        %1721 = vst [vmem:[%s481] sm:$0xff] %v1713
        %1722 = vst [vmem:[%s481 + $0x8] sm:$0xff] %v1714
        %1723 = vst [vmem:[%s481 + $0x10] sm:$0xff] %v1715
        %1724 = vst [vmem:[%s481 + $0x18] sm:$0xff] %v1716
        %1725 = vst [vmem:[%s481 + $0x20] sm:$0xff] %v1717
        %1726 = vst [vmem:[%s481 + $0x28] sm:$0xff] %v1718
        %1727 = vst [vmem:[%s481 + $0x30] sm:$0xff] %v1719
        %1728 = vst [vmem:[%s481 + $0x38] sm:$0xff] %v1720
        %v1729 = vld [vmem:[%s8] sm:$0xf]
        %v1730 = vld [vmem:[%s8 + $0x4] sm:$0xf]
        %v1731 = vld [vmem:[%s8 + $0x8] sm:$0xf]
        %v1732 = vld [vmem:[%s8 + $0xc] sm:$0xf]
        %v1733 = vpack.c.bf16 %v1691, %v1687
        %v1734 = vpack.c.bf16 %v1692, %v1688
        %v1735 = vpack.c.bf16 %v1693, %v1689
        %v1736 = vpack.c.bf16 %v1694, %v1690
        %v1737 = vld [vmem:[%s9] sm:$0xff]
        %v1738 = vld [vmem:[%s9 + $0x8] sm:$0xff]
        %v1739 = vld [vmem:[%s9 + $0x10] sm:$0xff]
        %v1740 = vld [vmem:[%s9 + $0x18] sm:$0xff]
        %1742 = vset.pattern.permute.xlu0 0
        %1743 = vperm.xlu0 %1742, %v1737
        %v1744 = vpop.permute.xlu0 %1743
        %1747 = vset.pattern.permute.xlu0 0
        %1748 = vperm.xlu0 %1747, %v1738
        %v1749 = vpop.permute.xlu0 %1748
        %1752 = vset.pattern.permute.xlu0 0
        %1753 = vperm.xlu0 %1752, %v1739
        %v1754 = vpop.permute.xlu0 %1753
        %1757 = vset.pattern.permute.xlu0 0
        %1758 = vperm.xlu0 %1757, %v1740
        %v1759 = vpop.permute.xlu0 %1758
        %v1765 = vunpack.c.l.b16 %v1729
        %v1766 = vunpack.c.l.b16 %v1730
        %v1767 = vunpack.c.l.b16 %v1731
        %v1768 = vunpack.c.l.b16 %v1732
        %v1769 = vpack.c.b16 %v1766, %v1765
        %v1770 = vpack.c.b16 %v1768, %v1767
        %v1772 = vsel %vm551, %v1769, 0
        %v1775 = vsel %vm551, %v1770, 0
        %1777 = vmatprep.subr.bf16.mxu0 %v1734
        %1778 = vmatpush1.bf16.msra.mxu0 %v1733
        %1779 = vmatprep.subr.bf16.mxu0 0
        %1780 = vmatpush1.bf16.msra.mxu0 0
        %1781 = vmatprep.subr.bf16.mxu0 0
        %1782 = vmatpush1.bf16.msra.mxu0 0
        %1783 = vmatprep.subr.bf16.mxu0 0
        %1784 = vmatpush1.bf16.msra.mxu0 0
        %1785 = vmatprep.subr.bf16.mxu0 0
        %1786 = vmatpush1.bf16.msra.mxu0 0
        %1787 = vmatprep.subr.bf16.mxu0 0
        %1788 = vmatpush1.bf16.msra.mxu0 0
        %1789 = vmatprep.subr.bf16.mxu0 0
        %1790 = vmatpush1.bf16.msra.mxu0 0
        %1791 = vmatprep.subr.bf16.mxu0 0
        %1792 = vmatpush1.bf16.msra.mxu0 0
        %1793 = vmatprep.subr.bf16.mxu0 0
        %1794 = vmatpush1.bf16.msra.mxu0 0
        %1795 = vmatprep.subr.bf16.mxu0 0
        %1796 = vmatpush1.bf16.msra.mxu0 0
        %1797 = vmatprep.subr.bf16.mxu0 0
        %1798 = vmatpush1.bf16.msra.mxu0 0
        %1799 = vmatprep.subr.bf16.mxu0 0
        %1800 = vmatpush1.bf16.msra.mxu0 0
        %1801 = vmatprep.subr.bf16.mxu0 0
        %1802 = vmatpush1.bf16.msra.mxu0 0
        %1803 = vmatprep.subr.bf16.mxu0 0
        %1804 = vmatpush1.bf16.msra.mxu0 0
        %1805 = vmatprep.subr.bf16.mxu0 0
        %1806 = vmatpush1.bf16.msra.mxu0 0
        %1807 = vmatprep.subr.bf16.mxu0 0
        %1808 = vmatpush1.bf16.msra.mxu0 0
        %1809 = vmatprep.mubr.bf16.mxu0 0
        %1810 = vmatmul.mubr.bf16.gmra.mrb[0].mxu0 %v1772
        %v1811 = vpop.f32.mrb[0].mxu0
        %v1812 = vadd.f32 %v1744, %v1811
        %v1813 = vpop.f32.mrb[0].mxu0
        %v1814 = vadd.f32 %v1744, %v1813
        %v1815 = vpop.f32.mrb[0].mxu0
        %v1816 = vadd.f32 %v1749, %v1815
        %v1817 = vpop.f32.mrb[0].mxu0
        %v1818 = vadd.f32 %v1749, %v1817
        %1819 = vmatprep.mubr.bf16.mxu0 0
        %1820 = vmatmul.mubr.bf16.gmra.mrb[0].mxu0 %v1775
        %v1821 = vpop.f32.mrb[0].mxu0
        %v1822 = vadd.f32 %v1754, %v1821
        %v1823 = vpop.f32.mrb[0].mxu0
        %v1824 = vadd.f32 %v1754, %v1823
        %v1825 = vpop.f32.mrb[0].mxu0
        %v1826 = vadd.f32 %v1759, %v1825
        %v1827 = vpop.f32.mrb[0].mxu0
        %v1828 = vadd.f32 %v1759, %v1827
        %1829 = vdwg.mxu0
        %1830 = vmatprep.subr.bf16.mxu0 %v1736
        %1831 = vmatpush1.bf16.msra.mxu0 %v1735
        %1832 = vmatprep.subr.bf16.mxu0 0
        %1833 = vmatpush1.bf16.msra.mxu0 0
        %1834 = vmatprep.subr.bf16.mxu0 0
        %1835 = vmatpush1.bf16.msra.mxu0 0
        %1836 = vmatprep.subr.bf16.mxu0 0
        %1837 = vmatpush1.bf16.msra.mxu0 0
        %1838 = vmatprep.subr.bf16.mxu0 0
        %1839 = vmatpush1.bf16.msra.mxu0 0
        %1840 = vmatprep.subr.bf16.mxu0 0
        %1841 = vmatpush1.bf16.msra.mxu0 0
        %1842 = vmatprep.subr.bf16.mxu0 0
        %1843 = vmatpush1.bf16.msra.mxu0 0
        %1844 = vmatprep.subr.bf16.mxu0 0
        %1845 = vmatpush1.bf16.msra.mxu0 0
        %1846 = vmatprep.subr.bf16.mxu0 0
        %1847 = vmatpush1.bf16.msra.mxu0 0
        %1848 = vmatprep.subr.bf16.mxu0 0
        %1849 = vmatpush1.bf16.msra.mxu0 0
        %1850 = vmatprep.subr.bf16.mxu0 0
        %1851 = vmatpush1.bf16.msra.mxu0 0
        %1852 = vmatprep.subr.bf16.mxu0 0
        %1853 = vmatpush1.bf16.msra.mxu0 0
        %1854 = vmatprep.subr.bf16.mxu0 0
        %1855 = vmatpush1.bf16.msra.mxu0 0
        %1856 = vmatprep.subr.bf16.mxu0 0
        %1857 = vmatpush1.bf16.msra.mxu0 0
        %1858 = vmatprep.subr.bf16.mxu0 0
        %1859 = vmatpush1.bf16.msra.mxu0 0
        %1860 = vmatprep.subr.bf16.mxu0 0
        %1861 = vmatpush1.bf16.msra.mxu0 0
        %1862 = vmatprep.mubr.bf16.mxu0 0
        %1863 = vmatmul.mubr.bf16.gmra.mrb[0].mxu0 %v1772
        %v1864 = vpop.f32.mrb[0].mxu0
        %v1865 = vadd.f32 %v1744, %v1864
        %v1866 = vpop.f32.mrb[0].mxu0
        %v1867 = vadd.f32 %v1744, %v1866
        %v1868 = vpop.f32.mrb[0].mxu0
        %v1869 = vadd.f32 %v1749, %v1868
        %v1870 = vpop.f32.mrb[0].mxu0
        %v1871 = vadd.f32 %v1749, %v1870
        %1872 = vmatprep.mubr.bf16.mxu0 0
        %1873 = vmatmul.mubr.bf16.gmra.mrb[0].mxu0 %v1775
        %v1874 = vpop.f32.mrb[0].mxu0
        %v1875 = vadd.f32 %v1754, %v1874
        %v1876 = vpop.f32.mrb[0].mxu0
        %v1877 = vadd.f32 %v1754, %v1876
        %v1878 = vpop.f32.mrb[0].mxu0
        %v1879 = vadd.f32 %v1759, %v1878
        %v1880 = vpop.f32.mrb[0].mxu0
        %v1881 = vadd.f32 %v1759, %v1880
        %1882 = vdwg.mxu0
        %v1883 = vmax.f32 %v1812, 0.0
        %v1884 = vmax.f32 %v1814, 0.0
        %v1885 = vmax.f32 %v1865, 0.0
        %v1886 = vmax.f32 %v1867, 0.0
        %v1887 = vmax.f32 %v1816, 0.0
        %v1888 = vmax.f32 %v1818, 0.0
        %v1889 = vmax.f32 %v1869, 0.0
        %v1890 = vmax.f32 %v1871, 0.0
        %v1891 = vmax.f32 %v1822, 0.0
        %v1892 = vmax.f32 %v1824, 0.0
        %v1893 = vmax.f32 %v1875, 0.0
        %v1894 = vmax.f32 %v1877, 0.0
        %v1895 = vmax.f32 %v1826, 0.0
        %v1896 = vmax.f32 %v1828, 0.0
        %v1897 = vmax.f32 %v1879, 0.0
        %v1898 = vmax.f32 %v1881, 0.0
        %1899 = vrot.lane.b32.xlu0 %v1883, 17
        %v1900 = vpop.permute.xlu0 %1899
        %1901 = vrot.lane.b32.xlu0 %v1887, 17
        %v1902 = vpop.permute.xlu0 %1901
        %1903 = vrot.lane.b32.xlu0 %v1891, 17
        %v1904 = vpop.permute.xlu0 %1903
        %1905 = vrot.lane.b32.xlu0 %v1895, 17
        %v1906 = vpop.permute.xlu0 %1905
        %1907 = vrot.lane.b32.xlu0 %v1884, 17
        %v1908 = vpop.permute.xlu0 %1907
        %1909 = vrot.lane.b32.xlu0 %v1888, 17
        %v1910 = vpop.permute.xlu0 %1909
        %1911 = vrot.lane.b32.xlu0 %v1892, 17
        %v1912 = vpop.permute.xlu0 %1911
        %1913 = vrot.lane.b32.xlu0 %v1896, 17
        %v1914 = vpop.permute.xlu0 %1913
        %1915 = vrot.lane.b32.xlu0 %v1885, 17
        %v1916 = vpop.permute.xlu0 %1915
        %1917 = vrot.lane.b32.xlu0 %v1889, 17
        %v1918 = vpop.permute.xlu0 %1917
        %1919 = vrot.lane.b32.xlu0 %v1893, 17
        %v1920 = vpop.permute.xlu0 %1919
        %1921 = vrot.lane.b32.xlu0 %v1897, 17
        %v1922 = vpop.permute.xlu0 %1921
        %1923 = vrot.lane.b32.xlu0 %v1886, 17
        %v1924 = vpop.permute.xlu0 %1923
        %1925 = vrot.lane.b32.xlu0 %v1890, 17
        %v1926 = vpop.permute.xlu0 %1925
        %1927 = vrot.lane.b32.xlu0 %v1894, 17
        %v1928 = vpop.permute.xlu0 %1927
        %1929 = vrot.lane.b32.xlu0 %v1898, 17
        %v1930 = vpop.permute.xlu0 %1929
        %v1931 = vsel %vm714, %v1916, %v1924
        %v1932 = vsel %vm714, %v1918, %v1926
        %v1933 = vsel %vm714, %v1920, %v1928
        %v1934 = vsel %vm714, %v1922, %v1930
        %v1935 = vsel %vm714, %v1908, %v1916
        %v1936 = vsel %vm714, %v1910, %v1918
        %v1937 = vsel %vm714, %v1912, %v1920
        %v1938 = vsel %vm714, %v1914, %v1922
        %v1939 = vsel %vm714, %v1900, %v1908
        %v1940 = vsel %vm714, %v1902, %v1910
        %v1941 = vsel %vm714, %v1904, %v1912
        %v1942 = vsel %vm714, %v1906, %v1914
        %v1943 = vsel %vm714, %v1924, %v1900
        %v1944 = vsel %vm714, %v1926, %v1902
        %v1945 = vsel %vm714, %v1928, %v1904
        %v1946 = vsel %vm714, %v1930, %v1906
        %v1947 = vld [vmem:[%s10] sm:$0xff]
        %v1948 = vld [vmem:[%s10 + $0x8] sm:$0xff]
        %v1949 = vld [vmem:[%s10 + $0x10] sm:$0xff]
        %v1950 = vld [vmem:[%s10 + $0x18] sm:$0xff]
        %v1951 = vld [vmem:[%s10 + $0x20] sm:$0xff]
        %v1952 = vld [vmem:[%s10 + $0x28] sm:$0xff]
        %v1953 = vld [vmem:[%s10 + $0x30] sm:$0xff]
        %v1954 = vld [vmem:[%s10 + $0x38] sm:$0xff]
        %v1955 = vld [vmem:[%s10 + $0x40] sm:$0xff]
        %v1956 = vld [vmem:[%s10 + $0x48] sm:$0xff]
        %v1957 = vld [vmem:[%s10 + $0x50] sm:$0xff]
        %v1958 = vld [vmem:[%s10 + $0x58] sm:$0xff]
        %v1959 = vld [vmem:[%s10 + $0x60] sm:$0xff]
        %v1960 = vld [vmem:[%s10 + $0x68] sm:$0xff]
        %v1961 = vld [vmem:[%s10 + $0x70] sm:$0xff]
        %v1962 = vld [vmem:[%s10 + $0x78] sm:$0xff]
        %v1963 = vmul.f32 %v1947, %v1943
        %v1964 = vmul.f32 %v1948, %v1939
        %v1965 = vmul.f32 %v1949, %v1935
        %v1966 = vmul.f32 %v1950, %v1931
        %v1967 = vmul.f32 %v1951, %v1944
        %v1968 = vmul.f32 %v1952, %v1940
        %v1969 = vmul.f32 %v1953, %v1936
        %v1970 = vmul.f32 %v1954, %v1932
        %v1971 = vmul.f32 %v1955, %v1945
        %v1972 = vmul.f32 %v1956, %v1941
        %v1973 = vmul.f32 %v1957, %v1937
        %v1974 = vmul.f32 %v1958, %v1933
        %v1975 = vmul.f32 %v1959, %v1946
        %v1976 = vmul.f32 %v1960, %v1942
        %v1977 = vmul.f32 %v1961, %v1938
        %v1978 = vmul.f32 %v1962, %v1934
        %v1979 = vadd.f32 %v1963, 0.0
        %v1980 = vadd.f32 %v1964, 0.0
        %v1981 = vadd.f32 %v1965, 0.0
        %v1982 = vadd.f32 %v1966, 0.0
        %v1983 = vadd.f32 %v1967, 0.0
        %v1984 = vadd.f32 %v1968, 0.0
        %v1985 = vadd.f32 %v1969, 0.0
        %v1986 = vadd.f32 %v1970, 0.0
        %v1987 = vadd.f32 %v1971, 0.0
        %v1988 = vadd.f32 %v1972, 0.0
        %v1989 = vadd.f32 %v1973, 0.0
        %v1990 = vadd.f32 %v1974, 0.0
        %v1991 = vadd.f32 %v1975, 0.0
        %v1992 = vadd.f32 %v1976, 0.0
        %v1993 = vadd.f32 %v1977, 0.0
        %v1994 = vadd.f32 %v1978, 0.0
        %1995 = vrot.lane.b32.xlu0 %v1883, 16
        %v1996 = vpop.permute.xlu0 %1995
        %1997 = vrot.lane.b32.xlu0 %v1887, 16
        %v1998 = vpop.permute.xlu0 %1997
        %1999 = vrot.lane.b32.xlu0 %v1891, 16
        %v2000 = vpop.permute.xlu0 %1999
        %2001 = vrot.lane.b32.xlu0 %v1895, 16
        %v2002 = vpop.permute.xlu0 %2001
        %2003 = vrot.lane.b32.xlu0 %v1884, 16
        %v2004 = vpop.permute.xlu0 %2003
        %2005 = vrot.lane.b32.xlu0 %v1888, 16
        %v2006 = vpop.permute.xlu0 %2005
        %2007 = vrot.lane.b32.xlu0 %v1892, 16
        %v2008 = vpop.permute.xlu0 %2007
        %2009 = vrot.lane.b32.xlu0 %v1896, 16
        %v2010 = vpop.permute.xlu0 %2009
        %2011 = vrot.lane.b32.xlu0 %v1885, 16
        %v2012 = vpop.permute.xlu0 %2011
        %2013 = vrot.lane.b32.xlu0 %v1889, 16
        %v2014 = vpop.permute.xlu0 %2013
        %2015 = vrot.lane.b32.xlu0 %v1893, 16
        %v2016 = vpop.permute.xlu0 %2015
        %2017 = vrot.lane.b32.xlu0 %v1897, 16
        %v2018 = vpop.permute.xlu0 %2017
        %2019 = vrot.lane.b32.xlu0 %v1886, 16
        %v2020 = vpop.permute.xlu0 %2019
        %2021 = vrot.lane.b32.xlu0 %v1890, 16
        %v2022 = vpop.permute.xlu0 %2021
        %2023 = vrot.lane.b32.xlu0 %v1894, 16
        %v2024 = vpop.permute.xlu0 %2023
        %2025 = vrot.lane.b32.xlu0 %v1898, 16
        %v2026 = vpop.permute.xlu0 %2025
        %v2027 = vsel %vm811, %v2012, %v2020
        %v2028 = vsel %vm811, %v2014, %v2022
        %v2029 = vsel %vm811, %v2016, %v2024
        %v2030 = vsel %vm811, %v2018, %v2026
        %v2031 = vsel %vm811, %v2004, %v2012
        %v2032 = vsel %vm811, %v2006, %v2014
        %v2033 = vsel %vm811, %v2008, %v2016
        %v2034 = vsel %vm811, %v2010, %v2018
        %v2035 = vsel %vm811, %v1996, %v2004
        %v2036 = vsel %vm811, %v1998, %v2006
        %v2037 = vsel %vm811, %v2000, %v2008
        %v2038 = vsel %vm811, %v2002, %v2010
        %v2039 = vsel %vm811, %v2020, %v1996
        %v2040 = vsel %vm811, %v2022, %v1998
        %v2041 = vsel %vm811, %v2024, %v2000
        %v2042 = vsel %vm811, %v2026, %v2002
        %s2043 = scalar_lea.vmem %s10, 128
        %v2044 = vld [vmem:[%s2043] sm:$0xff]
        %v2045 = vld [vmem:[%s2043 + $0x8] sm:$0xff]
        %v2046 = vld [vmem:[%s2043 + $0x10] sm:$0xff]
        %v2047 = vld [vmem:[%s2043 + $0x18] sm:$0xff]
        %v2048 = vld [vmem:[%s2043 + $0x20] sm:$0xff]
        %v2049 = vld [vmem:[%s2043 + $0x28] sm:$0xff]
        %v2050 = vld [vmem:[%s2043 + $0x30] sm:$0xff]
        %v2051 = vld [vmem:[%s2043 + $0x38] sm:$0xff]
        %v2052 = vld [vmem:[%s2043 + $0x40] sm:$0xff]
        %v2053 = vld [vmem:[%s2043 + $0x48] sm:$0xff]
        %v2054 = vld [vmem:[%s2043 + $0x50] sm:$0xff]
        %v2055 = vld [vmem:[%s2043 + $0x58] sm:$0xff]
        %v2056 = vld [vmem:[%s2043 + $0x60] sm:$0xff]
        %v2057 = vld [vmem:[%s2043 + $0x68] sm:$0xff]
        %v2058 = vld [vmem:[%s2043 + $0x70] sm:$0xff]
        %v2059 = vld [vmem:[%s2043 + $0x78] sm:$0xff]
        %v2060 = vmul.f32 %v2044, %v2039
        %v2061 = vmul.f32 %v2045, %v2035
        %v2062 = vmul.f32 %v2046, %v2031
        %v2063 = vmul.f32 %v2047, %v2027
        %v2064 = vmul.f32 %v2048, %v2040
        %v2065 = vmul.f32 %v2049, %v2036
        %v2066 = vmul.f32 %v2050, %v2032
        %v2067 = vmul.f32 %v2051, %v2028
        %v2068 = vmul.f32 %v2052, %v2041
        %v2069 = vmul.f32 %v2053, %v2037
        %v2070 = vmul.f32 %v2054, %v2033
        %v2071 = vmul.f32 %v2055, %v2029
        %v2072 = vmul.f32 %v2056, %v2042
        %v2073 = vmul.f32 %v2057, %v2038
        %v2074 = vmul.f32 %v2058, %v2034
        %v2075 = vmul.f32 %v2059, %v2030
        %v2076 = vadd.f32 %v1979, %v2060
        %v2077 = vadd.f32 %v1980, %v2061
        %v2078 = vadd.f32 %v1981, %v2062
        %v2079 = vadd.f32 %v1982, %v2063
        %v2080 = vadd.f32 %v1983, %v2064
        %v2081 = vadd.f32 %v1984, %v2065
        %v2082 = vadd.f32 %v1985, %v2066
        %v2083 = vadd.f32 %v1986, %v2067
        %v2084 = vadd.f32 %v1987, %v2068
        %v2085 = vadd.f32 %v1988, %v2069
        %v2086 = vadd.f32 %v1989, %v2070
        %v2087 = vadd.f32 %v1990, %v2071
        %v2088 = vadd.f32 %v1991, %v2072
        %v2089 = vadd.f32 %v1992, %v2073
        %v2090 = vadd.f32 %v1993, %v2074
        %v2091 = vadd.f32 %v1994, %v2075
        %2092 = vrot.lane.b32.xlu0 %v1883, 15
        %v2093 = vpop.permute.xlu0 %2092
        %2094 = vrot.lane.b32.xlu0 %v1887, 15
        %v2095 = vpop.permute.xlu0 %2094
        %2096 = vrot.lane.b32.xlu0 %v1891, 15
        %v2097 = vpop.permute.xlu0 %2096
        %2098 = vrot.lane.b32.xlu0 %v1895, 15
        %v2099 = vpop.permute.xlu0 %2098
        %2100 = vrot.lane.b32.xlu0 %v1884, 15
        %v2101 = vpop.permute.xlu0 %2100
        %2102 = vrot.lane.b32.xlu0 %v1888, 15
        %v2103 = vpop.permute.xlu0 %2102
        %2104 = vrot.lane.b32.xlu0 %v1892, 15
        %v2105 = vpop.permute.xlu0 %2104
        %2106 = vrot.lane.b32.xlu0 %v1896, 15
        %v2107 = vpop.permute.xlu0 %2106
        %2108 = vrot.lane.b32.xlu0 %v1885, 15
        %v2109 = vpop.permute.xlu0 %2108
        %2110 = vrot.lane.b32.xlu0 %v1889, 15
        %v2111 = vpop.permute.xlu0 %2110
        %2112 = vrot.lane.b32.xlu0 %v1893, 15
        %v2113 = vpop.permute.xlu0 %2112
        %2114 = vrot.lane.b32.xlu0 %v1897, 15
        %v2115 = vpop.permute.xlu0 %2114
        %2116 = vrot.lane.b32.xlu0 %v1886, 15
        %v2117 = vpop.permute.xlu0 %2116
        %2118 = vrot.lane.b32.xlu0 %v1890, 15
        %v2119 = vpop.permute.xlu0 %2118
        %2120 = vrot.lane.b32.xlu0 %v1894, 15
        %v2121 = vpop.permute.xlu0 %2120
        %2122 = vrot.lane.b32.xlu0 %v1898, 15
        %v2123 = vpop.permute.xlu0 %2122
        %v2124 = vsel %vm909, %v2109, %v2117
        %v2125 = vsel %vm909, %v2111, %v2119
        %v2126 = vsel %vm909, %v2113, %v2121
        %v2127 = vsel %vm909, %v2115, %v2123
        %v2128 = vsel %vm909, %v2101, %v2109
        %v2129 = vsel %vm909, %v2103, %v2111
        %v2130 = vsel %vm909, %v2105, %v2113
        %v2131 = vsel %vm909, %v2107, %v2115
        %v2132 = vsel %vm909, %v2093, %v2101
        %v2133 = vsel %vm909, %v2095, %v2103
        %v2134 = vsel %vm909, %v2097, %v2105
        %v2135 = vsel %vm909, %v2099, %v2107
        %v2136 = vsel %vm909, %v2117, %v2093
        %v2137 = vsel %vm909, %v2119, %v2095
        %v2138 = vsel %vm909, %v2121, %v2097
        %v2139 = vsel %vm909, %v2123, %v2099
        %s2140 = scalar_lea.vmem %s10, 256
        %v2141 = vld [vmem:[%s2140] sm:$0xff]
        %v2142 = vld [vmem:[%s2140 + $0x8] sm:$0xff]
        %v2143 = vld [vmem:[%s2140 + $0x10] sm:$0xff]
        %v2144 = vld [vmem:[%s2140 + $0x18] sm:$0xff]
        %v2145 = vld [vmem:[%s2140 + $0x20] sm:$0xff]
        %v2146 = vld [vmem:[%s2140 + $0x28] sm:$0xff]
        %v2147 = vld [vmem:[%s2140 + $0x30] sm:$0xff]
        %v2148 = vld [vmem:[%s2140 + $0x38] sm:$0xff]
        %v2149 = vld [vmem:[%s2140 + $0x40] sm:$0xff]
        %v2150 = vld [vmem:[%s2140 + $0x48] sm:$0xff]
        %v2151 = vld [vmem:[%s2140 + $0x50] sm:$0xff]
        %v2152 = vld [vmem:[%s2140 + $0x58] sm:$0xff]
        %v2153 = vld [vmem:[%s2140 + $0x60] sm:$0xff]
        %v2154 = vld [vmem:[%s2140 + $0x68] sm:$0xff]
        %v2155 = vld [vmem:[%s2140 + $0x70] sm:$0xff]
        %v2156 = vld [vmem:[%s2140 + $0x78] sm:$0xff]
        %v2157 = vmul.f32 %v2141, %v2136
        %v2158 = vmul.f32 %v2142, %v2132
        %v2159 = vmul.f32 %v2143, %v2128
        %v2160 = vmul.f32 %v2144, %v2124
        %v2161 = vmul.f32 %v2145, %v2137
        %v2162 = vmul.f32 %v2146, %v2133
        %v2163 = vmul.f32 %v2147, %v2129
        %v2164 = vmul.f32 %v2148, %v2125
        %v2165 = vmul.f32 %v2149, %v2138
        %v2166 = vmul.f32 %v2150, %v2134
        %v2167 = vmul.f32 %v2151, %v2130
        %v2168 = vmul.f32 %v2152, %v2126
        %v2169 = vmul.f32 %v2153, %v2139
        %v2170 = vmul.f32 %v2154, %v2135
        %v2171 = vmul.f32 %v2155, %v2131
        %v2172 = vmul.f32 %v2156, %v2127
        %v2173 = vadd.f32 %v2076, %v2157
        %v2174 = vadd.f32 %v2077, %v2158
        %v2175 = vadd.f32 %v2078, %v2159
        %v2176 = vadd.f32 %v2079, %v2160
        %v2177 = vadd.f32 %v2080, %v2161
        %v2178 = vadd.f32 %v2081, %v2162
        %v2179 = vadd.f32 %v2082, %v2163
        %v2180 = vadd.f32 %v2083, %v2164
        %v2181 = vadd.f32 %v2084, %v2165
        %v2182 = vadd.f32 %v2085, %v2166
        %v2183 = vadd.f32 %v2086, %v2167
        %v2184 = vadd.f32 %v2087, %v2168
        %v2185 = vadd.f32 %v2088, %v2169
        %v2186 = vadd.f32 %v2089, %v2170
        %v2187 = vadd.f32 %v2090, %v2171
        %v2188 = vadd.f32 %v2091, %v2172
        %2189 = vrot.lane.b32.xlu0 %v1883, 1
        %v2190 = vpop.permute.xlu0 %2189
        %2191 = vrot.lane.b32.xlu0 %v1887, 1
        %v2192 = vpop.permute.xlu0 %2191
        %2193 = vrot.lane.b32.xlu0 %v1891, 1
        %v2194 = vpop.permute.xlu0 %2193
        %2195 = vrot.lane.b32.xlu0 %v1895, 1
        %v2196 = vpop.permute.xlu0 %2195
        %2197 = vrot.lane.b32.xlu0 %v1884, 1
        %v2198 = vpop.permute.xlu0 %2197
        %2199 = vrot.lane.b32.xlu0 %v1888, 1
        %v2200 = vpop.permute.xlu0 %2199
        %2201 = vrot.lane.b32.xlu0 %v1892, 1
        %v2202 = vpop.permute.xlu0 %2201
        %2203 = vrot.lane.b32.xlu0 %v1896, 1
        %v2204 = vpop.permute.xlu0 %2203
        %2205 = vrot.lane.b32.xlu0 %v1885, 1
        %v2206 = vpop.permute.xlu0 %2205
        %2207 = vrot.lane.b32.xlu0 %v1889, 1
        %v2208 = vpop.permute.xlu0 %2207
        %2209 = vrot.lane.b32.xlu0 %v1893, 1
        %v2210 = vpop.permute.xlu0 %2209
        %2211 = vrot.lane.b32.xlu0 %v1897, 1
        %v2212 = vpop.permute.xlu0 %2211
        %2213 = vrot.lane.b32.xlu0 %v1886, 1
        %v2214 = vpop.permute.xlu0 %2213
        %2215 = vrot.lane.b32.xlu0 %v1890, 1
        %v2216 = vpop.permute.xlu0 %2215
        %2217 = vrot.lane.b32.xlu0 %v1894, 1
        %v2218 = vpop.permute.xlu0 %2217
        %2219 = vrot.lane.b32.xlu0 %v1898, 1
        %v2220 = vpop.permute.xlu0 %2219
        %v2221 = vsel %vm1007, %v2206, %v2214
        %v2222 = vsel %vm1007, %v2208, %v2216
        %v2223 = vsel %vm1007, %v2210, %v2218
        %v2224 = vsel %vm1007, %v2212, %v2220
        %v2225 = vsel %vm1007, %v2198, %v2206
        %v2226 = vsel %vm1007, %v2200, %v2208
        %v2227 = vsel %vm1007, %v2202, %v2210
        %v2228 = vsel %vm1007, %v2204, %v2212
        %v2229 = vsel %vm1007, %v2190, %v2198
        %v2230 = vsel %vm1007, %v2192, %v2200
        %v2231 = vsel %vm1007, %v2194, %v2202
        %v2232 = vsel %vm1007, %v2196, %v2204
        %v2233 = vsel %vm1007, %v2214, %v2190
        %v2234 = vsel %vm1007, %v2216, %v2192
        %v2235 = vsel %vm1007, %v2218, %v2194
        %v2236 = vsel %vm1007, %v2220, %v2196
        %s2237 = scalar_lea.vmem %s10, 384
        %v2238 = vld [vmem:[%s2237] sm:$0xff]
        %v2239 = vld [vmem:[%s2237 + $0x8] sm:$0xff]
        %v2240 = vld [vmem:[%s2237 + $0x10] sm:$0xff]
        %v2241 = vld [vmem:[%s2237 + $0x18] sm:$0xff]
        %v2242 = vld [vmem:[%s2237 + $0x20] sm:$0xff]
        %v2243 = vld [vmem:[%s2237 + $0x28] sm:$0xff]
        %v2244 = vld [vmem:[%s2237 + $0x30] sm:$0xff]
        %v2245 = vld [vmem:[%s2237 + $0x38] sm:$0xff]
        %v2246 = vld [vmem:[%s2237 + $0x40] sm:$0xff]
        %v2247 = vld [vmem:[%s2237 + $0x48] sm:$0xff]
        %v2248 = vld [vmem:[%s2237 + $0x50] sm:$0xff]
        %v2249 = vld [vmem:[%s2237 + $0x58] sm:$0xff]
        %v2250 = vld [vmem:[%s2237 + $0x60] sm:$0xff]
        %v2251 = vld [vmem:[%s2237 + $0x68] sm:$0xff]
        %v2252 = vld [vmem:[%s2237 + $0x70] sm:$0xff]
        %v2253 = vld [vmem:[%s2237 + $0x78] sm:$0xff]
        %v2254 = vmul.f32 %v2238, %v2233
        %v2255 = vmul.f32 %v2239, %v2229
        %v2256 = vmul.f32 %v2240, %v2225
        %v2257 = vmul.f32 %v2241, %v2221
        %v2258 = vmul.f32 %v2242, %v2234
        %v2259 = vmul.f32 %v2243, %v2230
        %v2260 = vmul.f32 %v2244, %v2226
        %v2261 = vmul.f32 %v2245, %v2222
        %v2262 = vmul.f32 %v2246, %v2235
        %v2263 = vmul.f32 %v2247, %v2231
        %v2264 = vmul.f32 %v2248, %v2227
        %v2265 = vmul.f32 %v2249, %v2223
        %v2266 = vmul.f32 %v2250, %v2236
        %v2267 = vmul.f32 %v2251, %v2232
        %v2268 = vmul.f32 %v2252, %v2228
        %v2269 = vmul.f32 %v2253, %v2224
        %v2270 = vadd.f32 %v2173, %v2254
        %v2271 = vadd.f32 %v2174, %v2255
        %v2272 = vadd.f32 %v2175, %v2256
        %v2273 = vadd.f32 %v2176, %v2257
        %v2274 = vadd.f32 %v2177, %v2258
        %v2275 = vadd.f32 %v2178, %v2259
        %v2276 = vadd.f32 %v2179, %v2260
        %v2277 = vadd.f32 %v2180, %v2261
        %v2278 = vadd.f32 %v2181, %v2262
        %v2279 = vadd.f32 %v2182, %v2263
        %v2280 = vadd.f32 %v2183, %v2264
        %v2281 = vadd.f32 %v2184, %v2265
        %v2282 = vadd.f32 %v2185, %v2266
        %v2283 = vadd.f32 %v2186, %v2267
        %v2284 = vadd.f32 %v2187, %v2268
        %v2285 = vadd.f32 %v2188, %v2269
        %s2286 = scalar_lea.vmem %s10, 512
        %v2287 = vld [vmem:[%s2286] sm:$0xff]
        %v2288 = vld [vmem:[%s2286 + $0x8] sm:$0xff]
        %v2289 = vld [vmem:[%s2286 + $0x10] sm:$0xff]
        %v2290 = vld [vmem:[%s2286 + $0x18] sm:$0xff]
        %v2291 = vld [vmem:[%s2286 + $0x20] sm:$0xff]
        %v2292 = vld [vmem:[%s2286 + $0x28] sm:$0xff]
        %v2293 = vld [vmem:[%s2286 + $0x30] sm:$0xff]
        %v2294 = vld [vmem:[%s2286 + $0x38] sm:$0xff]
        %v2295 = vld [vmem:[%s2286 + $0x40] sm:$0xff]
        %v2296 = vld [vmem:[%s2286 + $0x48] sm:$0xff]
        %v2297 = vld [vmem:[%s2286 + $0x50] sm:$0xff]
        %v2298 = vld [vmem:[%s2286 + $0x58] sm:$0xff]
        %v2299 = vld [vmem:[%s2286 + $0x60] sm:$0xff]
        %v2300 = vld [vmem:[%s2286 + $0x68] sm:$0xff]
        %v2301 = vld [vmem:[%s2286 + $0x70] sm:$0xff]
        %v2302 = vld [vmem:[%s2286 + $0x78] sm:$0xff]
        %v2303 = vmul.f32 %v2287, %v1883
        %v2304 = vmul.f32 %v2288, %v1884
        %v2305 = vmul.f32 %v2289, %v1885
        %v2306 = vmul.f32 %v2290, %v1886
        %v2307 = vmul.f32 %v2291, %v1887
        %v2308 = vmul.f32 %v2292, %v1888
        %v2309 = vmul.f32 %v2293, %v1889
        %v2310 = vmul.f32 %v2294, %v1890
        %v2311 = vmul.f32 %v2295, %v1891
        %v2312 = vmul.f32 %v2296, %v1892
        %v2313 = vmul.f32 %v2297, %v1893
        %v2314 = vmul.f32 %v2298, %v1894
        %v2315 = vmul.f32 %v2299, %v1895
        %v2316 = vmul.f32 %v2300, %v1896
        %v2317 = vmul.f32 %v2301, %v1897
        %v2318 = vmul.f32 %v2302, %v1898
        %v2319 = vadd.f32 %v2270, %v2303
        %v2320 = vadd.f32 %v2271, %v2304
        %v2321 = vadd.f32 %v2272, %v2305
        %v2322 = vadd.f32 %v2273, %v2306
        %v2323 = vadd.f32 %v2274, %v2307
        %v2324 = vadd.f32 %v2275, %v2308
        %v2325 = vadd.f32 %v2276, %v2309
        %v2326 = vadd.f32 %v2277, %v2310
        %v2327 = vadd.f32 %v2278, %v2311
        %v2328 = vadd.f32 %v2279, %v2312
        %v2329 = vadd.f32 %v2280, %v2313
        %v2330 = vadd.f32 %v2281, %v2314
        %v2331 = vadd.f32 %v2282, %v2315
        %v2332 = vadd.f32 %v2283, %v2316
        %v2333 = vadd.f32 %v2284, %v2317
        %v2334 = vadd.f32 %v2285, %v2318
        %2335 = vrot.lane.b32.xlu0 %v1883, 127
        %v2336 = vpop.permute.xlu0 %2335
        %2337 = vrot.lane.b32.xlu0 %v1887, 127
        %v2338 = vpop.permute.xlu0 %2337
        %2339 = vrot.lane.b32.xlu0 %v1891, 127
        %v2340 = vpop.permute.xlu0 %2339
        %2341 = vrot.lane.b32.xlu0 %v1895, 127
        %v2342 = vpop.permute.xlu0 %2341
        %2343 = vrot.lane.b32.xlu0 %v1884, 127
        %v2344 = vpop.permute.xlu0 %2343
        %2345 = vrot.lane.b32.xlu0 %v1888, 127
        %v2346 = vpop.permute.xlu0 %2345
        %2347 = vrot.lane.b32.xlu0 %v1892, 127
        %v2348 = vpop.permute.xlu0 %2347
        %2349 = vrot.lane.b32.xlu0 %v1896, 127
        %v2350 = vpop.permute.xlu0 %2349
        %2351 = vrot.lane.b32.xlu0 %v1885, 127
        %v2352 = vpop.permute.xlu0 %2351
        %2353 = vrot.lane.b32.xlu0 %v1889, 127
        %v2354 = vpop.permute.xlu0 %2353
        %2355 = vrot.lane.b32.xlu0 %v1893, 127
        %v2356 = vpop.permute.xlu0 %2355
        %2357 = vrot.lane.b32.xlu0 %v1897, 127
        %v2358 = vpop.permute.xlu0 %2357
        %2359 = vrot.lane.b32.xlu0 %v1886, 127
        %v2360 = vpop.permute.xlu0 %2359
        %2361 = vrot.lane.b32.xlu0 %v1890, 127
        %v2362 = vpop.permute.xlu0 %2361
        %2363 = vrot.lane.b32.xlu0 %v1894, 127
        %v2364 = vpop.permute.xlu0 %2363
        %2365 = vrot.lane.b32.xlu0 %v1898, 127
        %v2366 = vpop.permute.xlu0 %2365
        %v2367 = vsel %vm1154, %v2352, %v2360
        %v2368 = vsel %vm1154, %v2354, %v2362
        %v2369 = vsel %vm1154, %v2356, %v2364
        %v2370 = vsel %vm1154, %v2358, %v2366
        %v2371 = vsel %vm1154, %v2344, %v2352
        %v2372 = vsel %vm1154, %v2346, %v2354
        %v2373 = vsel %vm1154, %v2348, %v2356
        %v2374 = vsel %vm1154, %v2350, %v2358
        %v2375 = vsel %vm1154, %v2336, %v2344
        %v2376 = vsel %vm1154, %v2338, %v2346
        %v2377 = vsel %vm1154, %v2340, %v2348
        %v2378 = vsel %vm1154, %v2342, %v2350
        %v2379 = vsel %vm1154, %v2360, %v2336
        %v2380 = vsel %vm1154, %v2362, %v2338
        %v2381 = vsel %vm1154, %v2364, %v2340
        %v2382 = vsel %vm1154, %v2366, %v2342
        %s2383 = scalar_lea.vmem %s10, 640
        %v2384 = vld [vmem:[%s2383] sm:$0xff]
        %v2385 = vld [vmem:[%s2383 + $0x8] sm:$0xff]
        %v2386 = vld [vmem:[%s2383 + $0x10] sm:$0xff]
        %v2387 = vld [vmem:[%s2383 + $0x18] sm:$0xff]
        %v2388 = vld [vmem:[%s2383 + $0x20] sm:$0xff]
        %v2389 = vld [vmem:[%s2383 + $0x28] sm:$0xff]
        %v2390 = vld [vmem:[%s2383 + $0x30] sm:$0xff]
        %v2391 = vld [vmem:[%s2383 + $0x38] sm:$0xff]
        %v2392 = vld [vmem:[%s2383 + $0x40] sm:$0xff]
        %v2393 = vld [vmem:[%s2383 + $0x48] sm:$0xff]
        %v2394 = vld [vmem:[%s2383 + $0x50] sm:$0xff]
        %v2395 = vld [vmem:[%s2383 + $0x58] sm:$0xff]
        %v2396 = vld [vmem:[%s2383 + $0x60] sm:$0xff]
        %v2397 = vld [vmem:[%s2383 + $0x68] sm:$0xff]
        %v2398 = vld [vmem:[%s2383 + $0x70] sm:$0xff]
        %v2399 = vld [vmem:[%s2383 + $0x78] sm:$0xff]
        %v2400 = vmul.f32 %v2384, %v2375
        %v2401 = vmul.f32 %v2385, %v2371
        %v2402 = vmul.f32 %v2386, %v2367
        %v2403 = vmul.f32 %v2387, %v2379
        %v2404 = vmul.f32 %v2388, %v2376
        %v2405 = vmul.f32 %v2389, %v2372
        %v2406 = vmul.f32 %v2390, %v2368
        %v2407 = vmul.f32 %v2391, %v2380
        %v2408 = vmul.f32 %v2392, %v2377
        %v2409 = vmul.f32 %v2393, %v2373
        %v2410 = vmul.f32 %v2394, %v2369
        %v2411 = vmul.f32 %v2395, %v2381
        %v2412 = vmul.f32 %v2396, %v2378
        %v2413 = vmul.f32 %v2397, %v2374
        %v2414 = vmul.f32 %v2398, %v2370
        %v2415 = vmul.f32 %v2399, %v2382
        %v2416 = vadd.f32 %v2319, %v2400
        %v2417 = vadd.f32 %v2320, %v2401
        %v2418 = vadd.f32 %v2321, %v2402
        %v2419 = vadd.f32 %v2322, %v2403
        %v2420 = vadd.f32 %v2323, %v2404
        %v2421 = vadd.f32 %v2324, %v2405
        %v2422 = vadd.f32 %v2325, %v2406
        %v2423 = vadd.f32 %v2326, %v2407
        %v2424 = vadd.f32 %v2327, %v2408
        %v2425 = vadd.f32 %v2328, %v2409
        %v2426 = vadd.f32 %v2329, %v2410
        %v2427 = vadd.f32 %v2330, %v2411
        %v2428 = vadd.f32 %v2331, %v2412
        %v2429 = vadd.f32 %v2332, %v2413
        %v2430 = vadd.f32 %v2333, %v2414
        %v2431 = vadd.f32 %v2334, %v2415
        %2432 = vrot.lane.b32.xlu0 %v1883, 113
        %v2433 = vpop.permute.xlu0 %2432
        %2434 = vrot.lane.b32.xlu0 %v1887, 113
        %v2435 = vpop.permute.xlu0 %2434
        %2436 = vrot.lane.b32.xlu0 %v1891, 113
        %v2437 = vpop.permute.xlu0 %2436
        %2438 = vrot.lane.b32.xlu0 %v1895, 113
        %v2439 = vpop.permute.xlu0 %2438
        %2440 = vrot.lane.b32.xlu0 %v1884, 113
        %v2441 = vpop.permute.xlu0 %2440
        %2442 = vrot.lane.b32.xlu0 %v1888, 113
        %v2443 = vpop.permute.xlu0 %2442
        %2444 = vrot.lane.b32.xlu0 %v1892, 113
        %v2445 = vpop.permute.xlu0 %2444
        %2446 = vrot.lane.b32.xlu0 %v1896, 113
        %v2447 = vpop.permute.xlu0 %2446
        %2448 = vrot.lane.b32.xlu0 %v1885, 113
        %v2449 = vpop.permute.xlu0 %2448
        %2450 = vrot.lane.b32.xlu0 %v1889, 113
        %v2451 = vpop.permute.xlu0 %2450
        %2452 = vrot.lane.b32.xlu0 %v1893, 113
        %v2453 = vpop.permute.xlu0 %2452
        %2454 = vrot.lane.b32.xlu0 %v1897, 113
        %v2455 = vpop.permute.xlu0 %2454
        %2456 = vrot.lane.b32.xlu0 %v1886, 113
        %v2457 = vpop.permute.xlu0 %2456
        %2458 = vrot.lane.b32.xlu0 %v1890, 113
        %v2459 = vpop.permute.xlu0 %2458
        %2460 = vrot.lane.b32.xlu0 %v1894, 113
        %v2461 = vpop.permute.xlu0 %2460
        %2462 = vrot.lane.b32.xlu0 %v1898, 113
        %v2463 = vpop.permute.xlu0 %2462
        %v2464 = vsel %vm1252, %v2449, %v2457
        %v2465 = vsel %vm1252, %v2451, %v2459
        %v2466 = vsel %vm1252, %v2453, %v2461
        %v2467 = vsel %vm1252, %v2455, %v2463
        %v2468 = vsel %vm1252, %v2441, %v2449
        %v2469 = vsel %vm1252, %v2443, %v2451
        %v2470 = vsel %vm1252, %v2445, %v2453
        %v2471 = vsel %vm1252, %v2447, %v2455
        %v2472 = vsel %vm1252, %v2433, %v2441
        %v2473 = vsel %vm1252, %v2435, %v2443
        %v2474 = vsel %vm1252, %v2437, %v2445
        %v2475 = vsel %vm1252, %v2439, %v2447
        %v2476 = vsel %vm1252, %v2457, %v2433
        %v2477 = vsel %vm1252, %v2459, %v2435
        %v2478 = vsel %vm1252, %v2461, %v2437
        %v2479 = vsel %vm1252, %v2463, %v2439
        %s2480 = scalar_lea.vmem %s10, 768
        %v2481 = vld [vmem:[%s2480] sm:$0xff]
        %v2482 = vld [vmem:[%s2480 + $0x8] sm:$0xff]
        %v2483 = vld [vmem:[%s2480 + $0x10] sm:$0xff]
        %v2484 = vld [vmem:[%s2480 + $0x18] sm:$0xff]
        %v2485 = vld [vmem:[%s2480 + $0x20] sm:$0xff]
        %v2486 = vld [vmem:[%s2480 + $0x28] sm:$0xff]
        %v2487 = vld [vmem:[%s2480 + $0x30] sm:$0xff]
        %v2488 = vld [vmem:[%s2480 + $0x38] sm:$0xff]
        %v2489 = vld [vmem:[%s2480 + $0x40] sm:$0xff]
        %v2490 = vld [vmem:[%s2480 + $0x48] sm:$0xff]
        %v2491 = vld [vmem:[%s2480 + $0x50] sm:$0xff]
        %v2492 = vld [vmem:[%s2480 + $0x58] sm:$0xff]
        %v2493 = vld [vmem:[%s2480 + $0x60] sm:$0xff]
        %v2494 = vld [vmem:[%s2480 + $0x68] sm:$0xff]
        %v2495 = vld [vmem:[%s2480 + $0x70] sm:$0xff]
        %v2496 = vld [vmem:[%s2480 + $0x78] sm:$0xff]
        %v2497 = vmul.f32 %v2481, %v2472
        %v2498 = vmul.f32 %v2482, %v2468
        %v2499 = vmul.f32 %v2483, %v2464
        %v2500 = vmul.f32 %v2484, %v2476
        %v2501 = vmul.f32 %v2485, %v2473
        %v2502 = vmul.f32 %v2486, %v2469
        %v2503 = vmul.f32 %v2487, %v2465
        %v2504 = vmul.f32 %v2488, %v2477
        %v2505 = vmul.f32 %v2489, %v2474
        %v2506 = vmul.f32 %v2490, %v2470
        %v2507 = vmul.f32 %v2491, %v2466
        %v2508 = vmul.f32 %v2492, %v2478
        %v2509 = vmul.f32 %v2493, %v2475
        %v2510 = vmul.f32 %v2494, %v2471
        %v2511 = vmul.f32 %v2495, %v2467
        %v2512 = vmul.f32 %v2496, %v2479
        %v2513 = vadd.f32 %v2416, %v2497
        %v2514 = vadd.f32 %v2417, %v2498
        %v2515 = vadd.f32 %v2418, %v2499
        %v2516 = vadd.f32 %v2419, %v2500
        %v2517 = vadd.f32 %v2420, %v2501
        %v2518 = vadd.f32 %v2421, %v2502
        %v2519 = vadd.f32 %v2422, %v2503
        %v2520 = vadd.f32 %v2423, %v2504
        %v2521 = vadd.f32 %v2424, %v2505
        %v2522 = vadd.f32 %v2425, %v2506
        %v2523 = vadd.f32 %v2426, %v2507
        %v2524 = vadd.f32 %v2427, %v2508
        %v2525 = vadd.f32 %v2428, %v2509
        %v2526 = vadd.f32 %v2429, %v2510
        %v2527 = vadd.f32 %v2430, %v2511
        %v2528 = vadd.f32 %v2431, %v2512
        %2529 = vrot.lane.b32.xlu0 %v1883, 112
        %v2530 = vpop.permute.xlu0 %2529
        %2531 = vrot.lane.b32.xlu0 %v1887, 112
        %v2532 = vpop.permute.xlu0 %2531
        %2533 = vrot.lane.b32.xlu0 %v1891, 112
        %v2534 = vpop.permute.xlu0 %2533
        %2535 = vrot.lane.b32.xlu0 %v1895, 112
        %v2536 = vpop.permute.xlu0 %2535
        %2537 = vrot.lane.b32.xlu0 %v1884, 112
        %v2538 = vpop.permute.xlu0 %2537
        %2539 = vrot.lane.b32.xlu0 %v1888, 112
        %v2540 = vpop.permute.xlu0 %2539
        %2541 = vrot.lane.b32.xlu0 %v1892, 112
        %v2542 = vpop.permute.xlu0 %2541
        %2543 = vrot.lane.b32.xlu0 %v1896, 112
        %v2544 = vpop.permute.xlu0 %2543
        %2545 = vrot.lane.b32.xlu0 %v1885, 112
        %v2546 = vpop.permute.xlu0 %2545
        %2547 = vrot.lane.b32.xlu0 %v1889, 112
        %v2548 = vpop.permute.xlu0 %2547
        %2549 = vrot.lane.b32.xlu0 %v1893, 112
        %v2550 = vpop.permute.xlu0 %2549
        %2551 = vrot.lane.b32.xlu0 %v1897, 112
        %v2552 = vpop.permute.xlu0 %2551
        %2553 = vrot.lane.b32.xlu0 %v1886, 112
        %v2554 = vpop.permute.xlu0 %2553
        %2555 = vrot.lane.b32.xlu0 %v1890, 112
        %v2556 = vpop.permute.xlu0 %2555
        %2557 = vrot.lane.b32.xlu0 %v1894, 112
        %v2558 = vpop.permute.xlu0 %2557
        %2559 = vrot.lane.b32.xlu0 %v1898, 112
        %v2560 = vpop.permute.xlu0 %2559
        %v2561 = vsel %vm1350, %v2546, %v2554
        %v2562 = vsel %vm1350, %v2548, %v2556
        %v2563 = vsel %vm1350, %v2550, %v2558
        %v2564 = vsel %vm1350, %v2552, %v2560
        %v2565 = vsel %vm1350, %v2538, %v2546
        %v2566 = vsel %vm1350, %v2540, %v2548
        %v2567 = vsel %vm1350, %v2542, %v2550
        %v2568 = vsel %vm1350, %v2544, %v2552
        %v2569 = vsel %vm1350, %v2530, %v2538
        %v2570 = vsel %vm1350, %v2532, %v2540
        %v2571 = vsel %vm1350, %v2534, %v2542
        %v2572 = vsel %vm1350, %v2536, %v2544
        %v2573 = vsel %vm1350, %v2554, %v2530
        %v2574 = vsel %vm1350, %v2556, %v2532
        %v2575 = vsel %vm1350, %v2558, %v2534
        %v2576 = vsel %vm1350, %v2560, %v2536
        %s2577 = scalar_lea.vmem %s10, 896
        %v2578 = vld [vmem:[%s2577] sm:$0xff]
        %v2579 = vld [vmem:[%s2577 + $0x8] sm:$0xff]
        %v2580 = vld [vmem:[%s2577 + $0x10] sm:$0xff]
        %v2581 = vld [vmem:[%s2577 + $0x18] sm:$0xff]
        %v2582 = vld [vmem:[%s2577 + $0x20] sm:$0xff]
        %v2583 = vld [vmem:[%s2577 + $0x28] sm:$0xff]
        %v2584 = vld [vmem:[%s2577 + $0x30] sm:$0xff]
        %v2585 = vld [vmem:[%s2577 + $0x38] sm:$0xff]
        %v2586 = vld [vmem:[%s2577 + $0x40] sm:$0xff]
        %v2587 = vld [vmem:[%s2577 + $0x48] sm:$0xff]
        %v2588 = vld [vmem:[%s2577 + $0x50] sm:$0xff]
        %v2589 = vld [vmem:[%s2577 + $0x58] sm:$0xff]
        %v2590 = vld [vmem:[%s2577 + $0x60] sm:$0xff]
        %v2591 = vld [vmem:[%s2577 + $0x68] sm:$0xff]
        %v2592 = vld [vmem:[%s2577 + $0x70] sm:$0xff]
        %v2593 = vld [vmem:[%s2577 + $0x78] sm:$0xff]
        %v2594 = vmul.f32 %v2578, %v2569
        %v2595 = vmul.f32 %v2579, %v2565
        %v2596 = vmul.f32 %v2580, %v2561
        %v2597 = vmul.f32 %v2581, %v2573
        %v2598 = vmul.f32 %v2582, %v2570
        %v2599 = vmul.f32 %v2583, %v2566
        %v2600 = vmul.f32 %v2584, %v2562
        %v2601 = vmul.f32 %v2585, %v2574
        %v2602 = vmul.f32 %v2586, %v2571
        %v2603 = vmul.f32 %v2587, %v2567
        %v2604 = vmul.f32 %v2588, %v2563
        %v2605 = vmul.f32 %v2589, %v2575
        %v2606 = vmul.f32 %v2590, %v2572
        %v2607 = vmul.f32 %v2591, %v2568
        %v2608 = vmul.f32 %v2592, %v2564
        %v2609 = vmul.f32 %v2593, %v2576
        %v2610 = vadd.f32 %v2513, %v2594
        %v2611 = vadd.f32 %v2514, %v2595
        %v2612 = vadd.f32 %v2515, %v2596
        %v2613 = vadd.f32 %v2516, %v2597
        %v2614 = vadd.f32 %v2517, %v2598
        %v2615 = vadd.f32 %v2518, %v2599
        %v2616 = vadd.f32 %v2519, %v2600
        %v2617 = vadd.f32 %v2520, %v2601
        %v2618 = vadd.f32 %v2521, %v2602
        %v2619 = vadd.f32 %v2522, %v2603
        %v2620 = vadd.f32 %v2523, %v2604
        %v2621 = vadd.f32 %v2524, %v2605
        %v2622 = vadd.f32 %v2525, %v2606
        %v2623 = vadd.f32 %v2526, %v2607
        %v2624 = vadd.f32 %v2527, %v2608
        %v2625 = vadd.f32 %v2528, %v2609
        %2626 = vrot.lane.b32.xlu0 %v1883, 111
        %v2627 = vpop.permute.xlu0 %2626
        %2628 = vrot.lane.b32.xlu0 %v1887, 111
        %v2629 = vpop.permute.xlu0 %2628
        %2630 = vrot.lane.b32.xlu0 %v1891, 111
        %v2631 = vpop.permute.xlu0 %2630
        %2632 = vrot.lane.b32.xlu0 %v1895, 111
        %v2633 = vpop.permute.xlu0 %2632
        %2634 = vrot.lane.b32.xlu0 %v1884, 111
        %v2635 = vpop.permute.xlu0 %2634
        %2636 = vrot.lane.b32.xlu0 %v1888, 111
        %v2637 = vpop.permute.xlu0 %2636
        %2638 = vrot.lane.b32.xlu0 %v1892, 111
        %v2639 = vpop.permute.xlu0 %2638
        %2640 = vrot.lane.b32.xlu0 %v1896, 111
        %v2641 = vpop.permute.xlu0 %2640
        %2642 = vrot.lane.b32.xlu0 %v1885, 111
        %v2643 = vpop.permute.xlu0 %2642
        %2644 = vrot.lane.b32.xlu0 %v1889, 111
        %v2645 = vpop.permute.xlu0 %2644
        %2646 = vrot.lane.b32.xlu0 %v1893, 111
        %v2647 = vpop.permute.xlu0 %2646
        %2648 = vrot.lane.b32.xlu0 %v1897, 111
        %v2649 = vpop.permute.xlu0 %2648
        %2650 = vrot.lane.b32.xlu0 %v1886, 111
        %v2651 = vpop.permute.xlu0 %2650
        %2652 = vrot.lane.b32.xlu0 %v1890, 111
        %v2653 = vpop.permute.xlu0 %2652
        %2654 = vrot.lane.b32.xlu0 %v1894, 111
        %v2655 = vpop.permute.xlu0 %2654
        %2656 = vrot.lane.b32.xlu0 %v1898, 111
        %v2657 = vpop.permute.xlu0 %2656
        %v2658 = vsel %vm1448, %v2643, %v2651
        %v2659 = vsel %vm1448, %v2645, %v2653
        %v2660 = vsel %vm1448, %v2647, %v2655
        %v2661 = vsel %vm1448, %v2649, %v2657
        %v2662 = vsel %vm1448, %v2635, %v2643
        %v2663 = vsel %vm1448, %v2637, %v2645
        %v2664 = vsel %vm1448, %v2639, %v2647
        %v2665 = vsel %vm1448, %v2641, %v2649
        %v2666 = vsel %vm1448, %v2627, %v2635
        %v2667 = vsel %vm1448, %v2629, %v2637
        %v2668 = vsel %vm1448, %v2631, %v2639
        %v2669 = vsel %vm1448, %v2633, %v2641
        %v2670 = vsel %vm1448, %v2651, %v2627
        %v2671 = vsel %vm1448, %v2653, %v2629
        %v2672 = vsel %vm1448, %v2655, %v2631
        %v2673 = vsel %vm1448, %v2657, %v2633
        %s2674 = scalar_lea.vmem %s10, 1024
        %v2675 = vld [vmem:[%s2674] sm:$0xff]
        %v2676 = vld [vmem:[%s2674 + $0x8] sm:$0xff]
        %v2677 = vld [vmem:[%s2674 + $0x10] sm:$0xff]
        %v2678 = vld [vmem:[%s2674 + $0x18] sm:$0xff]
        %v2679 = vld [vmem:[%s2674 + $0x20] sm:$0xff]
        %v2680 = vld [vmem:[%s2674 + $0x28] sm:$0xff]
        %v2681 = vld [vmem:[%s2674 + $0x30] sm:$0xff]
        %v2682 = vld [vmem:[%s2674 + $0x38] sm:$0xff]
        %v2683 = vld [vmem:[%s2674 + $0x40] sm:$0xff]
        %v2684 = vld [vmem:[%s2674 + $0x48] sm:$0xff]
        %v2685 = vld [vmem:[%s2674 + $0x50] sm:$0xff]
        %v2686 = vld [vmem:[%s2674 + $0x58] sm:$0xff]
        %v2687 = vld [vmem:[%s2674 + $0x60] sm:$0xff]
        %v2688 = vld [vmem:[%s2674 + $0x68] sm:$0xff]
        %v2689 = vld [vmem:[%s2674 + $0x70] sm:$0xff]
        %v2690 = vld [vmem:[%s2674 + $0x78] sm:$0xff]
        %v2691 = vmul.f32 %v2675, %v2666
        %v2692 = vmul.f32 %v2676, %v2662
        %v2693 = vmul.f32 %v2677, %v2658
        %v2694 = vmul.f32 %v2678, %v2670
        %v2695 = vmul.f32 %v2679, %v2667
        %v2696 = vmul.f32 %v2680, %v2663
        %v2697 = vmul.f32 %v2681, %v2659
        %v2698 = vmul.f32 %v2682, %v2671
        %v2699 = vmul.f32 %v2683, %v2668
        %v2700 = vmul.f32 %v2684, %v2664
        %v2701 = vmul.f32 %v2685, %v2660
        %v2702 = vmul.f32 %v2686, %v2672
        %v2703 = vmul.f32 %v2687, %v2669
        %v2704 = vmul.f32 %v2688, %v2665
        %v2705 = vmul.f32 %v2689, %v2661
        %v2706 = vmul.f32 %v2690, %v2673
        %v2707 = vadd.f32 %v2610, %v2691
        %v2708 = vadd.f32 %v2611, %v2692
        %v2709 = vadd.f32 %v2612, %v2693
        %v2710 = vadd.f32 %v2613, %v2694
        %v2711 = vadd.f32 %v2614, %v2695
        %v2712 = vadd.f32 %v2615, %v2696
        %v2713 = vadd.f32 %v2616, %v2697
        %v2714 = vadd.f32 %v2617, %v2698
        %v2715 = vadd.f32 %v2618, %v2699
        %v2716 = vadd.f32 %v2619, %v2700
        %v2717 = vadd.f32 %v2620, %v2701
        %v2718 = vadd.f32 %v2621, %v2702
        %v2719 = vadd.f32 %v2622, %v2703
        %v2720 = vadd.f32 %v2623, %v2704
        %v2721 = vadd.f32 %v2624, %v2705
        %v2722 = vadd.f32 %v2625, %v2706
        %v2723 = vld [vmem:[%s11] sm:$0xff]
        %v2724 = vld [vmem:[%s11 + $0x8] sm:$0xff]
        %v2725 = vld [vmem:[%s11 + $0x10] sm:$0xff]
        %v2726 = vld [vmem:[%s11 + $0x18] sm:$0xff]
        %2728 = vset.pattern.permute.xlu0 0
        %2729 = vperm.xlu0 %2728, %v2723
        %v2730 = vpop.permute.xlu0 %2729
        %2733 = vset.pattern.permute.xlu0 0
        %2734 = vperm.xlu0 %2733, %v2724
        %v2735 = vpop.permute.xlu0 %2734
        %2738 = vset.pattern.permute.xlu0 0
        %2739 = vperm.xlu0 %2738, %v2725
        %v2740 = vpop.permute.xlu0 %2739
        %2743 = vset.pattern.permute.xlu0 0
        %2744 = vperm.xlu0 %2743, %v2726
        %v2745 = vpop.permute.xlu0 %2744
        %v2747 = vadd.f32 %v2707, %v2730
        %v2748 = vadd.f32 %v2708, %v2730
        %v2749 = vadd.f32 %v2709, %v2730
        %v2750 = vadd.f32 %v2710, %v2730
        %v2751 = vadd.f32 %v2711, %v2735
        %v2752 = vadd.f32 %v2712, %v2735
        %v2753 = vadd.f32 %v2713, %v2735
        %v2754 = vadd.f32 %v2714, %v2735
        %v2755 = vadd.f32 %v2715, %v2740
        %v2756 = vadd.f32 %v2716, %v2740
        %v2757 = vadd.f32 %v2717, %v2740
        %v2758 = vadd.f32 %v2718, %v2740
        %v2759 = vadd.f32 %v2719, %v2745
        %v2760 = vadd.f32 %v2720, %v2745
        %v2761 = vadd.f32 %v2721, %v2745
        %v2762 = vadd.f32 %v2722, %v2745
        %v2763 = vmax.f32 %v2747, 0.0
        %v2764 = vmax.f32 %v2748, 0.0
        %v2765 = vmax.f32 %v2749, 0.0
        %v2766 = vmax.f32 %v2750, 0.0
        %v2767 = vmax.f32 %v2751, 0.0
        %v2768 = vmax.f32 %v2752, 0.0
        %v2769 = vmax.f32 %v2753, 0.0
        %v2770 = vmax.f32 %v2754, 0.0
        %v2771 = vmax.f32 %v2755, 0.0
        %v2772 = vmax.f32 %v2756, 0.0
        %v2773 = vmax.f32 %v2757, 0.0
        %v2774 = vmax.f32 %v2758, 0.0
        %v2775 = vmax.f32 %v2759, 0.0
        %v2776 = vmax.f32 %v2760, 0.0
        %v2777 = vmax.f32 %v2761, 0.0
        %v2778 = vmax.f32 %v2762, 0.0
        %v2779 = vld [vmem:[%s12] sm:$0xf]
        %v2780 = vld [vmem:[%s12 + $0x4] sm:$0xf]
        %v2781 = vpack.c.bf16 %v2767, %v2763
        %v2782 = vpack.c.bf16 %v2768, %v2764
        %v2783 = vpack.c.bf16 %v2769, %v2765
        %v2784 = vpack.c.bf16 %v2770, %v2766
        %v2785 = vpack.c.bf16 %v2775, %v2771
        %v2786 = vpack.c.bf16 %v2776, %v2772
        %v2787 = vpack.c.bf16 %v2777, %v2773
        %v2788 = vpack.c.bf16 %v2778, %v2774
        %v2789 = vld [vmem:[%s13] sm:$0xff]
        %v2790 = vld [vmem:[%s13 + $0x8] sm:$0xff]
        %2792 = vset.pattern.permute.xlu0 0
        %2793 = vperm.xlu0 %2792, %v2789
        %v2794 = vpop.permute.xlu0 %2793
        %2797 = vset.pattern.permute.xlu0 0
        %2798 = vperm.xlu0 %2797, %v2790
        %v2799 = vpop.permute.xlu0 %2798
        %v2803 = vunpack.c.l.b16 %v2779
        %v2804 = vunpack.c.l.b16 %v2780
        %v2805 = vpack.c.b16 %v2804, %v2803
        %v2807 = vsel %vm1597, %v2805, 0
        %2809 = vmatprep.subr.bf16.mxu0 %v2782
        %2810 = vmatpush1.bf16.msra.mxu0 %v2781
        %2811 = vmatprep.subr.bf16.mxu0 %v2786
        %2812 = vmatpush1.bf16.msra.mxu0 %v2785
        %2813 = vmatprep.subr.bf16.mxu0 0
        %2814 = vmatpush1.bf16.msra.mxu0 0
        %2815 = vmatprep.subr.bf16.mxu0 0
        %2816 = vmatpush1.bf16.msra.mxu0 0
        %2817 = vmatprep.subr.bf16.mxu0 0
        %2818 = vmatpush1.bf16.msra.mxu0 0
        %2819 = vmatprep.subr.bf16.mxu0 0
        %2820 = vmatpush1.bf16.msra.mxu0 0
        %2821 = vmatprep.subr.bf16.mxu0 0
        %2822 = vmatpush1.bf16.msra.mxu0 0
        %2823 = vmatprep.subr.bf16.mxu0 0
        %2824 = vmatpush1.bf16.msra.mxu0 0
        %2825 = vmatprep.subr.bf16.mxu0 0
        %2826 = vmatpush1.bf16.msra.mxu0 0
        %2827 = vmatprep.subr.bf16.mxu0 0
        %2828 = vmatpush1.bf16.msra.mxu0 0
        %2829 = vmatprep.subr.bf16.mxu0 0
        %2830 = vmatpush1.bf16.msra.mxu0 0
        %2831 = vmatprep.subr.bf16.mxu0 0
        %2832 = vmatpush1.bf16.msra.mxu0 0
        %2833 = vmatprep.subr.bf16.mxu0 0
        %2834 = vmatpush1.bf16.msra.mxu0 0
        %2835 = vmatprep.subr.bf16.mxu0 0
        %2836 = vmatpush1.bf16.msra.mxu0 0
        %2837 = vmatprep.subr.bf16.mxu0 0
        %2838 = vmatpush1.bf16.msra.mxu0 0
        %2839 = vmatprep.subr.bf16.mxu0 0
        %2840 = vmatpush1.bf16.msra.mxu0 0
        %2841 = vmatprep.mubr.bf16.mxu0 0
        %2842 = vmatmul.mubr.bf16.gmra.mrb[0].mxu0 %v2807
        %v2843 = vpop.f32.mrb[0].mxu0
        %v2844 = vadd.f32 %v2794, %v2843
        %v2845 = vpop.f32.mrb[0].mxu0
        %v2846 = vadd.f32 %v2794, %v2845
        %v2847 = vpop.f32.mrb[0].mxu0
        %v2848 = vadd.f32 %v2799, %v2847
        %v2849 = vpop.f32.mrb[0].mxu0
        %v2850 = vadd.f32 %v2799, %v2849
        %2851 = vdwg.mxu0
        %2852 = vmatprep.subr.bf16.mxu0 %v2784
        %2853 = vmatpush1.bf16.msra.mxu0 %v2783
        %2854 = vmatprep.subr.bf16.mxu0 %v2788
        %2855 = vmatpush1.bf16.msra.mxu0 %v2787
        %2856 = vmatprep.subr.bf16.mxu0 0
        %2857 = vmatpush1.bf16.msra.mxu0 0
        %2858 = vmatprep.subr.bf16.mxu0 0
        %2859 = vmatpush1.bf16.msra.mxu0 0
        %2860 = vmatprep.subr.bf16.mxu0 0
        %2861 = vmatpush1.bf16.msra.mxu0 0
        %2862 = vmatprep.subr.bf16.mxu0 0
        %2863 = vmatpush1.bf16.msra.mxu0 0
        %2864 = vmatprep.subr.bf16.mxu0 0
        %2865 = vmatpush1.bf16.msra.mxu0 0
        %2866 = vmatprep.subr.bf16.mxu0 0
        %2867 = vmatpush1.bf16.msra.mxu0 0
        %2868 = vmatprep.subr.bf16.mxu0 0
        %2869 = vmatpush1.bf16.msra.mxu0 0
        %2870 = vmatprep.subr.bf16.mxu0 0
        %2871 = vmatpush1.bf16.msra.mxu0 0
        %2872 = vmatprep.subr.bf16.mxu0 0
        %2873 = vmatpush1.bf16.msra.mxu0 0
        %2874 = vmatprep.subr.bf16.mxu0 0
        %2875 = vmatpush1.bf16.msra.mxu0 0
        %2876 = vmatprep.subr.bf16.mxu0 0
        %2877 = vmatpush1.bf16.msra.mxu0 0
        %2878 = vmatprep.subr.bf16.mxu0 0
        %2879 = vmatpush1.bf16.msra.mxu0 0
        %2880 = vmatprep.subr.bf16.mxu0 0
        %2881 = vmatpush1.bf16.msra.mxu0 0
        %2882 = vmatprep.subr.bf16.mxu0 0
        %2883 = vmatpush1.bf16.msra.mxu0 0
        %2884 = vmatprep.mubr.bf16.mxu0 0
        %2885 = vmatmul.mubr.bf16.gmra.mrb[0].mxu0 %v2807
        %v2886 = vpop.f32.mrb[0].mxu0
        %v2887 = vadd.f32 %v2794, %v2886
        %v2888 = vpop.f32.mrb[0].mxu0
        %v2889 = vadd.f32 %v2794, %v2888
        %v2890 = vpop.f32.mrb[0].mxu0
        %v2891 = vadd.f32 %v2799, %v2890
        %v2892 = vpop.f32.mrb[0].mxu0
        %v2893 = vadd.f32 %v2799, %v2892
        %2894 = vdwg.mxu0
        %v2895 = vadd.f32 %v2844, %v1687
        %v2896 = vadd.f32 %v2846, %v1688
        %v2897 = vadd.f32 %v2887, %v1689
        %v2898 = vadd.f32 %v2889, %v1690
        %v2899 = vadd.f32 %v2848, %v1691
        %v2900 = vadd.f32 %v2850, %v1692
        %v2901 = vadd.f32 %v2891, %v1693
        %v2902 = vadd.f32 %v2893, %v1694
        %s2903 = sld [smem:[#allocation2 + $0x2]]
        %v2904 = vstv %s2903
        %v2905 = vmul.f32 %v2904, %v2895
        %v2906 = vmul.f32 %v2904, %v2896
        %v2907 = vmul.f32 %v2904, %v2897
        %v2908 = vmul.f32 %v2904, %v2898
        %v2909 = vmul.f32 %v2904, %v2899
        %v2910 = vmul.f32 %v2904, %v2900
        %v2911 = vmul.f32 %v2904, %v2901
        %v2912 = vmul.f32 %v2904, %v2902
        %v2913 = vld [vmem:[%s481] sm:$0xff]
        %v2914 = vld [vmem:[%s481 + $0x8] sm:$0xff]
        %v2915 = vld [vmem:[%s481 + $0x10] sm:$0xff]
        %v2916 = vld [vmem:[%s481 + $0x18] sm:$0xff]
        %v2917 = vld [vmem:[%s481 + $0x20] sm:$0xff]
        %v2918 = vld [vmem:[%s481 + $0x28] sm:$0xff]
        %v2919 = vld [vmem:[%s481 + $0x30] sm:$0xff]
        %v2920 = vld [vmem:[%s481 + $0x38] sm:$0xff]
        %v2921 = vadd.f32 %v2913, %v2905
        %v2922 = vadd.f32 %v2914, %v2906
        %v2923 = vadd.f32 %v2915, %v2907
        %v2924 = vadd.f32 %v2916, %v2908
        %v2925 = vadd.f32 %v2917, %v2909
        %v2926 = vadd.f32 %v2918, %v2910
        %v2927 = vadd.f32 %v2919, %v2911
        %v2928 = vadd.f32 %v2920, %v2912
        %2929 = vst [vmem:[%s481] sm:$0xff] %v2921
        %2930 = vst [vmem:[%s481 + $0x8] sm:$0xff] %v2922
        %2931 = vst [vmem:[%s481 + $0x10] sm:$0xff] %v2923
        %2932 = vst [vmem:[%s481 + $0x18] sm:$0xff] %v2924
        %2933 = vst [vmem:[%s481 + $0x20] sm:$0xff] %v2925
        %2934 = vst [vmem:[%s481 + $0x28] sm:$0xff] %v2926
        %2935 = vst [vmem:[%s481 + $0x30] sm:$0xff] %v2927
        %2936 = vst [vmem:[%s481 + $0x38] sm:$0xff] %v2928
        %p2937 = scmp.lt.s32.totalorder %s26, 1
        %s2938 = scalar_select %p2937, %s26, 1
        %s2939 = smul.addr %s2938, 8
        %s2940 = smul.addr %s2939, 8
        %s2941 = scalar_lea.vmem %s14, %s2940
        // Predicated region
        $region81: #{mixed_stage_forward.1} parent=75 // pred_check
          %p2942 = pneg %p343
        $region82: #{mixed_stage_forward.1} parent=75 // pred_check_branch
          %2944 = sbr.rel (%p2942) target = $region84
        $region83: #{mixed_stage_forward.1} parent=75 // pred_region
          _
        $region84: #{mixed_stage_forward.1} parent=75 // pred_fallthru
          _
      $region76: #{mixed_stage_forward.1} parent=5 // pred_fallthru
        _
      %p2945 = scmp.le.s32.totalorder 2, %s21
      // Predicated region
      $region85: #{mixed_stage_forward.1} parent=5 // pred_check
        %p2946 = pneg %p2945
      $region86: #{mixed_stage_forward.1} parent=5 // pred_check_branch
        %2948 = sbr.rel (%p2946) target = $region88
      $region87: #{mixed_stage_forward.1} parent=5 // pred_region
        %s2949 = ssub.s32 %s21, 2
        // Predicated region
        $region89: #{mixed_stage_forward.1} parent=87 // pred_check
          %p2950 = pneg %p349
        $region90: #{mixed_stage_forward.1} parent=87 // pred_check_branch
          %2952 = sbr.rel (%p2950) target = $region92
        $region91: #{mixed_stage_forward.1} parent=87 // pred_region
          %p2953 = scmp.lt.s32.totalorder %s27, 1
          %s2954 = scalar_select %p2953, %s27, 1
          %s2955 = smul.addr %s2954, 8
          %s2956 = smul.addr %s2955, 8
          %s2957 = scalar_lea.vmem %s14, %s2956
        $region92: #{mixed_stage_forward.1} parent=87 // pred_fallthru
          _
      $region88: #{mixed_stage_forward.1} parent=5 // pred_fallthru
        _
    $region6: #{mixed_stage_forward.1} parent=1 // loop_footer
      %s25 = sadd.s32 1, %s21
    $region7: #{mixed_stage_forward.1} parent=1 // loop_footer_branch
      %20 = sbr.rel target = $region3
    $region8: #{mixed_stage_forward.1} parent=1 // loop_exit
      _
    %2958 = vsyncpa [#allocation3], 1
    %s2959 = scalar_lea.sflag [#allocation3], 1
    %2960 = vsyncpa %s2959, 1

</llo_original>
